<compile_context>
chip_gen: v6e
topology: v6e:2x2x1
jax: 0.10.0
libtpu: 0.0.40
codegen_flags: <defaults>
</compile_context>

<pallas_src>
import numpy as np
import jax
import jax.numpy as jnp
from jax.experimental import pallas as pl
from jax.experimental.pallas import tpu as pltpu


# ---------------------------------------------------------------------------
# Fused generator kernel: one grid step == one image, everything in VMEM.
# Activations are 2-D (rows = H on sublanes, cols = W*C on lanes).
# ---------------------------------------------------------------------------
def _generator_kernel(x_ref,
                      r1_ref, B1_ref, b1_ref,          # enc1
                      r2_ref, B2_ref, b2_ref,          # enc2
                      rup_e2_ref, ce2_ref, ce1_ref,    # upsample(e2) + concat e1
                      r3_ref, B3_ref, b3_ref,          # dec1
                      rup_d1_ref, cup_d1_ref,          # upsample(d1)
                      r4_ref, B4_ref, b4_ref,          # dec2
                      o_ref):
    f32 = jnp.float32

    def conv(xin, R_ref, B_ref, b_ref, act):
        # out[ho, wo*Cout+co] = b[co] + sum_i (R[i] @ xin @ B[i])[ho, wo*Cout+co]
        kh = R_ref.shape[0]
        acc = None
        for i in range(kh):                      # static loop (kh = 3 or 4)
            t = jnp.dot(R_ref[i], xin, preferred_element_type=f32)
            p = jnp.dot(t, B_ref[i], preferred_element_type=f32)
            acc = p if acc is None else acc + p
        acc = acc + b_ref[...]                   # (1, Wo*Cout) broadcasts over rows
        if act == "lrelu":
            return jnp.where(acc > 0, acc, 0.2 * acc)   # pix2pix slope 0.2 (intended)
        if act == "relu":
            return jnp.maximum(acc, 0.0)
        if act == "tanh":
            return jnp.tanh(acc)
        return acc

    x = x_ref[0]                                                    # (16, 64)
    e1 = conv(x, r1_ref, B1_ref, b1_ref, "lrelu")                   # (8, 64)   8x8x8
    e2 = conv(e1, r2_ref, B2_ref, b2_ref, "lrelu")                  # (4, 64)   4x4x16

    # u1 = concat(upsample2x(e2), e1) along channels, flattened to (8, 8*24)
    e2_up = jnp.dot(rup_e2_ref[...], e2, preferred_element_type=f32)       # (8, 64)
    u1 = (jnp.dot(e2_up, ce2_ref[...], preferred_element_type=f32)
          + jnp.dot(e1, ce1_ref[...], preferred_element_type=f32))         # (8, 192)

    d1 = conv(u1, r3_ref, B3_ref, b3_ref, "relu")                   # (8, 64)   8x8x8

    # u2 = upsample2x(d1), flattened to (16, 16*8)
    d1_up = jnp.dot(rup_d1_ref[...], d1, preferred_element_type=f32)       # (16, 64)
    u2 = jnp.dot(d1_up, cup_d1_ref[...], preferred_element_type=f32)       # (16, 128)

    d2 = conv(u2, r4_ref, B4_ref, b4_ref, "tanh")                   # (16, 64)  16x16x4
    o_ref[0] = d2


# ---------------------------------------------------------------------------
# Constant-table construction (wrapper side, tiny; pure weight / geometry prep)
# ---------------------------------------------------------------------------
def _row_select(kh, stride, Ho, Hin):
    # R[i, ho, r] = 1 iff r == stride*ho + i - 1 (padding = 1), dropped if OOB.
    R = np.zeros((kh, Ho, Hin), np.float32)
    for i in range(kh):
        for ho in range(Ho):
            r = stride * ho + i - 1
            if 0 <= r < Hin:
                R[i, ho, r] = 1.0
    return jnp.asarray(R)


def _col_band(w_oihw, stride, Win, Wo):
    # B[i, w*Cin+ci, wo*Cout+co] = W[co, ci, i, j] with j = stride*wo + j - 1 == w
    # (padding = 1 along columns; OOB taps dropped).  Exactly reproduces
    # torch.nn.functional.conv2d (cross-correlation) column arithmetic.
    Cout, Cin, kh, kw = w_oihw.shape
    E = np.zeros((kw, Win, Wo), np.float32)
    for j in range(kw):
        for wo in range(Wo):
            w = stride * wo + j - 1
            if 0 <= w < Win:
                E[j, w, wo] = 1.0
    Wt = jnp.transpose(w_oihw, (2, 3, 1, 0))            # (kh, kw, Cin, Cout)
    B = jnp.einsum('jpq,ijcd->ipcqd', jnp.asarray(E), Wt)  # (kh, Win, Cin, Wo, Cout)
    return B.reshape(kh, Win * Cin, Wo * Cout)


def _bias_row(b, Wo):
    # flat bias: bias[wo*Cout + co] = b[co]
    return jnp.tile(b, (Wo,)).reshape(1, Wo * b.shape[0])


def _row_upsample(Hout, Hin):
    R = np.zeros((Hout, Hin), np.float32)
    for h in range(Hout):
        R[h, h // 2] = 1.0
    return jnp.asarray(R)


def _u1_placement():
    # u1[h, w*24 + c] = up2x(e2)[h, w, c] for c < 16,  e1[h, w, c-16] for c >= 16
    ce2 = np.zeros((4 * 16, 8 * 24), np.float32)
    for w2 in range(4):
        for c in range(16):
            for wu in (2 * w2, 2 * w2 + 1):
                ce2[w2 * 16 + c, wu * 24 + c] = 1.0
    ce1 = np.zeros((8 * 8, 8 * 24), np.float32)
    for w in range(8):
        for c in range(8):
            ce1[w * 8 + c, w * 24 + 16 + c] = 1.0
    return jnp.asarray(ce2), jnp.asarray(ce1)


def _u2_placement():
    # u2[h, wu*8 + c] = d1[h//2, (wu//2)*8 + c]   (nearest 2x along W)
    cup = np.zeros((8 * 8, 16 * 8), np.float32)
    for w in range(8):
        for c in range(8):
            for wu in (2 * w, 2 * w + 1):
                cup[w * 8 + c, wu * 8 + c] = 1.0
    return jnp.asarray(cup)


# ---------------------------------------------------------------------------
# Deterministic parameter init for the synthetic pix2pix generator (unchanged)
# ---------------------------------------------------------------------------
def init_params(key, in_ch=4):
    def conv_p(k, c_out, c_in, kh, kw):
        w = 0.02 * jax.random.normal(k, (c_out, c_in, kh, kw), dtype=jnp.float32)
        b = jnp.zeros((c_out,), dtype=jnp.float32)
        return {"w": w, "b": b}

    k1, k2, k3, k4 = jax.random.split(key, 4)
    return {
        "enc1": conv_p(k1, 8, in_ch, 4, 4),       # 16x16 -> 8x8
        "enc2": conv_p(k2, 16, 8, 4, 4),          # 8x8   -> 4x4
        "dec1": conv_p(k3, 8, 16 + 8, 3, 3),      # up to 8x8, skip concat enc1
        "dec2": conv_p(k4, in_ch, 8, 3, 3),       # up to 16x16, tanh
    }


# ---------------------------------------------------------------------------
# Pix2Pix.forward(inputs) -> generator(inputs)
# ---------------------------------------------------------------------------
def pix2pix_forward(params, x_nchw):
    N, C, H, W = x_nchw.shape                              # (2, 4, 16, 16)
    x2d = jnp.transpose(x_nchw, (0, 2, 3, 1)).reshape(N, H, W * C)   # (N, 16, 64)

    w1, b1 = params["enc1"]["w"], params["enc1"]["b"]
    w2, b2 = params["enc2"]["w"], params["enc2"]["b"]
    w3, b3 = params["dec1"]["w"], params["dec1"]["b"]
    w4, b4 = params["dec2"]["w"], params["dec2"]["b"]

    r1 = _row_select(4, 2, 8, 16);  B1 = _col_band(w1, 2, 16, 8);  bb1 = _bias_row(b1, 8)
    r2 = _row_select(4, 2, 4, 8);   B2 = _col_band(w2, 2, 8, 4);   bb2 = _bias_row(b2, 4)
    r3 = _row_select(3, 1, 8, 8);   B3 = _col_band(w3, 1, 8, 8);   bb3 = _bias_row(b3, 8)
    r4 = _row_select(3, 1, 16, 16); B4 = _col_band(w4, 1, 16, 16); bb4 = _bias_row(b4, 16)

    rup_e2 = _row_upsample(8, 4)
    ce2, ce1 = _u1_placement()
    rup_d1 = _row_upsample(16, 8)
    cup_d1 = _u2_placement()

    consts = (r1, B1, bb1, r2, B2, bb2, rup_e2, ce2, ce1,
              r3, B3, bb3, rup_d1, cup_d1, r4, B4, bb4)

    def full_spec(a):
        nd = a.ndim
        return pl.BlockSpec(a.shape, lambda n, _nd=nd: (0,) * _nd)

    out2d = pl.pallas_call(
        _generator_kernel,
        out_shape=jax.ShapeDtypeStruct((N, H, W * C), jnp.float32),
        grid=(N,),
        in_specs=[pl.BlockSpec((1, H, W * C), lambda n: (n, 0, 0))]
                 + [full_spec(a) for a in consts],
        out_specs=pl.BlockSpec((1, H, W * C), lambda n: (n, 0, 0)),
        compiler_params=pltpu.CompilerParams(
            dimension_semantics=("parallel",)),     # v7x: one image per TensorCore
    )(x2d, *consts)

    return jnp.transpose(out2d.reshape(N, H, W, C), (0, 3, 1, 2))   # NHWC -> NCHW

# TODO(synk): discriminator_loss / generator_loss (BCEWithLogits + L1) are not
# part of forward(); they are not implemented here.


if __name__ == "__main__":
    key = jax.random.PRNGKey(0)
    x = jax.random.normal(key, (2, 4, 16, 16), dtype=jnp.float32)
    params = init_params(jax.random.PRNGKey(1), in_ch=4)

    out = jax.jit(pix2pix_forward)(params, x)
    out = jax.block_until_ready(out)

    assert out.shape == (2, 4, 16, 16), out.shape
    assert out.dtype == jnp.float32
    assert bool(jnp.all(jnp.isfinite(out)))
    print("KERNEL_OK")
</pallas_src>

<mosaic_0001>
module attributes {stable_mosaic.version = 11 : i64} {
  func.func @_generator_kernel(%arg0: i32, %arg1: memref<1x16x64xf32, #tpu.memory_space<vmem>>, %arg2: memref<4x8x16xf32, #tpu.memory_space<vmem>>, %arg3: memref<4x64x64xf32, #tpu.memory_space<vmem>>, %arg4: memref<1x64xf32, #tpu.memory_space<vmem>>, %arg5: memref<4x4x8xf32, #tpu.memory_space<vmem>>, %arg6: memref<4x64x64xf32, #tpu.memory_space<vmem>>, %arg7: memref<1x64xf32, #tpu.memory_space<vmem>>, %arg8: memref<8x4xf32, #tpu.memory_space<vmem>>, %arg9: memref<64x192xf32, #tpu.memory_space<vmem>>, %arg10: memref<64x192xf32, #tpu.memory_space<vmem>>, %arg11: memref<3x8x8xf32, #tpu.memory_space<vmem>>, %arg12: memref<3x192x64xf32, #tpu.memory_space<vmem>>, %arg13: memref<1x64xf32, #tpu.memory_space<vmem>>, %arg14: memref<16x8xf32, #tpu.memory_space<vmem>>, %arg15: memref<64x128xf32, #tpu.memory_space<vmem>>, %arg16: memref<3x16x16xf32, #tpu.memory_space<vmem>>, %arg17: memref<3x128x64xf32, #tpu.memory_space<vmem>>, %arg18: memref<1x64xf32, #tpu.memory_space<vmem>>, %arg19: memref<1x16x64xf32, #tpu.memory_space<vmem>>) attributes {dimension_semantics = [#tpu.dimension_semantics<parallel>], iteration_bounds = array<i64: 2>, scalar_prefetch = 0 : i64, scratch_operands = 0 : i64, tpu.core_type = #tpu.core_type<tc>, window_params = [{transform_indices = @transform_0, window_bounds = array<i64: 1, 16, 64>}, {pipeline_mode = #tpu.pipeline_mode<synchronous>, transform_indices = @transform_1, window_bounds = array<i64: 4, 8, 16>}, {pipeline_mode = #tpu.pipeline_mode<synchronous>, transform_indices = @transform_2, window_bounds = array<i64: 4, 64, 64>}, {pipeline_mode = #tpu.pipeline_mode<synchronous>, transform_indices = @transform_3, window_bounds = array<i64: 1, 64>}, {pipeline_mode = #tpu.pipeline_mode<synchronous>, transform_indices = @transform_4, window_bounds = array<i64: 4, 4, 8>}, {pipeline_mode = #tpu.pipeline_mode<synchronous>, transform_indices = @transform_5, window_bounds = array<i64: 4, 64, 64>}, {pipeline_mode = #tpu.pipeline_mode<synchronous>, transform_indices = @transform_6, window_bounds = array<i64: 1, 64>}, {pipeline_mode = #tpu.pipeline_mode<synchronous>, transform_indices = @transform_7, window_bounds = array<i64: 8, 4>}, {pipeline_mode = #tpu.pipeline_mode<synchronous>, transform_indices = @transform_8, window_bounds = array<i64: 64, 192>}, {pipeline_mode = #tpu.pipeline_mode<synchronous>, transform_indices = @transform_9, window_bounds = array<i64: 64, 192>}, {pipeline_mode = #tpu.pipeline_mode<synchronous>, transform_indices = @transform_10, window_bounds = array<i64: 3, 8, 8>}, {pipeline_mode = #tpu.pipeline_mode<synchronous>, transform_indices = @transform_11, window_bounds = array<i64: 3, 192, 64>}, {pipeline_mode = #tpu.pipeline_mode<synchronous>, transform_indices = @transform_12, window_bounds = array<i64: 1, 64>}, {pipeline_mode = #tpu.pipeline_mode<synchronous>, transform_indices = @transform_13, window_bounds = array<i64: 16, 8>}, {pipeline_mode = #tpu.pipeline_mode<synchronous>, transform_indices = @transform_14, window_bounds = array<i64: 64, 128>}, {pipeline_mode = #tpu.pipeline_mode<synchronous>, transform_indices = @transform_15, window_bounds = array<i64: 3, 16, 16>}, {pipeline_mode = #tpu.pipeline_mode<synchronous>, transform_indices = @transform_16, window_bounds = array<i64: 3, 128, 64>}, {pipeline_mode = #tpu.pipeline_mode<synchronous>, transform_indices = @transform_17, window_bounds = array<i64: 1, 64>}, {transform_indices = @transform_18, window_bounds = array<i64: 1, 16, 64>}]} {
    %c0 = arith.constant 0 : index
    %c0_0 = arith.constant 0 : index
    %c0_1 = arith.constant 0 : index
    %0 = vector.load %arg1[%c0, %c0_0, %c0_1] : memref<1x16x64xf32, #tpu.memory_space<vmem>>, vector<1x16x64xf32>
    %1 = vector.shape_cast %0 : vector<1x16x64xf32> to vector<16x64xf32>
    %c0_2 = arith.constant 0 : index
    %c0_3 = arith.constant 0 : index
    %c0_4 = arith.constant 0 : index
    %2 = vector.load %arg2[%c0_2, %c0_3, %c0_4] : memref<4x8x16xf32, #tpu.memory_space<vmem>>, vector<1x8x16xf32>
    %3 = vector.shape_cast %2 : vector<1x8x16xf32> to vector<8x16xf32>
    %cst = arith.constant dense<0.000000e+00> : vector<8x64xf32>
    %4 = tpu.matmul %3, %1, %cst {dimension_numbers = #tpu.dot_dimension_numbers<[1], [0], [0], [1], [0, 0, 1, 1], [], []>} : vector<8x16xf32>, vector<16x64xf32>, vector<8x64xf32> -> vector<8x64xf32>
    %c0_5 = arith.constant 0 : index
    %c0_6 = arith.constant 0 : index
    %c0_7 = arith.constant 0 : index
    %5 = vector.load %arg3[%c0_5, %c0_6, %c0_7] : memref<4x64x64xf32, #tpu.memory_space<vmem>>, vector<1x64x64xf32>
    %6 = vector.shape_cast %5 : vector<1x64x64xf32> to vector<64x64xf32>
    %cst_8 = arith.constant dense<0.000000e+00> : vector<8x64xf32>
    %7 = tpu.matmul %4, %6, %cst_8 {dimension_numbers = #tpu.dot_dimension_numbers<[1], [0], [0], [1], [0, 0, 1, 1], [], []>} : vector<8x64xf32>, vector<64x64xf32>, vector<8x64xf32> -> vector<8x64xf32>
    %c1 = arith.constant 1 : index
    %c0_9 = arith.constant 0 : index
    %c0_10 = arith.constant 0 : index
    %8 = vector.load %arg2[%c1, %c0_9, %c0_10] : memref<4x8x16xf32, #tpu.memory_space<vmem>>, vector<1x8x16xf32>
    %9 = vector.shape_cast %8 : vector<1x8x16xf32> to vector<8x16xf32>
    %cst_11 = arith.constant dense<0.000000e+00> : vector<8x64xf32>
    %10 = tpu.matmul %9, %1, %cst_11 {dimension_numbers = #tpu.dot_dimension_numbers<[1], [0], [0], [1], [0, 0, 1, 1], [], []>} : vector<8x16xf32>, vector<16x64xf32>, vector<8x64xf32> -> vector<8x64xf32>
    %c1_12 = arith.constant 1 : index
    %c0_13 = arith.constant 0 : index
    %c0_14 = arith.constant 0 : index
    %11 = vector.load %arg3[%c1_12, %c0_13, %c0_14] : memref<4x64x64xf32, #tpu.memory_space<vmem>>, vector<1x64x64xf32>
    %12 = vector.shape_cast %11 : vector<1x64x64xf32> to vector<64x64xf32>
    %cst_15 = arith.constant dense<0.000000e+00> : vector<8x64xf32>
    %13 = tpu.matmul %10, %12, %cst_15 {dimension_numbers = #tpu.dot_dimension_numbers<[1], [0], [0], [1], [0, 0, 1, 1], [], []>} : vector<8x64xf32>, vector<64x64xf32>, vector<8x64xf32> -> vector<8x64xf32>
    %14 = arith.addf %7, %13 : vector<8x64xf32>
    %c2 = arith.constant 2 : index
    %c0_16 = arith.constant 0 : index
    %c0_17 = arith.constant 0 : index
    %15 = vector.load %arg2[%c2, %c0_16, %c0_17] : memref<4x8x16xf32, #tpu.memory_space<vmem>>, vector<1x8x16xf32>
    %16 = vector.shape_cast %15 : vector<1x8x16xf32> to vector<8x16xf32>
    %cst_18 = arith.constant dense<0.000000e+00> : vector<8x64xf32>
    %17 = tpu.matmul %16, %1, %cst_18 {dimension_numbers = #tpu.dot_dimension_numbers<[1], [0], [0], [1], [0, 0, 1, 1], [], []>} : vector<8x16xf32>, vector<16x64xf32>, vector<8x64xf32> -> vector<8x64xf32>
    %c2_19 = arith.constant 2 : index
    %c0_20 = arith.constant 0 : index
    %c0_21 = arith.constant 0 : index
    %18 = vector.load %arg3[%c2_19, %c0_20, %c0_21] : memref<4x64x64xf32, #tpu.memory_space<vmem>>, vector<1x64x64xf32>
    %19 = vector.shape_cast %18 : vector<1x64x64xf32> to vector<64x64xf32>
    %cst_22 = arith.constant dense<0.000000e+00> : vector<8x64xf32>
    %20 = tpu.matmul %17, %19, %cst_22 {dimension_numbers = #tpu.dot_dimension_numbers<[1], [0], [0], [1], [0, 0, 1, 1], [], []>} : vector<8x64xf32>, vector<64x64xf32>, vector<8x64xf32> -> vector<8x64xf32>
    %21 = arith.addf %14, %20 : vector<8x64xf32>
    %c3 = arith.constant 3 : index
    %c0_23 = arith.constant 0 : index
    %c0_24 = arith.constant 0 : index
    %22 = vector.load %arg2[%c3, %c0_23, %c0_24] : memref<4x8x16xf32, #tpu.memory_space<vmem>>, vector<1x8x16xf32>
    %23 = vector.shape_cast %22 : vector<1x8x16xf32> to vector<8x16xf32>
    %cst_25 = arith.constant dense<0.000000e+00> : vector<8x64xf32>
    %24 = tpu.matmul %23, %1, %cst_25 {dimension_numbers = #tpu.dot_dimension_numbers<[1], [0], [0], [1], [0, 0, 1, 1], [], []>} : vector<8x16xf32>, vector<16x64xf32>, vector<8x64xf32> -> vector<8x64xf32>
    %c3_26 = arith.constant 3 : index
    %c0_27 = arith.constant 0 : index
    %c0_28 = arith.constant 0 : index
    %25 = vector.load %arg3[%c3_26, %c0_27, %c0_28] : memref<4x64x64xf32, #tpu.memory_space<vmem>>, vector<1x64x64xf32>
    %26 = vector.shape_cast %25 : vector<1x64x64xf32> to vector<64x64xf32>
    %cst_29 = arith.constant dense<0.000000e+00> : vector<8x64xf32>
    %27 = tpu.matmul %24, %26, %cst_29 {dimension_numbers = #tpu.dot_dimension_numbers<[1], [0], [0], [1], [0, 0, 1, 1], [], []>} : vector<8x64xf32>, vector<64x64xf32>, vector<8x64xf32> -> vector<8x64xf32>
    %28 = arith.addf %21, %27 : vector<8x64xf32>
    %c0_30 = arith.constant 0 : index
    %c0_31 = arith.constant 0 : index
    %29 = vector.load %arg4[%c0_30, %c0_31] : memref<1x64xf32, #tpu.memory_space<vmem>>, vector<1x64xf32>
    %30 = vector.broadcast %29 : vector<1x64xf32> to vector<8x64xf32>
    %31 = arith.addf %28, %30 : vector<8x64xf32>
    %cst_32 = arith.constant 0.000000e+00 : f32
    %32 = vector.broadcast %cst_32 : f32 to vector<8x64xf32>
    %33 = arith.cmpf ogt, %31, %32 : vector<8x64xf32>
    %cst_33 = arith.constant 2.000000e-01 : f32
    %34 = vector.broadcast %cst_33 : f32 to vector<8x64xf32>
    %35 = arith.mulf %34, %31 : vector<8x64xf32>
    %36 = arith.select %33, %31, %35 : vector<8x64xi1>, vector<8x64xf32>
    %c0_34 = arith.constant 0 : index
    %c0_35 = arith.constant 0 : index
    %c0_36 = arith.constant 0 : index
    %37 = vector.load %arg5[%c0_34, %c0_35, %c0_36] : memref<4x4x8xf32, #tpu.memory_space<vmem>>, vector<1x4x8xf32>
    %38 = vector.shape_cast %37 : vector<1x4x8xf32> to vector<4x8xf32>
    %cst_37 = arith.constant dense<0.000000e+00> : vector<4x64xf32>
    %39 = tpu.matmul %38, %36, %cst_37 {dimension_numbers = #tpu.dot_dimension_numbers<[1], [0], [0], [1], [0, 0, 1, 1], [], []>} : vector<4x8xf32>, vector<8x64xf32>, vector<4x64xf32> -> vector<4x64xf32>
    %c0_38 = arith.constant 0 : index
    %c0_39 = arith.constant 0 : index
    %c0_40 = arith.constant 0 : index
    %40 = vector.load %arg6[%c0_38, %c0_39, %c0_40] : memref<4x64x64xf32, #tpu.memory_space<vmem>>, vector<1x64x64xf32>
    %41 = vector.shape_cast %40 : vector<1x64x64xf32> to vector<64x64xf32>
    %cst_41 = arith.constant dense<0.000000e+00> : vector<4x64xf32>
    %42 = tpu.matmul %39, %41, %cst_41 {dimension_numbers = #tpu.dot_dimension_numbers<[1], [0], [0], [1], [0, 0, 1, 1], [], []>} : vector<4x64xf32>, vector<64x64xf32>, vector<4x64xf32> -> vector<4x64xf32>
    %c1_42 = arith.constant 1 : index
    %c0_43 = arith.constant 0 : index
    %c0_44 = arith.constant 0 : index
    %43 = vector.load %arg5[%c1_42, %c0_43, %c0_44] : memref<4x4x8xf32, #tpu.memory_space<vmem>>, vector<1x4x8xf32>
    %44 = vector.shape_cast %43 : vector<1x4x8xf32> to vector<4x8xf32>
    %cst_45 = arith.constant dense<0.000000e+00> : vector<4x64xf32>
    %45 = tpu.matmul %44, %36, %cst_45 {dimension_numbers = #tpu.dot_dimension_numbers<[1], [0], [0], [1], [0, 0, 1, 1], [], []>} : vector<4x8xf32>, vector<8x64xf32>, vector<4x64xf32> -> vector<4x64xf32>
    %c1_46 = arith.constant 1 : index
    %c0_47 = arith.constant 0 : index
    %c0_48 = arith.constant 0 : index
    %46 = vector.load %arg6[%c1_46, %c0_47, %c0_48] : memref<4x64x64xf32, #tpu.memory_space<vmem>>, vector<1x64x64xf32>
    %47 = vector.shape_cast %46 : vector<1x64x64xf32> to vector<64x64xf32>
    %cst_49 = arith.constant dense<0.000000e+00> : vector<4x64xf32>
    %48 = tpu.matmul %45, %47, %cst_49 {dimension_numbers = #tpu.dot_dimension_numbers<[1], [0], [0], [1], [0, 0, 1, 1], [], []>} : vector<4x64xf32>, vector<64x64xf32>, vector<4x64xf32> -> vector<4x64xf32>
    %49 = arith.addf %42, %48 : vector<4x64xf32>
    %c2_50 = arith.constant 2 : index
    %c0_51 = arith.constant 0 : index
    %c0_52 = arith.constant 0 : index
    %50 = vector.load %arg5[%c2_50, %c0_51, %c0_52] : memref<4x4x8xf32, #tpu.memory_space<vmem>>, vector<1x4x8xf32>
    %51 = vector.shape_cast %50 : vector<1x4x8xf32> to vector<4x8xf32>
    %cst_53 = arith.constant dense<0.000000e+00> : vector<4x64xf32>
    %52 = tpu.matmul %51, %36, %cst_53 {dimension_numbers = #tpu.dot_dimension_numbers<[1], [0], [0], [1], [0, 0, 1, 1], [], []>} : vector<4x8xf32>, vector<8x64xf32>, vector<4x64xf32> -> vector<4x64xf32>
    %c2_54 = arith.constant 2 : index
    %c0_55 = arith.constant 0 : index
    %c0_56 = arith.constant 0 : index
    %53 = vector.load %arg6[%c2_54, %c0_55, %c0_56] : memref<4x64x64xf32, #tpu.memory_space<vmem>>, vector<1x64x64xf32>
    %54 = vector.shape_cast %53 : vector<1x64x64xf32> to vector<64x64xf32>
    %cst_57 = arith.constant dense<0.000000e+00> : vector<4x64xf32>
    %55 = tpu.matmul %52, %54, %cst_57 {dimension_numbers = #tpu.dot_dimension_numbers<[1], [0], [0], [1], [0, 0, 1, 1], [], []>} : vector<4x64xf32>, vector<64x64xf32>, vector<4x64xf32> -> vector<4x64xf32>
    %56 = arith.addf %49, %55 : vector<4x64xf32>
    %c3_58 = arith.constant 3 : index
    %c0_59 = arith.constant 0 : index
    %c0_60 = arith.constant 0 : index
    %57 = vector.load %arg5[%c3_58, %c0_59, %c0_60] : memref<4x4x8xf32, #tpu.memory_space<vmem>>, vector<1x4x8xf32>
    %58 = vector.shape_cast %57 : vector<1x4x8xf32> to vector<4x8xf32>
    %cst_61 = arith.constant dense<0.000000e+00> : vector<4x64xf32>
    %59 = tpu.matmul %58, %36, %cst_61 {dimension_numbers = #tpu.dot_dimension_numbers<[1], [0], [0], [1], [0, 0, 1, 1], [], []>} : vector<4x8xf32>, vector<8x64xf32>, vector<4x64xf32> -> vector<4x64xf32>
    %c3_62 = arith.constant 3 : index
    %c0_63 = arith.constant 0 : index
    %c0_64 = arith.constant 0 : index
    %60 = vector.load %arg6[%c3_62, %c0_63, %c0_64] : memref<4x64x64xf32, #tpu.memory_space<vmem>>, vector<1x64x64xf32>
    %61 = vector.shape_cast %60 : vector<1x64x64xf32> to vector<64x64xf32>
    %cst_65 = arith.constant dense<0.000000e+00> : vector<4x64xf32>
    %62 = tpu.matmul %59, %61, %cst_65 {dimension_numbers = #tpu.dot_dimension_numbers<[1], [0], [0], [1], [0, 0, 1, 1], [], []>} : vector<4x64xf32>, vector<64x64xf32>, vector<4x64xf32> -> vector<4x64xf32>
    %63 = arith.addf %56, %62 : vector<4x64xf32>
    %c0_66 = arith.constant 0 : index
    %c0_67 = arith.constant 0 : index
    %64 = vector.load %arg7[%c0_66, %c0_67] : memref<1x64xf32, #tpu.memory_space<vmem>>, vector<1x64xf32>
    %65 = vector.broadcast %64 : vector<1x64xf32> to vector<4x64xf32>
    %66 = arith.addf %63, %65 : vector<4x64xf32>
    %cst_68 = arith.constant 0.000000e+00 : f32
    %67 = vector.broadcast %cst_68 : f32 to vector<4x64xf32>
    %68 = arith.cmpf ogt, %66, %67 : vector<4x64xf32>
    %cst_69 = arith.constant 2.000000e-01 : f32
    %69 = vector.broadcast %cst_69 : f32 to vector<4x64xf32>
    %70 = arith.mulf %69, %66 : vector<4x64xf32>
    %71 = arith.select %68, %66, %70 : vector<4x64xi1>, vector<4x64xf32>
    %c0_70 = arith.constant 0 : index
    %c0_71 = arith.constant 0 : index
    %72 = vector.load %arg8[%c0_70, %c0_71] : memref<8x4xf32, #tpu.memory_space<vmem>>, vector<8x4xf32>
    %cst_72 = arith.constant dense<0.000000e+00> : vector<8x64xf32>
    %73 = tpu.matmul %72, %71, %cst_72 {dimension_numbers = #tpu.dot_dimension_numbers<[1], [0], [0], [1], [0, 0, 1, 1], [], []>} : vector<8x4xf32>, vector<4x64xf32>, vector<8x64xf32> -> vector<8x64xf32>
    %c0_73 = arith.constant 0 : index
    %c0_74 = arith.constant 0 : index
    %74 = vector.load %arg9[%c0_73, %c0_74] : memref<64x192xf32, #tpu.memory_space<vmem>>, vector<64x192xf32>
    %cst_75 = arith.constant dense<0.000000e+00> : vector<8x192xf32>
    %75 = tpu.matmul %73, %74, %cst_75 {dimension_numbers = #tpu.dot_dimension_numbers<[1], [0], [0], [1], [0, 0, 1, 1], [], []>} : vector<8x64xf32>, vector<64x192xf32>, vector<8x192xf32> -> vector<8x192xf32>
    %c0_76 = arith.constant 0 : index
    %c0_77 = arith.constant 0 : index
    %76 = vector.load %arg10[%c0_76, %c0_77] : memref<64x192xf32, #tpu.memory_space<vmem>>, vector<64x192xf32>
    %cst_78 = arith.constant dense<0.000000e+00> : vector<8x192xf32>
    %77 = tpu.matmul %36, %76, %cst_78 {dimension_numbers = #tpu.dot_dimension_numbers<[1], [0], [0], [1], [0, 0, 1, 1], [], []>} : vector<8x64xf32>, vector<64x192xf32>, vector<8x192xf32> -> vector<8x192xf32>
    %78 = arith.addf %75, %77 : vector<8x192xf32>
    %c0_79 = arith.constant 0 : index
    %c0_80 = arith.constant 0 : index
    %c0_81 = arith.constant 0 : index
    %79 = vector.load %arg11[%c0_79, %c0_80, %c0_81] : memref<3x8x8xf32, #tpu.memory_space<vmem>>, vector<1x8x8xf32>
    %80 = vector.shape_cast %79 : vector<1x8x8xf32> to vector<8x8xf32>
    %cst_82 = arith.constant dense<0.000000e+00> : vector<8x192xf32>
    %81 = tpu.matmul %80, %78, %cst_82 {dimension_numbers = #tpu.dot_dimension_numbers<[1], [0], [0], [1], [0, 0, 1, 1], [], []>} : vector<8x8xf32>, vector<8x192xf32>, vector<8x192xf32> -> vector<8x192xf32>
    %c0_83 = arith.constant 0 : index
    %c0_84 = arith.constant 0 : index
    %c0_85 = arith.constant 0 : index
    %82 = vector.load %arg12[%c0_83, %c0_84, %c0_85] : memref<3x192x64xf32, #tpu.memory_space<vmem>>, vector<1x192x64xf32>
    %83 = vector.shape_cast %82 : vector<1x192x64xf32> to vector<192x64xf32>
    %cst_86 = arith.constant dense<0.000000e+00> : vector<8x64xf32>
    %84 = tpu.matmul %81, %83, %cst_86 {dimension_numbers = #tpu.dot_dimension_numbers<[1], [0], [0], [1], [0, 0, 1, 1], [], []>} : vector<8x192xf32>, vector<192x64xf32>, vector<8x64xf32> -> vector<8x64xf32>
    %c1_87 = arith.constant 1 : index
    %c0_88 = arith.constant 0 : index
    %c0_89 = arith.constant 0 : index
    %85 = vector.load %arg11[%c1_87, %c0_88, %c0_89] : memref<3x8x8xf32, #tpu.memory_space<vmem>>, vector<1x8x8xf32>
    %86 = vector.shape_cast %85 : vector<1x8x8xf32> to vector<8x8xf32>
    %cst_90 = arith.constant dense<0.000000e+00> : vector<8x192xf32>
    %87 = tpu.matmul %86, %78, %cst_90 {dimension_numbers = #tpu.dot_dimension_numbers<[1], [0], [0], [1], [0, 0, 1, 1], [], []>} : vector<8x8xf32>, vector<8x192xf32>, vector<8x192xf32> -> vector<8x192xf32>
    %c1_91 = arith.constant 1 : index
    %c0_92 = arith.constant 0 : index
    %c0_93 = arith.constant 0 : index
    %88 = vector.load %arg12[%c1_91, %c0_92, %c0_93] : memref<3x192x64xf32, #tpu.memory_space<vmem>>, vector<1x192x64xf32>
    %89 = vector.shape_cast %88 : vector<1x192x64xf32> to vector<192x64xf32>
    %cst_94 = arith.constant dense<0.000000e+00> : vector<8x64xf32>
    %90 = tpu.matmul %87, %89, %cst_94 {dimension_numbers = #tpu.dot_dimension_numbers<[1], [0], [0], [1], [0, 0, 1, 1], [], []>} : vector<8x192xf32>, vector<192x64xf32>, vector<8x64xf32> -> vector<8x64xf32>
    %91 = arith.addf %84, %90 : vector<8x64xf32>
    %c2_95 = arith.constant 2 : index
    %c0_96 = arith.constant 0 : index
    %c0_97 = arith.constant 0 : index
    %92 = vector.load %arg11[%c2_95, %c0_96, %c0_97] : memref<3x8x8xf32, #tpu.memory_space<vmem>>, vector<1x8x8xf32>
    %93 = vector.shape_cast %92 : vector<1x8x8xf32> to vector<8x8xf32>
    %cst_98 = arith.constant dense<0.000000e+00> : vector<8x192xf32>
    %94 = tpu.matmul %93, %78, %cst_98 {dimension_numbers = #tpu.dot_dimension_numbers<[1], [0], [0], [1], [0, 0, 1, 1], [], []>} : vector<8x8xf32>, vector<8x192xf32>, vector<8x192xf32> -> vector<8x192xf32>
    %c2_99 = arith.constant 2 : index
    %c0_100 = arith.constant 0 : index
    %c0_101 = arith.constant 0 : index
    %95 = vector.load %arg12[%c2_99, %c0_100, %c0_101] : memref<3x192x64xf32, #tpu.memory_space<vmem>>, vector<1x192x64xf32>
    %96 = vector.shape_cast %95 : vector<1x192x64xf32> to vector<192x64xf32>
    %cst_102 = arith.constant dense<0.000000e+00> : vector<8x64xf32>
    %97 = tpu.matmul %94, %96, %cst_102 {dimension_numbers = #tpu.dot_dimension_numbers<[1], [0], [0], [1], [0, 0, 1, 1], [], []>} : vector<8x192xf32>, vector<192x64xf32>, vector<8x64xf32> -> vector<8x64xf32>
    %98 = arith.addf %91, %97 : vector<8x64xf32>
    %c0_103 = arith.constant 0 : index
    %c0_104 = arith.constant 0 : index
    %99 = vector.load %arg13[%c0_103, %c0_104] : memref<1x64xf32, #tpu.memory_space<vmem>>, vector<1x64xf32>
    %100 = vector.broadcast %99 : vector<1x64xf32> to vector<8x64xf32>
    %101 = arith.addf %98, %100 : vector<8x64xf32>
    %cst_105 = arith.constant 0.000000e+00 : f32
    %102 = vector.broadcast %cst_105 : f32 to vector<8x64xf32>
    %103 = arith.maximumf %101, %102 : vector<8x64xf32>
    %c0_106 = arith.constant 0 : index
    %c0_107 = arith.constant 0 : index
    %104 = vector.load %arg14[%c0_106, %c0_107] : memref<16x8xf32, #tpu.memory_space<vmem>>, vector<16x8xf32>
    %cst_108 = arith.constant dense<0.000000e+00> : vector<16x64xf32>
    %105 = tpu.matmul %104, %103, %cst_108 {dimension_numbers = #tpu.dot_dimension_numbers<[1], [0], [0], [1], [0, 0, 1, 1], [], []>} : vector<16x8xf32>, vector<8x64xf32>, vector<16x64xf32> -> vector<16x64xf32>
    %c0_109 = arith.constant 0 : index
    %c0_110 = arith.constant 0 : index
    %106 = vector.load %arg15[%c0_109, %c0_110] : memref<64x128xf32, #tpu.memory_space<vmem>>, vector<64x128xf32>
    %cst_111 = arith.constant dense<0.000000e+00> : vector<16x128xf32>
    %107 = tpu.matmul %105, %106, %cst_111 {dimension_numbers = #tpu.dot_dimension_numbers<[1], [0], [0], [1], [0, 0, 1, 1], [], []>} : vector<16x64xf32>, vector<64x128xf32>, vector<16x128xf32> -> vector<16x128xf32>
    %c0_112 = arith.constant 0 : index
    %c0_113 = arith.constant 0 : index
    %c0_114 = arith.constant 0 : index
    %108 = vector.load %arg16[%c0_112, %c0_113, %c0_114] : memref<3x16x16xf32, #tpu.memory_space<vmem>>, vector<1x16x16xf32>
    %109 = vector.shape_cast %108 : vector<1x16x16xf32> to vector<16x16xf32>
    %cst_115 = arith.constant dense<0.000000e+00> : vector<16x128xf32>
    %110 = tpu.matmul %109, %107, %cst_115 {dimension_numbers = #tpu.dot_dimension_numbers<[1], [0], [0], [1], [0, 0, 1, 1], [], []>} : vector<16x16xf32>, vector<16x128xf32>, vector<16x128xf32> -> vector<16x128xf32>
    %c0_116 = arith.constant 0 : index
    %c0_117 = arith.constant 0 : index
    %c0_118 = arith.constant 0 : index
    %111 = vector.load %arg17[%c0_116, %c0_117, %c0_118] : memref<3x128x64xf32, #tpu.memory_space<vmem>>, vector<1x128x64xf32>
    %112 = vector.shape_cast %111 : vector<1x128x64xf32> to vector<128x64xf32>
    %cst_119 = arith.constant dense<0.000000e+00> : vector<16x64xf32>
    %113 = tpu.matmul %110, %112, %cst_119 {dimension_numbers = #tpu.dot_dimension_numbers<[1], [0], [0], [1], [0, 0, 1, 1], [], []>} : vector<16x128xf32>, vector<128x64xf32>, vector<16x64xf32> -> vector<16x64xf32>
    %c1_120 = arith.constant 1 : index
    %c0_121 = arith.constant 0 : index
    %c0_122 = arith.constant 0 : index
    %114 = vector.load %arg16[%c1_120, %c0_121, %c0_122] : memref<3x16x16xf32, #tpu.memory_space<vmem>>, vector<1x16x16xf32>
    %115 = vector.shape_cast %114 : vector<1x16x16xf32> to vector<16x16xf32>
    %cst_123 = arith.constant dense<0.000000e+00> : vector<16x128xf32>
    %116 = tpu.matmul %115, %107, %cst_123 {dimension_numbers = #tpu.dot_dimension_numbers<[1], [0], [0], [1], [0, 0, 1, 1], [], []>} : vector<16x16xf32>, vector<16x128xf32>, vector<16x128xf32> -> vector<16x128xf32>
    %c1_124 = arith.constant 1 : index
    %c0_125 = arith.constant 0 : index
    %c0_126 = arith.constant 0 : index
    %117 = vector.load %arg17[%c1_124, %c0_125, %c0_126] : memref<3x128x64xf32, #tpu.memory_space<vmem>>, vector<1x128x64xf32>
    %118 = vector.shape_cast %117 : vector<1x128x64xf32> to vector<128x64xf32>
    %cst_127 = arith.constant dense<0.000000e+00> : vector<16x64xf32>
    %119 = tpu.matmul %116, %118, %cst_127 {dimension_numbers = #tpu.dot_dimension_numbers<[1], [0], [0], [1], [0, 0, 1, 1], [], []>} : vector<16x128xf32>, vector<128x64xf32>, vector<16x64xf32> -> vector<16x64xf32>
    %120 = arith.addf %113, %119 : vector<16x64xf32>
    %c2_128 = arith.constant 2 : index
    %c0_129 = arith.constant 0 : index
    %c0_130 = arith.constant 0 : index
    %121 = vector.load %arg16[%c2_128, %c0_129, %c0_130] : memref<3x16x16xf32, #tpu.memory_space<vmem>>, vector<1x16x16xf32>
    %122 = vector.shape_cast %121 : vector<1x16x16xf32> to vector<16x16xf32>
    %cst_131 = arith.constant dense<0.000000e+00> : vector<16x128xf32>
    %123 = tpu.matmul %122, %107, %cst_131 {dimension_numbers = #tpu.dot_dimension_numbers<[1], [0], [0], [1], [0, 0, 1, 1], [], []>} : vector<16x16xf32>, vector<16x128xf32>, vector<16x128xf32> -> vector<16x128xf32>
    %c2_132 = arith.constant 2 : index
    %c0_133 = arith.constant 0 : index
    %c0_134 = arith.constant 0 : index
    %124 = vector.load %arg17[%c2_132, %c0_133, %c0_134] : memref<3x128x64xf32, #tpu.memory_space<vmem>>, vector<1x128x64xf32>
    %125 = vector.shape_cast %124 : vector<1x128x64xf32> to vector<128x64xf32>
    %cst_135 = arith.constant dense<0.000000e+00> : vector<16x64xf32>
    %126 = tpu.matmul %123, %125, %cst_135 {dimension_numbers = #tpu.dot_dimension_numbers<[1], [0], [0], [1], [0, 0, 1, 1], [], []>} : vector<16x128xf32>, vector<128x64xf32>, vector<16x64xf32> -> vector<16x64xf32>
    %127 = arith.addf %120, %126 : vector<16x64xf32>
    %c0_136 = arith.constant 0 : index
    %c0_137 = arith.constant 0 : index
    %128 = vector.load %arg18[%c0_136, %c0_137] : memref<1x64xf32, #tpu.memory_space<vmem>>, vector<1x64xf32>
    %129 = vector.broadcast %128 : vector<1x64xf32> to vector<16x64xf32>
    %130 = arith.addf %127, %129 : vector<16x64xf32>
    %131 = math.tanh %130 : vector<16x64xf32>
    %c0_138 = arith.constant 0 : index
    %c0_139 = arith.constant 0 : index
    %c0_140 = arith.constant 0 : index
    %132 = vector.load %arg19[%c0_138, %c0_139, %c0_140] : memref<1x16x64xf32, #tpu.memory_space<vmem>>, vector<1x16x64xf32>
    %133 = vector.shape_cast %132 : vector<1x16x64xf32> to vector<16x64xf32>
    %134 = vector.shape_cast %131 : vector<16x64xf32> to vector<1x16x64xf32>
    tpu.vector_store %arg19[%c0_138, %c0_139, %c0_140], %134 {strides = array<i32>} : memref<1x16x64xf32, #tpu.memory_space<vmem>>, vector<1x16x64xf32>,
    return
  }
  func.func @transform_0(%arg0: i32) -> (i32, i32, i32) {
    %c0_i32 = arith.constant 0 : i32
    %c0_i32_0 = arith.constant 0 : i32
    %c0_i32_1 = arith.constant 0 : i32
    return %arg0, %c0_i32, %c0_i32_0 : i32, i32, i32
  }
  func.func @transform_1(%arg0: i32) -> (i32, i32, i32) {
    %c0_i32 = arith.constant 0 : i32
    %c0_i32_0 = arith.constant 0 : i32
    %c0_i32_1 = arith.constant 0 : i32
    %c0_i32_2 = arith.constant 0 : i32
    return %c0_i32, %c0_i32_0, %c0_i32_1 : i32, i32, i32
  }
  func.func @transform_2(%arg0: i32) -> (i32, i32, i32) {
    %c0_i32 = arith.constant 0 : i32
    %c0_i32_0 = arith.constant 0 : i32
    %c0_i32_1 = arith.constant 0 : i32
    %c0_i32_2 = arith.constant 0 : i32
    return %c0_i32, %c0_i32_0, %c0_i32_1 : i32, i32, i32
  }
  func.func @transform_3(%arg0: i32) -> (i32, i32) {
    %c0_i32 = arith.constant 0 : i32
    %c0_i32_0 = arith.constant 0 : i32
    %c0_i32_1 = arith.constant 0 : i32
    return %c0_i32, %c0_i32_0 : i32, i32
  }
  func.func @transform_4(%arg0: i32) -> (i32, i32, i32) {
    %c0_i32 = arith.constant 0 : i32
    %c0_i32_0 = arith.constant 0 : i32
    %c0_i32_1 = arith.constant 0 : i32
    %c0_i32_2 = arith.constant 0 : i32
    return %c0_i32, %c0_i32_0, %c0_i32_1 : i32, i32, i32
  }
  func.func @transform_5(%arg0: i32) -> (i32, i32, i32) {
    %c0_i32 = arith.constant 0 : i32
    %c0_i32_0 = arith.constant 0 : i32
    %c0_i32_1 = arith.constant 0 : i32
    %c0_i32_2 = arith.constant 0 : i32
    return %c0_i32, %c0_i32_0, %c0_i32_1 : i32, i32, i32
  }
  func.func @transform_6(%arg0: i32) -> (i32, i32) {
    %c0_i32 = arith.constant 0 : i32
    %c0_i32_0 = arith.constant 0 : i32
    %c0_i32_1 = arith.constant 0 : i32
    return %c0_i32, %c0_i32_0 : i32, i32
  }
  func.func @transform_7(%arg0: i32) -> (i32, i32) {
    %c0_i32 = arith.constant 0 : i32
    %c0_i32_0 = arith.constant 0 : i32
    %c0_i32_1 = arith.constant 0 : i32
    return %c0_i32, %c0_i32_0 : i32, i32
  }
  func.func @transform_8(%arg0: i32) -> (i32, i32) {
    %c0_i32 = arith.constant 0 : i32
    %c0_i32_0 = arith.constant 0 : i32
    %c0_i32_1 = arith.constant 0 : i32
    return %c0_i32, %c0_i32_0 : i32, i32
  }
  func.func @transform_9(%arg0: i32) -> (i32, i32) {
    %c0_i32 = arith.constant 0 : i32
    %c0_i32_0 = arith.constant 0 : i32
    %c0_i32_1 = arith.constant 0 : i32
    return %c0_i32, %c0_i32_0 : i32, i32
  }
  func.func @transform_10(%arg0: i32) -> (i32, i32, i32) {
    %c0_i32 = arith.constant 0 : i32
    %c0_i32_0 = arith.constant 0 : i32
    %c0_i32_1 = arith.constant 0 : i32
    %c0_i32_2 = arith.constant 0 : i32
    return %c0_i32, %c0_i32_0, %c0_i32_1 : i32, i32, i32
  }
  func.func @transform_11(%arg0: i32) -> (i32, i32, i32) {
    %c0_i32 = arith.constant 0 : i32
    %c0_i32_0 = arith.constant 0 : i32
    %c0_i32_1 = arith.constant 0 : i32
    %c0_i32_2 = arith.constant 0 : i32
    return %c0_i32, %c0_i32_0, %c0_i32_1 : i32, i32, i32
  }
  func.func @transform_12(%arg0: i32) -> (i32, i32) {
    %c0_i32 = arith.constant 0 : i32
    %c0_i32_0 = arith.constant 0 : i32
    %c0_i32_1 = arith.constant 0 : i32
    return %c0_i32, %c0_i32_0 : i32, i32
  }
  func.func @transform_13(%arg0: i32) -> (i32, i32) {
    %c0_i32 = arith.constant 0 : i32
    %c0_i32_0 = arith.constant 0 : i32
    %c0_i32_1 = arith.constant 0 : i32
    return %c0_i32, %c0_i32_0 : i32, i32
  }
  func.func @transform_14(%arg0: i32) -> (i32, i32) {
    %c0_i32 = arith.constant 0 : i32
    %c0_i32_0 = arith.constant 0 : i32
    %c0_i32_1 = arith.constant 0 : i32
    return %c0_i32, %c0_i32_0 : i32, i32
  }
  func.func @transform_15(%arg0: i32) -> (i32, i32, i32) {
    %c0_i32 = arith.constant 0 : i32
    %c0_i32_0 = arith.constant 0 : i32
    %c0_i32_1 = arith.constant 0 : i32
    %c0_i32_2 = arith.constant 0 : i32
    return %c0_i32, %c0_i32_0, %c0_i32_1 : i32, i32, i32
  }
  func.func @transform_16(%arg0: i32) -> (i32, i32, i32) {
    %c0_i32 = arith.constant 0 : i32
    %c0_i32_0 = arith.constant 0 : i32
    %c0_i32_1 = arith.constant 0 : i32
    %c0_i32_2 = arith.constant 0 : i32
    return %c0_i32, %c0_i32_0, %c0_i32_1 : i32, i32, i32
  }
  func.func @transform_17(%arg0: i32) -> (i32, i32) {
    %c0_i32 = arith.constant 0 : i32
    %c0_i32_0 = arith.constant 0 : i32
    %c0_i32_1 = arith.constant 0 : i32
    return %c0_i32, %c0_i32_0 : i32, i32
  }
  func.func @transform_18(%arg0: i32) -> (i32, i32, i32) {
    %c0_i32 = arith.constant 0 : i32
    %c0_i32_0 = arith.constant 0 : i32
    %c0_i32_1 = arith.constant 0 : i32
    return %arg0, %c0_i32, %c0_i32_0 : i32, i32, i32
  }
}

</mosaic_0001>

<llo_original>
// kernel: tile.38
$region0: #{tile.38}
  #allocation0 [shape = 's32[1]{0}', space=sflag, size = 0x4, scoped, tag = 'scoped memory for tile.38']
  %s0 = inlined_call_operand.vmem [shape: f32[4], index: 0, kind: input, shape index: {}]
  %s1 = inlined_call_operand.vmem [shape: f32[16,4], index: 1, kind: output, shape index: {}]
  // Predicated region
  $region2: #{tile.38} parent=0 // pred_check
    _
  $region3: #{tile.38} parent=0 // pred_check_branch
    %3 = sbr.rel (0) target = $region5
  $region4: #{tile.38} parent=0 // pred_region
    _
  $region5: #{tile.38} parent=0 // pred_fallthru
    _
  %v4 = vld [vmem:[%s0] ss:$0 sm:$0xff]
  %5 = vst [vmem:[%s1] sm:$0xff] %v4
  %s6 = scalar_lea.vmem %s1, 8
  %7 = vst [vmem:[%s6] sm:$0xff] %v4

// kernel: tile.39
$region0: #{tile.39}
  %s0 = inlined_call_operand.vmem [shape: f32[16,4], index: 0, kind: input, shape index: {}]
  %s1 = inlined_call_operand.vmem [shape: f32[1,64], index: 1, kind: output, shape index: {}]
  $region1: #{tile.39} parent=0
    #allocation0 [shape = 'u8[4096]{0}', space=vmem, size = 0x1000, scoped, tag = 'scoped mem for output reshape']
    %v2 = vld [vmem:[%s0] sm:$0x1]
    %vm3 = vcmask 31744
    %4 = vst.msk [vmem:[#allocation0] sm:$0x1] %vm3, %v2
    %s5 = scalar_lea.vmem %s0, 15
    %v6 = vld [vmem:[%s5] sm:$0x1]
    %7 = vrot.lane.b32.xlu0 %v6, 60
    %v8 = vpop.permute.xlu0 %7
    %vm9 = vcmask 523744
    %10 = vst.msk [vmem:[#allocation0] sm:$0x1] %vm9, %v8
    %s11 = scalar_lea.vmem %s0, 14
    %v12 = vld [vmem:[%s11] sm:$0x1]
    %13 = vrot.lane.b32.xlu0 %v12, 56
    %v14 = vpop.permute.xlu0 %13
    %vm15 = vcmask 490944
    %16 = vst.msk [vmem:[#allocation0] sm:$0x1] %vm15, %v14
    %s17 = scalar_lea.vmem %s0, 13
    %v18 = vld [vmem:[%s17] sm:$0x1]
    %19 = vrot.lane.b32.xlu0 %v18, 52
    %v20 = vpop.permute.xlu0 %19
    %vm21 = vcmask 458144
    %22 = vst.msk [vmem:[#allocation0] sm:$0x1] %vm21, %v20
    %s23 = scalar_lea.vmem %s0, 12
    %v24 = vld [vmem:[%s23] sm:$0x1]
    %25 = vrot.lane.b32.xlu0 %v24, 48
    %v26 = vpop.permute.xlu0 %25
    %vm27 = vcmask 425344
    %28 = vst.msk [vmem:[#allocation0] sm:$0x1] %vm27, %v26
    %s29 = scalar_lea.vmem %s0, 11
    %v30 = vld [vmem:[%s29] sm:$0x1]
    %31 = vrot.lane.b32.xlu0 %v30, 44
    %v32 = vpop.permute.xlu0 %31
    %vm33 = vcmask 392544
    %34 = vst.msk [vmem:[#allocation0] sm:$0x1] %vm33, %v32
    %s35 = scalar_lea.vmem %s0, 10
    %v36 = vld [vmem:[%s35] sm:$0x1]
    %37 = vrot.lane.b32.xlu0 %v36, 40
    %v38 = vpop.permute.xlu0 %37
    %vm39 = vcmask 359744
    %40 = vst.msk [vmem:[#allocation0] sm:$0x1] %vm39, %v38
    %s41 = scalar_lea.vmem %s0, 9
    %v42 = vld [vmem:[%s41] sm:$0x1]
    %43 = vrot.lane.b32.xlu0 %v42, 36
    %v44 = vpop.permute.xlu0 %43
    %vm45 = vcmask 326944
    %46 = vst.msk [vmem:[#allocation0] sm:$0x1] %vm45, %v44
    %s47 = scalar_lea.vmem %s0, 8
    %v48 = vld [vmem:[%s47] sm:$0x1]
    %49 = vrot.lane.b32.xlu0 %v48, 32
    %v50 = vpop.permute.xlu0 %49
    %vm51 = vcmask 294144
    %52 = vst.msk [vmem:[#allocation0] sm:$0x1] %vm51, %v50
    %s53 = scalar_lea.vmem %s0, 7
    %v54 = vld [vmem:[%s53] sm:$0x1]
    %55 = vrot.lane.b32.xlu0 %v54, 28
    %v56 = vpop.permute.xlu0 %55
    %vm57 = vcmask 261344
    %58 = vst.msk [vmem:[#allocation0] sm:$0x1] %vm57, %v56
    %s59 = scalar_lea.vmem %s0, 6
    %v60 = vld [vmem:[%s59] sm:$0x1]
    %61 = vrot.lane.b32.xlu0 %v60, 24
    %v62 = vpop.permute.xlu0 %61
    %vm63 = vcmask 228544
    %64 = vst.msk [vmem:[#allocation0] sm:$0x1] %vm63, %v62
    %s65 = scalar_lea.vmem %s0, 5
    %v66 = vld [vmem:[%s65] sm:$0x1]
    %67 = vrot.lane.b32.xlu0 %v66, 20
    %v68 = vpop.permute.xlu0 %67
    %vm69 = vcmask 195744
    %70 = vst.msk [vmem:[#allocation0] sm:$0x1] %vm69, %v68
    %s71 = scalar_lea.vmem %s0, 4
    %v72 = vld [vmem:[%s71] sm:$0x1]
    %73 = vrot.lane.b32.xlu0 %v72, 16
    %v74 = vpop.permute.xlu0 %73
    %vm75 = vcmask 162944
    %76 = vst.msk [vmem:[#allocation0] sm:$0x1] %vm75, %v74
    %s77 = scalar_lea.vmem %s0, 3
    %v78 = vld [vmem:[%s77] sm:$0x1]
    %79 = vrot.lane.b32.xlu0 %v78, 12
    %v80 = vpop.permute.xlu0 %79
    %vm81 = vcmask 130144
    %82 = vst.msk [vmem:[#allocation0] sm:$0x1] %vm81, %v80
    %s83 = scalar_lea.vmem %s0, 2
    %v84 = vld [vmem:[%s83] sm:$0x1]
    %85 = vrot.lane.b32.xlu0 %v84, 8
    %v86 = vpop.permute.xlu0 %85
    %vm87 = vcmask 97344
    %88 = vst.msk [vmem:[#allocation0] sm:$0x1] %vm87, %v86
    %s89 = scalar_lea.vmem %s0, 1
    %v90 = vld [vmem:[%s89] sm:$0x1]
    %91 = vrot.lane.b32.xlu0 %v90, 4
    %v92 = vpop.permute.xlu0 %91
    %vm93 = vcmask 64544
    %94 = vst.msk [vmem:[#allocation0] sm:$0x1] %vm93, %v92
    %s96 = sshll.u32 1, 1
    %s97 = ssub.s32 %s96, 1
    %v99 = vld [vmem:[#allocation0] sm:%s97]
    %s100 = sshll.u32 1, 1
    %s101 = ssub.s32 %s100, 1
    %102 = vst [vmem:[%s1] sm:%s101] %v99

// kernel: tile.23
$region0: #{tile.23}
  #allocation0 [shape = 's32[1]{0}', space=sflag, size = 0x4, scoped, tag = 'scoped memory for tile.23']
  %s0 = inlined_call_operand.vmem [shape: f32[8], index: 0, kind: input, shape index: {}]
  %s1 = inlined_call_operand.vmem [shape: f32[8,8], index: 1, kind: output, shape index: {}]
  // Predicated region
  $region2: #{tile.23} parent=0 // pred_check
    _
  $region3: #{tile.23} parent=0 // pred_check_branch
    %3 = sbr.rel (0) target = $region5
  $region4: #{tile.23} parent=0 // pred_region
    _
  $region5: #{tile.23} parent=0 // pred_fallthru
    _
  %v4 = vld [vmem:[%s0] ss:$0 sm:$0xff]
  %5 = vst [vmem:[%s1] sm:$0xff] %v4

// kernel: tile.24
$region0: #{tile.24}
  %s0 = inlined_call_operand.vmem [shape: f32[8,8], index: 0, kind: input, shape index: {}]
  %s1 = inlined_call_operand.vmem [shape: f32[1,64], index: 1, kind: output, shape index: {}]
  $region1: #{tile.24} parent=0
    #allocation0 [shape = 'u8[4096]{0}', space=vmem, size = 0x1000, scoped, tag = 'scoped mem for output reshape']
    %v2 = vld [vmem:[%s0] sm:$0x1]
    %vm3 = vcmask 64512
    %4 = vst.msk [vmem:[#allocation0] sm:$0x1] %vm3, %v2
    %s5 = scalar_lea.vmem %s0, 7
    %v6 = vld [vmem:[%s5] sm:$0x1]
    %7 = vrot.lane.b32.xlu0 %v6, 56
    %v8 = vpop.permute.xlu0 %7
    %vm9 = vcmask 523712
    %10 = vst.msk [vmem:[#allocation0] sm:$0x1] %vm9, %v8
    %s11 = scalar_lea.vmem %s0, 6
    %v12 = vld [vmem:[%s11] sm:$0x1]
    %13 = vrot.lane.b32.xlu0 %v12, 48
    %v14 = vpop.permute.xlu0 %13
    %vm15 = vcmask 458112
    %16 = vst.msk [vmem:[#allocation0] sm:$0x1] %vm15, %v14
    %s17 = scalar_lea.vmem %s0, 5
    %v18 = vld [vmem:[%s17] sm:$0x1]
    %19 = vrot.lane.b32.xlu0 %v18, 40
    %v20 = vpop.permute.xlu0 %19
    %vm21 = vcmask 392512
    %22 = vst.msk [vmem:[#allocation0] sm:$0x1] %vm21, %v20
    %s23 = scalar_lea.vmem %s0, 4
    %v24 = vld [vmem:[%s23] sm:$0x1]
    %25 = vrot.lane.b32.xlu0 %v24, 32
    %v26 = vpop.permute.xlu0 %25
    %vm27 = vcmask 326912
    %28 = vst.msk [vmem:[#allocation0] sm:$0x1] %vm27, %v26
    %s29 = scalar_lea.vmem %s0, 3
    %v30 = vld [vmem:[%s29] sm:$0x1]
    %31 = vrot.lane.b32.xlu0 %v30, 24
    %v32 = vpop.permute.xlu0 %31
    %vm33 = vcmask 261312
    %34 = vst.msk [vmem:[#allocation0] sm:$0x1] %vm33, %v32
    %s35 = scalar_lea.vmem %s0, 2
    %v36 = vld [vmem:[%s35] sm:$0x1]
    %37 = vrot.lane.b32.xlu0 %v36, 16
    %v38 = vpop.permute.xlu0 %37
    %vm39 = vcmask 195712
    %40 = vst.msk [vmem:[#allocation0] sm:$0x1] %vm39, %v38
    %s41 = scalar_lea.vmem %s0, 1
    %v42 = vld [vmem:[%s41] sm:$0x1]
    %43 = vrot.lane.b32.xlu0 %v42, 8
    %v44 = vpop.permute.xlu0 %43
    %vm45 = vcmask 130112
    %46 = vst.msk [vmem:[#allocation0] sm:$0x1] %vm45, %v44
    %s48 = sshll.u32 1, 1
    %s49 = ssub.s32 %s48, 1
    %v51 = vld [vmem:[#allocation0] sm:%s49]
    %s52 = sshll.u32 1, 1
    %s53 = ssub.s32 %s52, 1
    %54 = vst [vmem:[%s1] sm:%s53] %v51

// kernel: tile.28
$region0: #{tile.28}
  #allocation0 [shape = 's32[1]{0}', space=sflag, size = 0x4, scoped, tag = 'scoped memory for tile.28']
  %s0 = inlined_call_operand.vmem [shape: f32[16], index: 0, kind: input, shape index: {}]
  %s1 = inlined_call_operand.vmem [shape: f32[4,16], index: 1, kind: output, shape index: {}]
  // Predicated region
  $region2: #{tile.28} parent=0 // pred_check
    _
  $region3: #{tile.28} parent=0 // pred_check_branch
    %3 = sbr.rel (0) target = $region5
  $region4: #{tile.28} parent=0 // pred_region
    _
  $region5: #{tile.28} parent=0 // pred_fallthru
    _
  %v4 = vld [vmem:[%s0] ss:$0 sm:$0xff]
  %5 = vst [vmem:[%s1] sm:$0xf] %v4

// kernel: tile.29
$region0: #{tile.29}
  %s0 = inlined_call_operand.vmem [shape: f32[4,16], index: 0, kind: input, shape index: {}]
  %s1 = inlined_call_operand.vmem [shape: f32[1,64], index: 1, kind: output, shape index: {}]
  $region1: #{tile.29} parent=0
    #allocation0 [shape = 'u8[4096]{0}', space=vmem, size = 0x1000, scoped, tag = 'scoped mem for output reshape']
    #allocation1 [shape = 'u8[4096]{0}', space=vmem, size = 0x1000, scoped, tag = 'scoped mem for input reshape']
    %s3 = sshll.u32 1, 4
    %s4 = ssub.s32 %s3, 1
    %v5 = vld [vmem:[%s0] sm:%s4]
    %6 = vst [vmem:[#allocation1] sm:%s4] %v5
    %v7 = vld [vmem:[#allocation1] sm:$0x1]
    %vm8 = vcmask 130048
    %9 = vst.msk [vmem:[#allocation0] sm:$0x1] %vm8, %v7
    %s10 = scalar_lea.vmem [#allocation1], 3
    %v11 = vld [vmem:[%s10] sm:$0x1]
    %12 = vrot.lane.b32.xlu0 %v11, 48
    %v13 = vpop.permute.xlu0 %12
    %vm14 = vcmask 523648
    %15 = vst.msk [vmem:[#allocation0] sm:$0x1] %vm14, %v13
    %s16 = scalar_lea.vmem [#allocation1], 2
    %v17 = vld [vmem:[%s16] sm:$0x1]
    %18 = vrot.lane.b32.xlu0 %v17, 32
    %v19 = vpop.permute.xlu0 %18
    %vm20 = vcmask 392448
    %21 = vst.msk [vmem:[#allocation0] sm:$0x1] %vm20, %v19
    %s22 = scalar_lea.vmem [#allocation1], 1
    %v23 = vld [vmem:[%s22] sm:$0x1]
    %24 = vrot.lane.b32.xlu0 %v23, 16
    %v25 = vpop.permute.xlu0 %24
    %vm26 = vcmask 261248
    %27 = vst.msk [vmem:[#allocation0] sm:$0x1] %vm26, %v25
    %s29 = sshll.u32 1, 1
    %s30 = ssub.s32 %s29, 1
    %v32 = vld [vmem:[#allocation0] sm:%s30]
    %s33 = sshll.u32 1, 1
    %s34 = ssub.s32 %s33, 1
    %35 = vst [vmem:[%s1] sm:%s34] %v32

// kernel: pix2pix_forward.1
$region0: #{pix2pix_forward.1}
  #allocation0 [shape = 'u32[]', space=smem, size = 0x4, offset = 0x4, fixed_abs, tag = 'smem constant byte address 0x4 - core index']
  #allocation1 [shape = 'u32[144,128]{1,0:T(1,128)}', space=vmem, size = 0x12000, scoped, tag = 'internal scratch']
  %s0 = inlined_call_operand.vmem [shape: f32[2,16,64], index: 0, kind: input, shape index: {}]
  %s1 = inlined_call_operand.vmem [shape: f32[4,8,16], index: 1, kind: input, shape index: {}]
  %s2 = inlined_call_operand.vmem [shape: f32[4,64,64], index: 2, kind: input, shape index: {}]
  %s3 = inlined_call_operand.vmem [shape: f32[1,64], index: 3, kind: input, shape index: {}]
  %s4 = inlined_call_operand.vmem [shape: f32[4,4,8], index: 4, kind: input, shape index: {}]
  %s5 = inlined_call_operand.vmem [shape: f32[4,64,64], index: 5, kind: input, shape index: {}]
  %s6 = inlined_call_operand.vmem [shape: f32[1,64], index: 6, kind: input, shape index: {}]
  %s7 = inlined_call_operand.vmem [shape: f32[8,4], index: 7, kind: input, shape index: {}]
  %s8 = inlined_call_operand.vmem [shape: f32[64,192], index: 8, kind: input, shape index: {}]
  %s9 = inlined_call_operand.vmem [shape: f32[64,192], index: 9, kind: input, shape index: {}]
  %s10 = inlined_call_operand.vmem [shape: f32[3,8,8], index: 10, kind: input, shape index: {}]
  %s11 = inlined_call_operand.vmem [shape: f32[3,192,64], index: 11, kind: input, shape index: {}]
  %s12 = inlined_call_operand.vmem [shape: f32[1,64], index: 12, kind: input, shape index: {}]
  %s13 = inlined_call_operand.vmem [shape: f32[16,8], index: 13, kind: input, shape index: {}]
  %s14 = inlined_call_operand.vmem [shape: f32[64,128], index: 14, kind: input, shape index: {}]
  %s15 = inlined_call_operand.vmem [shape: f32[3,16,16], index: 15, kind: input, shape index: {}]
  %s16 = inlined_call_operand.vmem [shape: f32[3,128,64], index: 16, kind: input, shape index: {}]
  %s17 = inlined_call_operand.vmem [shape: f32[1,64], index: 17, kind: input, shape index: {}]
  %s18 = inlined_call_operand.vmem [shape: f32[2,16,64], index: 18, kind: output, shape index: {}]
  %s19 = sld [smem:[#allocation0]]
  $region105: #{pix2pix_forward.1} parent=0
    _
  %s21 = ssub.s32 1, %s19
  %s22 = scalar_select 0, %s21, %s19
  loop: start=0, step=1, limit=4
  $region2: #{pix2pix_forward.1} parent=0 // loop_pre_header
    _
  $region3: #{pix2pix_forward.1} parent=0 // loop_header
    %s24 = sphi 0, %s28
    %p25 = scmp.ge.s32.totalorder %s24, 4
    %s34 = sphi 0, %s36
    %s37 = sphi 0, %s34
    %s38 = sphi 0, %s37
    %s54 = sphi 0, %s38
    %s58 = sphi 0, %s58
    %s60 = sphi 0, %s58
    %s61 = sphi 0, %s60
    %s75 = sphi 0, %s61
    %s79 = sphi 0, %s79
    %s81 = sphi 0, %s79
    %s82 = sphi 0, %s81
    %s96 = sphi 0, %s82
    %s100 = sphi 0, %s100
    %s102 = sphi 0, %s100
    %s103 = sphi 0, %s102
    %s117 = sphi 0, %s103
    %s121 = sphi 0, %s121
    %s123 = sphi 0, %s121
    %s124 = sphi 0, %s123
    %s138 = sphi 0, %s124
    %s142 = sphi 0, %s142
    %s144 = sphi 0, %s142
    %s145 = sphi 0, %s144
    %s159 = sphi 0, %s145
    %s163 = sphi 0, %s163
    %s165 = sphi 0, %s163
    %s166 = sphi 0, %s165
    %s180 = sphi 0, %s166
    %s184 = sphi 0, %s184
    %s186 = sphi 0, %s184
    %s187 = sphi 0, %s186
    %s201 = sphi 0, %s187
    %s205 = sphi 0, %s205
    %s207 = sphi 0, %s205
    %s208 = sphi 0, %s207
    %s222 = sphi 0, %s208
    %s226 = sphi 0, %s226
    %s228 = sphi 0, %s226
    %s229 = sphi 0, %s228
    %s243 = sphi 0, %s229
    %s247 = sphi 0, %s247
    %s249 = sphi 0, %s247
    %s250 = sphi 0, %s249
    %s264 = sphi 0, %s250
    %s268 = sphi 0, %s268
    %s270 = sphi 0, %s268
    %s271 = sphi 0, %s270
    %s285 = sphi 0, %s271
    %s289 = sphi 0, %s289
    %s291 = sphi 0, %s289
    %s292 = sphi 0, %s291
    %s306 = sphi 0, %s292
    %s310 = sphi 0, %s310
    %s312 = sphi 0, %s310
    %s313 = sphi 0, %s312
    %s327 = sphi 0, %s313
    %s331 = sphi 0, %s331
    %s333 = sphi 0, %s331
    %s334 = sphi 0, %s333
    %s348 = sphi 0, %s334
    %s352 = sphi 0, %s352
    %s354 = sphi 0, %s352
    %s355 = sphi 0, %s354
    %s369 = sphi 0, %s355
    %s373 = sphi 0, %s373
    %s375 = sphi 0, %s373
    %s376 = sphi 0, %s375
    %s390 = sphi 0, %s376
    %s394 = sphi 0, %s394
    %s396 = sphi 0, %s394
    %s397 = sphi 0, %s396
    %s411 = sphi 0, %s397
    %s417 = sphi 0, %s419
    %s420 = sphi 0, %s417
    %s421 = sphi 0, %s420
    %s437 = sphi 0, %s421
  $region4: #{pix2pix_forward.1} parent=0 // loop_header_branch
    %27 = sbr.rel (%p25) target = $region8
  $region5: #{pix2pix_forward.1} parent=0 // loop_body
    %s29 = ssub.s32 %s24, 1
    %s30 = ssub.s32 %s24, 2
    %s31 = sadd.s32 %s24, 1
    %s32 = ssub.s32 %s24, %s31
    %p33 = scmp.eq.s32.totalorder %s32, 0
    %s35 = sadd.s32 %s34, 1
    %s36 = scalar_select %p33, %s34, %s35
    %p39 = pneg %p33
    %p40 = scmp.eq.s32.totalorder %s24, 1
    %p41 = por %p39, %p40
    %p42 = scmp.ne.s32.totalorder %s34, %s37
    %p43 = scmp.eq.s32.totalorder %s24, 0
    %p44 = por %p42, %p43
    %p45 = scmp.ne.s32.totalorder %s34, %s37
    %p46 = scmp.eq.s32.totalorder %s29, 1
    %p47 = por %p45, %p46
    %p48 = scmp.ne.s32.totalorder %s37, %s38
    %p49 = scmp.eq.s32.totalorder %s29, 0
    %p50 = por %p48, %p49
    %p51 = scmp.ne.s32.totalorder %s37, %s38
    %p52 = scmp.eq.s32.totalorder %s30, 1
    %p53 = por %p51, %p52
    %p55 = scmp.ne.s32.totalorder %s38, %s54
    %p56 = scmp.eq.s32.totalorder %s30, 0
    %p57 = por %p55, %p56
    %s59 = sadd.s32 %s58, 1
    %p62 = scmp.eq.s32.totalorder %s24, 1
    %p63 = scmp.ne.s32.totalorder %s58, %s60
    %p64 = scmp.eq.s32.totalorder %s24, 0
    %p65 = por %p63, %p64
    %p66 = scmp.ne.s32.totalorder %s58, %s60
    %p67 = scmp.eq.s32.totalorder %s29, 1
    %p68 = por %p66, %p67
    %p69 = scmp.ne.s32.totalorder %s60, %s61
    %p70 = scmp.eq.s32.totalorder %s29, 0
    %p71 = por %p69, %p70
    %p72 = scmp.ne.s32.totalorder %s60, %s61
    %p73 = scmp.eq.s32.totalorder %s30, 1
    %p74 = por %p72, %p73
    %p76 = scmp.ne.s32.totalorder %s61, %s75
    %p77 = scmp.eq.s32.totalorder %s30, 0
    %p78 = por %p76, %p77
    %s80 = sadd.s32 %s79, 1
    %p83 = scmp.eq.s32.totalorder %s24, 1
    %p84 = scmp.ne.s32.totalorder %s79, %s81
    %p85 = scmp.eq.s32.totalorder %s24, 0
    %p86 = por %p84, %p85
    %p87 = scmp.ne.s32.totalorder %s79, %s81
    %p88 = scmp.eq.s32.totalorder %s29, 1
    %p89 = por %p87, %p88
    %p90 = scmp.ne.s32.totalorder %s81, %s82
    %p91 = scmp.eq.s32.totalorder %s29, 0
    %p92 = por %p90, %p91
    %p93 = scmp.ne.s32.totalorder %s81, %s82
    %p94 = scmp.eq.s32.totalorder %s30, 1
    %p95 = por %p93, %p94
    %p97 = scmp.ne.s32.totalorder %s82, %s96
    %p98 = scmp.eq.s32.totalorder %s30, 0
    %p99 = por %p97, %p98
    %s101 = sadd.s32 %s100, 1
    %p104 = scmp.eq.s32.totalorder %s24, 1
    %p105 = scmp.ne.s32.totalorder %s100, %s102
    %p106 = scmp.eq.s32.totalorder %s24, 0
    %p107 = por %p105, %p106
    %p108 = scmp.ne.s32.totalorder %s100, %s102
    %p109 = scmp.eq.s32.totalorder %s29, 1
    %p110 = por %p108, %p109
    %p111 = scmp.ne.s32.totalorder %s102, %s103
    %p112 = scmp.eq.s32.totalorder %s29, 0
    %p113 = por %p111, %p112
    %p114 = scmp.ne.s32.totalorder %s102, %s103
    %p115 = scmp.eq.s32.totalorder %s30, 1
    %p116 = por %p114, %p115
    %p118 = scmp.ne.s32.totalorder %s103, %s117
    %p119 = scmp.eq.s32.totalorder %s30, 0
    %p120 = por %p118, %p119
    %s122 = sadd.s32 %s121, 1
    %p125 = scmp.eq.s32.totalorder %s24, 1
    %p126 = scmp.ne.s32.totalorder %s121, %s123
    %p127 = scmp.eq.s32.totalorder %s24, 0
    %p128 = por %p126, %p127
    %p129 = scmp.ne.s32.totalorder %s121, %s123
    %p130 = scmp.eq.s32.totalorder %s29, 1
    %p131 = por %p129, %p130
    %p132 = scmp.ne.s32.totalorder %s123, %s124
    %p133 = scmp.eq.s32.totalorder %s29, 0
    %p134 = por %p132, %p133
    %p135 = scmp.ne.s32.totalorder %s123, %s124
    %p136 = scmp.eq.s32.totalorder %s30, 1
    %p137 = por %p135, %p136
    %p139 = scmp.ne.s32.totalorder %s124, %s138
    %p140 = scmp.eq.s32.totalorder %s30, 0
    %p141 = por %p139, %p140
    %s143 = sadd.s32 %s142, 1
    %p146 = scmp.eq.s32.totalorder %s24, 1
    %p147 = scmp.ne.s32.totalorder %s142, %s144
    %p148 = scmp.eq.s32.totalorder %s24, 0
    %p149 = por %p147, %p148
    %p150 = scmp.ne.s32.totalorder %s142, %s144
    %p151 = scmp.eq.s32.totalorder %s29, 1
    %p152 = por %p150, %p151
    %p153 = scmp.ne.s32.totalorder %s144, %s145
    %p154 = scmp.eq.s32.totalorder %s29, 0
    %p155 = por %p153, %p154
    %p156 = scmp.ne.s32.totalorder %s144, %s145
    %p157 = scmp.eq.s32.totalorder %s30, 1
    %p158 = por %p156, %p157
    %p160 = scmp.ne.s32.totalorder %s145, %s159
    %p161 = scmp.eq.s32.totalorder %s30, 0
    %p162 = por %p160, %p161
    %s164 = sadd.s32 %s163, 1
    %p167 = scmp.eq.s32.totalorder %s24, 1
    %p168 = scmp.ne.s32.totalorder %s163, %s165
    %p169 = scmp.eq.s32.totalorder %s24, 0
    %p170 = por %p168, %p169
    %p171 = scmp.ne.s32.totalorder %s163, %s165
    %p172 = scmp.eq.s32.totalorder %s29, 1
    %p173 = por %p171, %p172
    %p174 = scmp.ne.s32.totalorder %s165, %s166
    %p175 = scmp.eq.s32.totalorder %s29, 0
    %p176 = por %p174, %p175
    %p177 = scmp.ne.s32.totalorder %s165, %s166
    %p178 = scmp.eq.s32.totalorder %s30, 1
    %p179 = por %p177, %p178
    %p181 = scmp.ne.s32.totalorder %s166, %s180
    %p182 = scmp.eq.s32.totalorder %s30, 0
    %p183 = por %p181, %p182
    %s185 = sadd.s32 %s184, 1
    %p188 = scmp.eq.s32.totalorder %s24, 1
    %p189 = scmp.ne.s32.totalorder %s184, %s186
    %p190 = scmp.eq.s32.totalorder %s24, 0
    %p191 = por %p189, %p190
    %p192 = scmp.ne.s32.totalorder %s184, %s186
    %p193 = scmp.eq.s32.totalorder %s29, 1
    %p194 = por %p192, %p193
    %p195 = scmp.ne.s32.totalorder %s186, %s187
    %p196 = scmp.eq.s32.totalorder %s29, 0
    %p197 = por %p195, %p196
    %p198 = scmp.ne.s32.totalorder %s186, %s187
    %p199 = scmp.eq.s32.totalorder %s30, 1
    %p200 = por %p198, %p199
    %p202 = scmp.ne.s32.totalorder %s187, %s201
    %p203 = scmp.eq.s32.totalorder %s30, 0
    %p204 = por %p202, %p203
    %s206 = sadd.s32 %s205, 1
    %p209 = scmp.eq.s32.totalorder %s24, 1
    %p210 = scmp.ne.s32.totalorder %s205, %s207
    %p211 = scmp.eq.s32.totalorder %s24, 0
    %p212 = por %p210, %p211
    %p213 = scmp.ne.s32.totalorder %s205, %s207
    %p214 = scmp.eq.s32.totalorder %s29, 1
    %p215 = por %p213, %p214
    %p216 = scmp.ne.s32.totalorder %s207, %s208
    %p217 = scmp.eq.s32.totalorder %s29, 0
    %p218 = por %p216, %p217
    %p219 = scmp.ne.s32.totalorder %s207, %s208
    %p220 = scmp.eq.s32.totalorder %s30, 1
    %p221 = por %p219, %p220
    %p223 = scmp.ne.s32.totalorder %s208, %s222
    %p224 = scmp.eq.s32.totalorder %s30, 0
    %p225 = por %p223, %p224
    %s227 = sadd.s32 %s226, 1
    %p230 = scmp.eq.s32.totalorder %s24, 1
    %p231 = scmp.ne.s32.totalorder %s226, %s228
    %p232 = scmp.eq.s32.totalorder %s24, 0
    %p233 = por %p231, %p232
    %p234 = scmp.ne.s32.totalorder %s226, %s228
    %p235 = scmp.eq.s32.totalorder %s29, 1
    %p236 = por %p234, %p235
    %p237 = scmp.ne.s32.totalorder %s228, %s229
    %p238 = scmp.eq.s32.totalorder %s29, 0
    %p239 = por %p237, %p238
    %p240 = scmp.ne.s32.totalorder %s228, %s229
    %p241 = scmp.eq.s32.totalorder %s30, 1
    %p242 = por %p240, %p241
    %p244 = scmp.ne.s32.totalorder %s229, %s243
    %p245 = scmp.eq.s32.totalorder %s30, 0
    %p246 = por %p244, %p245
    %s248 = sadd.s32 %s247, 1
    %p251 = scmp.eq.s32.totalorder %s24, 1
    %p252 = scmp.ne.s32.totalorder %s247, %s249
    %p253 = scmp.eq.s32.totalorder %s24, 0
    %p254 = por %p252, %p253
    %p255 = scmp.ne.s32.totalorder %s247, %s249
    %p256 = scmp.eq.s32.totalorder %s29, 1
    %p257 = por %p255, %p256
    %p258 = scmp.ne.s32.totalorder %s249, %s250
    %p259 = scmp.eq.s32.totalorder %s29, 0
    %p260 = por %p258, %p259
    %p261 = scmp.ne.s32.totalorder %s249, %s250
    %p262 = scmp.eq.s32.totalorder %s30, 1
    %p263 = por %p261, %p262
    %p265 = scmp.ne.s32.totalorder %s250, %s264
    %p266 = scmp.eq.s32.totalorder %s30, 0
    %p267 = por %p265, %p266
    %s269 = sadd.s32 %s268, 1
    %p272 = scmp.eq.s32.totalorder %s24, 1
    %p273 = scmp.ne.s32.totalorder %s268, %s270
    %p274 = scmp.eq.s32.totalorder %s24, 0
    %p275 = por %p273, %p274
    %p276 = scmp.ne.s32.totalorder %s268, %s270
    %p277 = scmp.eq.s32.totalorder %s29, 1
    %p278 = por %p276, %p277
    %p279 = scmp.ne.s32.totalorder %s270, %s271
    %p280 = scmp.eq.s32.totalorder %s29, 0
    %p281 = por %p279, %p280
    %p282 = scmp.ne.s32.totalorder %s270, %s271
    %p283 = scmp.eq.s32.totalorder %s30, 1
    %p284 = por %p282, %p283
    %p286 = scmp.ne.s32.totalorder %s271, %s285
    %p287 = scmp.eq.s32.totalorder %s30, 0
    %p288 = por %p286, %p287
    %s290 = sadd.s32 %s289, 1
    %p293 = scmp.eq.s32.totalorder %s24, 1
    %p294 = scmp.ne.s32.totalorder %s289, %s291
    %p295 = scmp.eq.s32.totalorder %s24, 0
    %p296 = por %p294, %p295
    %p297 = scmp.ne.s32.totalorder %s289, %s291
    %p298 = scmp.eq.s32.totalorder %s29, 1
    %p299 = por %p297, %p298
    %p300 = scmp.ne.s32.totalorder %s291, %s292
    %p301 = scmp.eq.s32.totalorder %s29, 0
    %p302 = por %p300, %p301
    %p303 = scmp.ne.s32.totalorder %s291, %s292
    %p304 = scmp.eq.s32.totalorder %s30, 1
    %p305 = por %p303, %p304
    %p307 = scmp.ne.s32.totalorder %s292, %s306
    %p308 = scmp.eq.s32.totalorder %s30, 0
    %p309 = por %p307, %p308
    %s311 = sadd.s32 %s310, 1
    %p314 = scmp.eq.s32.totalorder %s24, 1
    %p315 = scmp.ne.s32.totalorder %s310, %s312
    %p316 = scmp.eq.s32.totalorder %s24, 0
    %p317 = por %p315, %p316
    %p318 = scmp.ne.s32.totalorder %s310, %s312
    %p319 = scmp.eq.s32.totalorder %s29, 1
    %p320 = por %p318, %p319
    %p321 = scmp.ne.s32.totalorder %s312, %s313
    %p322 = scmp.eq.s32.totalorder %s29, 0
    %p323 = por %p321, %p322
    %p324 = scmp.ne.s32.totalorder %s312, %s313
    %p325 = scmp.eq.s32.totalorder %s30, 1
    %p326 = por %p324, %p325
    %p328 = scmp.ne.s32.totalorder %s313, %s327
    %p329 = scmp.eq.s32.totalorder %s30, 0
    %p330 = por %p328, %p329
    %s332 = sadd.s32 %s331, 1
    %p335 = scmp.eq.s32.totalorder %s24, 1
    %p336 = scmp.ne.s32.totalorder %s331, %s333
    %p337 = scmp.eq.s32.totalorder %s24, 0
    %p338 = por %p336, %p337
    %p339 = scmp.ne.s32.totalorder %s331, %s333
    %p340 = scmp.eq.s32.totalorder %s29, 1
    %p341 = por %p339, %p340
    %p342 = scmp.ne.s32.totalorder %s333, %s334
    %p343 = scmp.eq.s32.totalorder %s29, 0
    %p344 = por %p342, %p343
    %p345 = scmp.ne.s32.totalorder %s333, %s334
    %p346 = scmp.eq.s32.totalorder %s30, 1
    %p347 = por %p345, %p346
    %p349 = scmp.ne.s32.totalorder %s334, %s348
    %p350 = scmp.eq.s32.totalorder %s30, 0
    %p351 = por %p349, %p350
    %s353 = sadd.s32 %s352, 1
    %p356 = scmp.eq.s32.totalorder %s24, 1
    %p357 = scmp.ne.s32.totalorder %s352, %s354
    %p358 = scmp.eq.s32.totalorder %s24, 0
    %p359 = por %p357, %p358
    %p360 = scmp.ne.s32.totalorder %s352, %s354
    %p361 = scmp.eq.s32.totalorder %s29, 1
    %p362 = por %p360, %p361
    %p363 = scmp.ne.s32.totalorder %s354, %s355
    %p364 = scmp.eq.s32.totalorder %s29, 0
    %p365 = por %p363, %p364
    %p366 = scmp.ne.s32.totalorder %s354, %s355
    %p367 = scmp.eq.s32.totalorder %s30, 1
    %p368 = por %p366, %p367
    %p370 = scmp.ne.s32.totalorder %s355, %s369
    %p371 = scmp.eq.s32.totalorder %s30, 0
    %p372 = por %p370, %p371
    %s374 = sadd.s32 %s373, 1
    %p377 = scmp.eq.s32.totalorder %s24, 1
    %p378 = scmp.ne.s32.totalorder %s373, %s375
    %p379 = scmp.eq.s32.totalorder %s24, 0
    %p380 = por %p378, %p379
    %p381 = scmp.ne.s32.totalorder %s373, %s375
    %p382 = scmp.eq.s32.totalorder %s29, 1
    %p383 = por %p381, %p382
    %p384 = scmp.ne.s32.totalorder %s375, %s376
    %p385 = scmp.eq.s32.totalorder %s29, 0
    %p386 = por %p384, %p385
    %p387 = scmp.ne.s32.totalorder %s375, %s376
    %p388 = scmp.eq.s32.totalorder %s30, 1
    %p389 = por %p387, %p388
    %p391 = scmp.ne.s32.totalorder %s376, %s390
    %p392 = scmp.eq.s32.totalorder %s30, 0
    %p393 = por %p391, %p392
    %s395 = sadd.s32 %s394, 1
    %p398 = scmp.eq.s32.totalorder %s24, 1
    %p399 = scmp.ne.s32.totalorder %s394, %s396
    %p400 = scmp.eq.s32.totalorder %s24, 0
    %p401 = por %p399, %p400
    %p402 = scmp.ne.s32.totalorder %s394, %s396
    %p403 = scmp.eq.s32.totalorder %s29, 1
    %p404 = por %p402, %p403
    %p405 = scmp.ne.s32.totalorder %s396, %s397
    %p406 = scmp.eq.s32.totalorder %s29, 0
    %p407 = por %p405, %p406
    %p408 = scmp.ne.s32.totalorder %s396, %s397
    %p409 = scmp.eq.s32.totalorder %s30, 1
    %p410 = por %p408, %p409
    %p412 = scmp.ne.s32.totalorder %s397, %s411
    %p413 = scmp.eq.s32.totalorder %s30, 0
    %p414 = por %p412, %p413
    %s415 = ssub.s32 %s24, %s31
    %p416 = scmp.eq.s32.totalorder %s415, 0
    %s418 = sadd.s32 %s417, 1
    %s419 = scalar_select %p416, %s417, %s418
    %p422 = pneg %p416
    %p423 = scmp.eq.s32.totalorder %s24, 1
    %p424 = por %p422, %p423
    %p425 = scmp.ne.s32.totalorder %s417, %s420
    %p426 = scmp.eq.s32.totalorder %s24, 0
    %p427 = por %p425, %p426
    %p428 = scmp.ne.s32.totalorder %s417, %s420
    %p429 = scmp.eq.s32.totalorder %s29, 1
    %p430 = por %p428, %p429
    %p431 = scmp.ne.s32.totalorder %s420, %s421
    %p432 = scmp.eq.s32.totalorder %s29, 0
    %p433 = por %p431, %p432
    %p434 = scmp.ne.s32.totalorder %s420, %s421
    %p435 = scmp.eq.s32.totalorder %s30, 1
    %p436 = por %p434, %p435
    %p438 = scmp.ne.s32.totalorder %s421, %s437
    %p439 = scmp.eq.s32.totalorder %s30, 0
    %p440 = por %p438, %p439
    %p441 = scmp.le.s32.totalorder 1, %s24
    %p442 = scmp.lt.s32.totalorder %s24, 3
    %p443 = pnand %p441, %p442
    %p444 = pneg %p443
    // Predicated region
    $region9: #{pix2pix_forward.1} parent=5 // pred_check
      _
    $region10: #{pix2pix_forward.1} parent=5 // pred_check_branch
      %446 = sbr.rel (%p443) target = $region12
    $region11: #{pix2pix_forward.1} parent=5 // pred_region
      %s447 = ssub.s32 %s24, 1
      // Predicated region
      $region13: #{pix2pix_forward.1} parent=11 // pred_check
        %p448 = pneg %p71
      $region14: #{pix2pix_forward.1} parent=11 // pred_check_branch
        %450 = sbr.rel (%p448) target = $region16
      $region15: #{pix2pix_forward.1} parent=11 // pred_region
        _
      $region16: #{pix2pix_forward.1} parent=11 // pred_fallthru
        _
      // Predicated region
      $region17: #{pix2pix_forward.1} parent=11 // pred_check
        %p451 = pneg %p92
      $region18: #{pix2pix_forward.1} parent=11 // pred_check_branch
        %453 = sbr.rel (%p451) target = $region20
      $region19: #{pix2pix_forward.1} parent=11 // pred_region
        _
      $region20: #{pix2pix_forward.1} parent=11 // pred_fallthru
        _
      // Predicated region
      $region21: #{pix2pix_forward.1} parent=11 // pred_check
        %p454 = pneg %p113
      $region22: #{pix2pix_forward.1} parent=11 // pred_check_branch
        %456 = sbr.rel (%p454) target = $region24
      $region23: #{pix2pix_forward.1} parent=11 // pred_region
        _
      $region24: #{pix2pix_forward.1} parent=11 // pred_fallthru
        _
      // Predicated region
      $region25: #{pix2pix_forward.1} parent=11 // pred_check
        %p457 = pneg %p134
      $region26: #{pix2pix_forward.1} parent=11 // pred_check_branch
        %459 = sbr.rel (%p457) target = $region28
      $region27: #{pix2pix_forward.1} parent=11 // pred_region
        _
      $region28: #{pix2pix_forward.1} parent=11 // pred_fallthru
        _
      // Predicated region
      $region29: #{pix2pix_forward.1} parent=11 // pred_check
        %p460 = pneg %p155
      $region30: #{pix2pix_forward.1} parent=11 // pred_check_branch
        %462 = sbr.rel (%p460) target = $region32
      $region31: #{pix2pix_forward.1} parent=11 // pred_region
        _
      $region32: #{pix2pix_forward.1} parent=11 // pred_fallthru
        _
      // Predicated region
      $region33: #{pix2pix_forward.1} parent=11 // pred_check
        %p463 = pneg %p176
      $region34: #{pix2pix_forward.1} parent=11 // pred_check_branch
        %465 = sbr.rel (%p463) target = $region36
      $region35: #{pix2pix_forward.1} parent=11 // pred_region
        _
      $region36: #{pix2pix_forward.1} parent=11 // pred_fallthru
        _
      // Predicated region
      $region37: #{pix2pix_forward.1} parent=11 // pred_check
        %p466 = pneg %p197
      $region38: #{pix2pix_forward.1} parent=11 // pred_check_branch
        %468 = sbr.rel (%p466) target = $region40
      $region39: #{pix2pix_forward.1} parent=11 // pred_region
        _
      $region40: #{pix2pix_forward.1} parent=11 // pred_fallthru
        _
      // Predicated region
      $region41: #{pix2pix_forward.1} parent=11 // pred_check
        %p469 = pneg %p218
      $region42: #{pix2pix_forward.1} parent=11 // pred_check_branch
        %471 = sbr.rel (%p469) target = $region44
      $region43: #{pix2pix_forward.1} parent=11 // pred_region
        _
      $region44: #{pix2pix_forward.1} parent=11 // pred_fallthru
        _
      // Predicated region
      $region45: #{pix2pix_forward.1} parent=11 // pred_check
        %p472 = pneg %p239
      $region46: #{pix2pix_forward.1} parent=11 // pred_check_branch
        %474 = sbr.rel (%p472) target = $region48
      $region47: #{pix2pix_forward.1} parent=11 // pred_region
        _
      $region48: #{pix2pix_forward.1} parent=11 // pred_fallthru
        _
      // Predicated region
      $region49: #{pix2pix_forward.1} parent=11 // pred_check
        %p475 = pneg %p260
      $region50: #{pix2pix_forward.1} parent=11 // pred_check_branch
        %477 = sbr.rel (%p475) target = $region52
      $region51: #{pix2pix_forward.1} parent=11 // pred_region
        _
      $region52: #{pix2pix_forward.1} parent=11 // pred_fallthru
        _
      // Predicated region
      $region53: #{pix2pix_forward.1} parent=11 // pred_check
        %p478 = pneg %p281
      $region54: #{pix2pix_forward.1} parent=11 // pred_check_branch
        %480 = sbr.rel (%p478) target = $region56
      $region55: #{pix2pix_forward.1} parent=11 // pred_region
        _
      $region56: #{pix2pix_forward.1} parent=11 // pred_fallthru
        _
      // Predicated region
      $region57: #{pix2pix_forward.1} parent=11 // pred_check
        %p481 = pneg %p302
      $region58: #{pix2pix_forward.1} parent=11 // pred_check_branch
        %483 = sbr.rel (%p481) target = $region60
      $region59: #{pix2pix_forward.1} parent=11 // pred_region
        _
      $region60: #{pix2pix_forward.1} parent=11 // pred_fallthru
        _
      // Predicated region
      $region61: #{pix2pix_forward.1} parent=11 // pred_check
        %p484 = pneg %p323
      $region62: #{pix2pix_forward.1} parent=11 // pred_check_branch
        %486 = sbr.rel (%p484) target = $region64
      $region63: #{pix2pix_forward.1} parent=11 // pred_region
        _
      $region64: #{pix2pix_forward.1} parent=11 // pred_fallthru
        _
      // Predicated region
      $region65: #{pix2pix_forward.1} parent=11 // pred_check
        %p487 = pneg %p344
      $region66: #{pix2pix_forward.1} parent=11 // pred_check_branch
        %489 = sbr.rel (%p487) target = $region68
      $region67: #{pix2pix_forward.1} parent=11 // pred_region
        _
      $region68: #{pix2pix_forward.1} parent=11 // pred_fallthru
        _
      // Predicated region
      $region69: #{pix2pix_forward.1} parent=11 // pred_check
        %p490 = pneg %p365
      $region70: #{pix2pix_forward.1} parent=11 // pred_check_branch
        %492 = sbr.rel (%p490) target = $region72
      $region71: #{pix2pix_forward.1} parent=11 // pred_region
        _
      $region72: #{pix2pix_forward.1} parent=11 // pred_fallthru
        _
      // Predicated region
      $region73: #{pix2pix_forward.1} parent=11 // pred_check
        %p493 = pneg %p386
      $region74: #{pix2pix_forward.1} parent=11 // pred_check_branch
        %495 = sbr.rel (%p493) target = $region76
      $region75: #{pix2pix_forward.1} parent=11 // pred_region
        _
      $region76: #{pix2pix_forward.1} parent=11 // pred_fallthru
        _
      // Predicated region
      $region77: #{pix2pix_forward.1} parent=11 // pred_check
        %p496 = pneg %p407
      $region78: #{pix2pix_forward.1} parent=11 // pred_check_branch
        %498 = sbr.rel (%p496) target = $region80
      $region79: #{pix2pix_forward.1} parent=11 // pred_region
        _
      $region80: #{pix2pix_forward.1} parent=11 // pred_fallthru
        _
    $region12: #{pix2pix_forward.1} parent=5 // pred_fallthru
      _
    %p499 = scmp.lt.s32.totalorder %s24, 2
    // Predicated region
    $region81: #{pix2pix_forward.1} parent=5 // pred_check
      %p500 = pneg %p499
    $region82: #{pix2pix_forward.1} parent=5 // pred_check_branch
      %502 = sbr.rel (%p500) target = $region84
    $region83: #{pix2pix_forward.1} parent=5 // pred_region
      // Predicated region
      $region85: #{pix2pix_forward.1} parent=83 // pred_check
        %p503 = pneg %p44
      $region86: #{pix2pix_forward.1} parent=83 // pred_check_branch
        %505 = sbr.rel (%p503) target = $region88
      $region87: #{pix2pix_forward.1} parent=83 // pred_region
        %p506 = scmp.lt.s32.totalorder %s24, 1
        %s507 = scalar_select %p506, %s24, 1
        %s508 = smul.addr %s507, 2
        %s509 = smul.addr %s508, 8
        %s510 = scalar_lea.vmem %s0, %s509
      $region88: #{pix2pix_forward.1} parent=83 // pred_fallthru
        _
    $region84: #{pix2pix_forward.1} parent=5 // pred_fallthru
      _
    %p511 = scmp.le.s32.totalorder 1, %s24
    %p512 = scmp.lt.s32.totalorder %s24, 3
    %p513 = pnand %p511, %p512
    %p514 = pneg %p513
    // Predicated region
    $region89: #{pix2pix_forward.1} parent=5 // pred_check
      _
    $region90: #{pix2pix_forward.1} parent=5 // pred_check_branch
      %516 = sbr.rel (%p513) target = $region92
    $region91: #{pix2pix_forward.1} parent=5 // pred_region
      %s517 = ssub.s32 %s24, 1
      %p518 = scmp.lt.s32.totalorder %s29, 1
      %s519 = scalar_select %p518, %s29, 1
      %s520 = smul.addr %s519, 2
      %s521 = smul.addr %s520, 8
      %s522 = scalar_lea.vmem %s0, %s521
      %p523 = pneg %p50
      %p524 = pneg %p47
      %p525 = pneg %p71
      %p526 = pneg %p68
      %p527 = pneg %p92
      %p528 = pneg %p89
      %p529 = pneg %p113
      %p530 = pneg %p110
      %p531 = pneg %p134
      %p532 = pneg %p131
      %p533 = pneg %p155
      %p534 = pneg %p152
      %p535 = pneg %p176
      %p536 = pneg %p173
      %p537 = pneg %p197
      %p538 = pneg %p194
      %p539 = pneg %p218
      %p540 = pneg %p215
      %p541 = pneg %p239
      %p542 = pneg %p236
      %p543 = pneg %p260
      %p544 = pneg %p257
      %p545 = pneg %p281
      %p546 = pneg %p278
      %p547 = pneg %p302
      %p548 = pneg %p299
      %p549 = pneg %p323
      %p550 = pneg %p320
      %p551 = pneg %p344
      %p552 = pneg %p341
      %p553 = pneg %p365
      %p554 = pneg %p362
      %p555 = pneg %p386
      %p556 = pneg %p383
      %p557 = pneg %p407
      %p558 = pneg %p404
      %p559 = pneg %p433
      %p560 = pneg %p430
      %p561 = scmp.lt.s32.totalorder %s29, 1
      %s562 = scalar_select %p561, %s29, 1
      %s563 = smul.addr %s562, 2
      %s564 = smul.addr %s563, 8
      %s565 = scalar_lea.vmem %s18, %s564
      %p566 = scmp.lt.s32.totalorder %s29, 1
      %s567 = scalar_select %p566, %s29, 1
      %s568 = smul.addr %s567, 2
      %s569 = smul.addr %s568, 8
      %s570 = scalar_lea.vmem %s0, %s569
      %p571 = scmp.lt.s32.totalorder %s29, 1
      %s572 = scalar_select %p571, %s29, 1
      %s573 = smul.addr %s572, 2
      %s574 = smul.addr %s573, 8
      %s575 = scalar_lea.vmem %s18, %s574
      %v576 = vld [vmem:[%s570] sm:$0xff]
      %v577 = vld [vmem:[%s570 + $0x8] sm:$0xff]
      %v578 = vld [vmem:[%s1] sm:$0xff]
      %vm579 = vcmask 130048
      %v581 = vsel %vm579, %v578, 0
      %583 = vmatprep.subr.mxu0 0.0
      %584 = vmatpush1.msra.mxu0 0.0
      %585 = vmatprep.subr.mxu0 0.0
      %586 = vmatpush1.msra.mxu0 0.0
      %587 = vmatprep.subr.mxu0 0.0
      %588 = vmatpush1.msra.mxu0 0.0
      %589 = vmatprep.subr.mxu0 0.0
      %590 = vmatpush1.msra.mxu0 0.0
      %591 = vmatprep.subr.mxu0 0.0
      %592 = vmatpush1.msra.mxu0 0.0
      %593 = vmatprep.subr.mxu0 0.0
      %594 = vmatpush1.msra.mxu0 0.0
      %595 = vmatprep.subr.mxu0 0.0
      %596 = vmatpush1.msra.mxu0 0.0
      %597 = vmatprep.subr.mxu0 0.0
      %598 = vmatpush1.msra.mxu0 0.0
      %599 = vmatprep.subr.mxu0 0.0
      %600 = vmatpush1.msra.mxu0 0.0
      %601 = vmatprep.subr.mxu0 0.0
      %602 = vmatpush1.msra.mxu0 0.0
      %603 = vmatprep.subr.mxu0 0.0
      %604 = vmatpush1.msra.mxu0 0.0
      %605 = vmatprep.subr.mxu0 0.0
      %606 = vmatpush1.msra.mxu0 0.0
      %607 = vmatprep.subr.mxu0 0.0
      %608 = vmatpush1.msra.mxu0 0.0
      %609 = vmatprep.subr.mxu0 0.0
      %610 = vmatpush1.msra.mxu0 0.0
      %611 = vmatprep.subr.mxu0 0.0
      %612 = vmatpush1.msra.mxu0 %v577
      %613 = vmatprep.subr.mxu0 0.0
      %614 = vmatpush1.msra.mxu0 %v576
      %615 = vmatprep.subr.mxu0 0.0
      %616 = vmatpush2.msra.mxu0 0.0
      %617 = vmatprep.subr.mxu0 0.0
      %618 = vmatpush2.msra.mxu0 0.0
      %619 = vmatprep.subr.mxu0 0.0
      %620 = vmatpush2.msra.mxu0 0.0
      %621 = vmatprep.subr.mxu0 0.0
      %622 = vmatpush2.msra.mxu0 0.0
      %623 = vmatprep.subr.mxu0 0.0
      %624 = vmatpush2.msra.mxu0 0.0
      %625 = vmatprep.subr.mxu0 0.0
      %626 = vmatpush2.msra.mxu0 0.0
      %627 = vmatprep.subr.mxu0 0.0
      %628 = vmatpush2.msra.mxu0 0.0
      %629 = vmatprep.subr.mxu0 0.0
      %630 = vmatpush2.msra.mxu0 0.0
      %631 = vmatprep.subr.mxu0 0.0
      %632 = vmatpush2.msra.mxu0 0.0
      %633 = vmatprep.subr.mxu0 0.0
      %634 = vmatpush2.msra.mxu0 0.0
      %635 = vmatprep.subr.mxu0 0.0
      %636 = vmatpush2.msra.mxu0 0.0
      %637 = vmatprep.subr.mxu0 0.0
      %638 = vmatpush2.msra.mxu0 0.0
      %639 = vmatprep.subr.mxu0 0.0
      %640 = vmatpush2.msra.mxu0 0.0
      %641 = vmatprep.subr.mxu0 0.0
      %642 = vmatpush2.msra.mxu0 0.0
      %643 = vmatprep.subr.mxu0 0.0
      %644 = vmatpush2.msra.mxu0 0.0
      %645 = vmatprep.subr.mxu0 0.0
      %646 = vmatpush2.msra.mxu0 0.0
      %647 = vmatprep.mubr.f32.mxu0 0.0
      %648 = vmatmul.mubr.f32.gmra.mxu0 %v581
      %v649 = vpop.f32.mrf.mxu0
      %v650 = vadd.f32 0.0, %v649
      %v651 = vpop.f32.mrf.mxu0
      %652 = vdwg.mxu0
      %v653 = vld [vmem:[%s2] sm:$0xff]
      %v654 = vld [vmem:[%s2 + $0x8] sm:$0xff]
      %v655 = vld [vmem:[%s2 + $0x10] sm:$0xff]
      %v656 = vld [vmem:[%s2 + $0x18] sm:$0xff]
      %v657 = vld [vmem:[%s2 + $0x20] sm:$0xff]
      %v658 = vld [vmem:[%s2 + $0x28] sm:$0xff]
      %v659 = vld [vmem:[%s2 + $0x30] sm:$0xff]
      %v660 = vld [vmem:[%s2 + $0x38] sm:$0xff]
      %s661 = scalar_lea.vmem %s1, 8
      %v662 = vld [vmem:[%s661] sm:$0xff]
      %v664 = vsel %vm579, %v662, 0
      %666 = vmatprep.subr.mxu0 0.0
      %667 = vmatpush1.msra.mxu0 0.0
      %668 = vmatprep.subr.mxu0 0.0
      %669 = vmatpush1.msra.mxu0 0.0
      %670 = vmatprep.subr.mxu0 0.0
      %671 = vmatpush1.msra.mxu0 0.0
      %672 = vmatprep.subr.mxu0 0.0
      %673 = vmatpush1.msra.mxu0 0.0
      %674 = vmatprep.subr.mxu0 0.0
      %675 = vmatpush1.msra.mxu0 0.0
      %676 = vmatprep.subr.mxu0 0.0
      %677 = vmatpush1.msra.mxu0 0.0
      %678 = vmatprep.subr.mxu0 0.0
      %679 = vmatpush1.msra.mxu0 0.0
      %680 = vmatprep.subr.mxu0 0.0
      %681 = vmatpush1.msra.mxu0 0.0
      %682 = vmatprep.subr.mxu0 0.0
      %683 = vmatpush1.msra.mxu0 0.0
      %684 = vmatprep.subr.mxu0 0.0
      %685 = vmatpush1.msra.mxu0 0.0
      %686 = vmatprep.subr.mxu0 0.0
      %687 = vmatpush1.msra.mxu0 0.0
      %688 = vmatprep.subr.mxu0 0.0
      %689 = vmatpush1.msra.mxu0 0.0
      %690 = vmatprep.subr.mxu0 0.0
      %691 = vmatpush1.msra.mxu0 0.0
      %692 = vmatprep.subr.mxu0 0.0
      %693 = vmatpush1.msra.mxu0 0.0
      %694 = vmatprep.subr.mxu0 0.0
      %695 = vmatpush1.msra.mxu0 %v577
      %696 = vmatprep.subr.mxu0 0.0
      %697 = vmatpush1.msra.mxu0 %v576
      %698 = vmatprep.subr.mxu0 0.0
      %699 = vmatpush2.msra.mxu0 0.0
      %700 = vmatprep.subr.mxu0 0.0
      %701 = vmatpush2.msra.mxu0 0.0
      %702 = vmatprep.subr.mxu0 0.0
      %703 = vmatpush2.msra.mxu0 0.0
      %704 = vmatprep.subr.mxu0 0.0
      %705 = vmatpush2.msra.mxu0 0.0
      %706 = vmatprep.subr.mxu0 0.0
      %707 = vmatpush2.msra.mxu0 0.0
      %708 = vmatprep.subr.mxu0 0.0
      %709 = vmatpush2.msra.mxu0 0.0
      %710 = vmatprep.subr.mxu0 0.0
      %711 = vmatpush2.msra.mxu0 0.0
      %712 = vmatprep.subr.mxu0 0.0
      %713 = vmatpush2.msra.mxu0 0.0
      %714 = vmatprep.subr.mxu0 0.0
      %715 = vmatpush2.msra.mxu0 0.0
      %716 = vmatprep.subr.mxu0 0.0
      %717 = vmatpush2.msra.mxu0 0.0
      %718 = vmatprep.subr.mxu0 0.0
      %719 = vmatpush2.msra.mxu0 0.0
      %720 = vmatprep.subr.mxu0 0.0
      %721 = vmatpush2.msra.mxu0 0.0
      %722 = vmatprep.subr.mxu0 0.0
      %723 = vmatpush2.msra.mxu0 0.0
      %724 = vmatprep.subr.mxu0 0.0
      %725 = vmatpush2.msra.mxu0 0.0
      %726 = vmatprep.subr.mxu0 0.0
      %727 = vmatpush2.msra.mxu0 0.0
      %728 = vmatprep.subr.mxu0 0.0
      %729 = vmatpush2.msra.mxu0 0.0
      %730 = vmatprep.mubr.f32.mxu0 0.0
      %731 = vmatmul.mubr.f32.gmra.mxu0 %v664
      %v732 = vpop.f32.mrf.mxu0
      %v733 = vadd.f32 0.0, %v732
      %v734 = vpop.f32.mrf.mxu0
      %735 = vdwg.mxu0
      %s736 = scalar_lea.vmem %s2, 64
      %v737 = vld [vmem:[%s736] sm:$0xff]
      %v738 = vld [vmem:[%s736 + $0x8] sm:$0xff]
      %v739 = vld [vmem:[%s736 + $0x10] sm:$0xff]
      %v740 = vld [vmem:[%s736 + $0x18] sm:$0xff]
      %v741 = vld [vmem:[%s736 + $0x20] sm:$0xff]
      %v742 = vld [vmem:[%s736 + $0x28] sm:$0xff]
      %v743 = vld [vmem:[%s736 + $0x30] sm:$0xff]
      %v744 = vld [vmem:[%s736 + $0x38] sm:$0xff]
      %vm745 = vcmask 523264
      %v747 = vsel %vm745, %v733, 0
      %749 = vmatprep.subr.mxu0 0.0
      %750 = vmatpush1.msra.mxu0 0.0
      %751 = vmatprep.subr.mxu0 0.0
      %752 = vmatpush1.msra.mxu0 0.0
      %753 = vmatprep.subr.mxu0 0.0
      %754 = vmatpush1.msra.mxu0 0.0
      %755 = vmatprep.subr.mxu0 0.0
      %756 = vmatpush1.msra.mxu0 0.0
      %757 = vmatprep.subr.mxu0 0.0
      %758 = vmatpush1.msra.mxu0 0.0
      %759 = vmatprep.subr.mxu0 0.0
      %760 = vmatpush1.msra.mxu0 0.0
      %761 = vmatprep.subr.mxu0 0.0
      %762 = vmatpush1.msra.mxu0 0.0
      %763 = vmatprep.subr.mxu0 0.0
      %764 = vmatpush1.msra.mxu0 0.0
      %765 = vmatprep.subr.mxu0 0.0
      %766 = vmatpush1.msra.mxu0 %v744
      %767 = vmatprep.subr.mxu0 0.0
      %768 = vmatpush1.msra.mxu0 %v743
      %769 = vmatprep.subr.mxu0 0.0
      %770 = vmatpush1.msra.mxu0 %v742
      %771 = vmatprep.subr.mxu0 0.0
      %772 = vmatpush1.msra.mxu0 %v741
      %773 = vmatprep.subr.mxu0 0.0
      %774 = vmatpush1.msra.mxu0 %v740
      %775 = vmatprep.subr.mxu0 0.0
      %776 = vmatpush1.msra.mxu0 %v739
      %777 = vmatprep.subr.mxu0 0.0
      %778 = vmatpush1.msra.mxu0 %v738
      %779 = vmatprep.subr.mxu0 0.0
      %780 = vmatpush1.msra.mxu0 %v737
      %781 = vmatprep.subr.mxu0 0.0
      %782 = vmatpush2.msra.mxu0 0.0
      %783 = vmatprep.subr.mxu0 0.0
      %784 = vmatpush2.msra.mxu0 0.0
      %785 = vmatprep.subr.mxu0 0.0
      %786 = vmatpush2.msra.mxu0 0.0
      %787 = vmatprep.subr.mxu0 0.0
      %788 = vmatpush2.msra.mxu0 0.0
      %789 = vmatprep.subr.mxu0 0.0
      %790 = vmatpush2.msra.mxu0 0.0
      %791 = vmatprep.subr.mxu0 0.0
      %792 = vmatpush2.msra.mxu0 0.0
      %793 = vmatprep.subr.mxu0 0.0
      %794 = vmatpush2.msra.mxu0 0.0
      %795 = vmatprep.subr.mxu0 0.0
      %796 = vmatpush2.msra.mxu0 0.0
      %797 = vmatprep.subr.mxu0 0.0
      %798 = vmatpush2.msra.mxu0 0.0
      %799 = vmatprep.subr.mxu0 0.0
      %800 = vmatpush2.msra.mxu0 0.0
      %801 = vmatprep.subr.mxu0 0.0
      %802 = vmatpush2.msra.mxu0 0.0
      %803 = vmatprep.subr.mxu0 0.0
      %804 = vmatpush2.msra.mxu0 0.0
      %805 = vmatprep.subr.mxu0 0.0
      %806 = vmatpush2.msra.mxu0 0.0
      %807 = vmatprep.subr.mxu0 0.0
      %808 = vmatpush2.msra.mxu0 0.0
      %809 = vmatprep.subr.mxu0 0.0
      %810 = vmatpush2.msra.mxu0 0.0
      %811 = vmatprep.subr.mxu0 0.0
      %812 = vmatpush2.msra.mxu0 0.0
      %813 = vmatprep.mubr.f32.mxu0 0.0
      %814 = vmatmul.mubr.f32.gmra.mxu0 %v747
      %v815 = vpop.f32.mrf.mxu0
      %v816 = vadd.f32 0.0, %v815
      %v817 = vpop.f32.mrf.mxu0
      %818 = vdwg.mxu0
      %v820 = vsel %vm745, %v650, 0
      %822 = vmatprep.subr.mxu0 0.0
      %823 = vmatpush1.msra.mxu0 0.0
      %824 = vmatprep.subr.mxu0 0.0
      %825 = vmatpush1.msra.mxu0 0.0
      %826 = vmatprep.subr.mxu0 0.0
      %827 = vmatpush1.msra.mxu0 0.0
      %828 = vmatprep.subr.mxu0 0.0
      %829 = vmatpush1.msra.mxu0 0.0
      %830 = vmatprep.subr.mxu0 0.0
      %831 = vmatpush1.msra.mxu0 0.0
      %832 = vmatprep.subr.mxu0 0.0
      %833 = vmatpush1.msra.mxu0 0.0
      %834 = vmatprep.subr.mxu0 0.0
      %835 = vmatpush1.msra.mxu0 0.0
      %836 = vmatprep.subr.mxu0 0.0
      %837 = vmatpush1.msra.mxu0 0.0
      %838 = vmatprep.subr.mxu0 0.0
      %839 = vmatpush1.msra.mxu0 %v660
      %840 = vmatprep.subr.mxu0 0.0
      %841 = vmatpush1.msra.mxu0 %v659
      %842 = vmatprep.subr.mxu0 0.0
      %843 = vmatpush1.msra.mxu0 %v658
      %844 = vmatprep.subr.mxu0 0.0
      %845 = vmatpush1.msra.mxu0 %v657
      %846 = vmatprep.subr.mxu0 0.0
      %847 = vmatpush1.msra.mxu0 %v656
      %848 = vmatprep.subr.mxu0 0.0
      %849 = vmatpush1.msra.mxu0 %v655
      %850 = vmatprep.subr.mxu0 0.0
      %851 = vmatpush1.msra.mxu0 %v654
      %852 = vmatprep.subr.mxu0 0.0
      %853 = vmatpush1.msra.mxu0 %v653
      %854 = vmatprep.subr.mxu0 0.0
      %855 = vmatpush2.msra.mxu0 0.0
      %856 = vmatprep.subr.mxu0 0.0
      %857 = vmatpush2.msra.mxu0 0.0
      %858 = vmatprep.subr.mxu0 0.0
      %859 = vmatpush2.msra.mxu0 0.0
      %860 = vmatprep.subr.mxu0 0.0
      %861 = vmatpush2.msra.mxu0 0.0
      %862 = vmatprep.subr.mxu0 0.0
      %863 = vmatpush2.msra.mxu0 0.0
      %864 = vmatprep.subr.mxu0 0.0
      %865 = vmatpush2.msra.mxu0 0.0
      %866 = vmatprep.subr.mxu0 0.0
      %867 = vmatpush2.msra.mxu0 0.0
      %868 = vmatprep.subr.mxu0 0.0
      %869 = vmatpush2.msra.mxu0 0.0
      %870 = vmatprep.subr.mxu0 0.0
      %871 = vmatpush2.msra.mxu0 0.0
      %872 = vmatprep.subr.mxu0 0.0
      %873 = vmatpush2.msra.mxu0 0.0
      %874 = vmatprep.subr.mxu0 0.0
      %875 = vmatpush2.msra.mxu0 0.0
      %876 = vmatprep.subr.mxu0 0.0
      %877 = vmatpush2.msra.mxu0 0.0
      %878 = vmatprep.subr.mxu0 0.0
      %879 = vmatpush2.msra.mxu0 0.0
      %880 = vmatprep.subr.mxu0 0.0
      %881 = vmatpush2.msra.mxu0 0.0
      %882 = vmatprep.subr.mxu0 0.0
      %883 = vmatpush2.msra.mxu0 0.0
      %884 = vmatprep.subr.mxu0 0.0
      %885 = vmatpush2.msra.mxu0 0.0
      %886 = vmatprep.mubr.f32.mxu0 0.0
      %887 = vmatmul.mubr.f32.gmra.mxu0 %v820
      %v888 = vpop.f32.mrf.mxu0
      %v889 = vadd.f32 %v816, %v888
      %v890 = vpop.f32.mrf.mxu0
      %891 = vdwg.mxu0
      %s892 = scalar_lea.vmem %s1, 16
      %v893 = vld [vmem:[%s892] sm:$0xff]
      %v895 = vsel %vm579, %v893, 0
      %897 = vmatprep.subr.mxu0 0.0
      %898 = vmatpush1.msra.mxu0 0.0
      %899 = vmatprep.subr.mxu0 0.0
      %900 = vmatpush1.msra.mxu0 0.0
      %901 = vmatprep.subr.mxu0 0.0
      %902 = vmatpush1.msra.mxu0 0.0
      %903 = vmatprep.subr.mxu0 0.0
      %904 = vmatpush1.msra.mxu0 0.0
      %905 = vmatprep.subr.mxu0 0.0
      %906 = vmatpush1.msra.mxu0 0.0
      %907 = vmatprep.subr.mxu0 0.0
      %908 = vmatpush1.msra.mxu0 0.0
      %909 = vmatprep.subr.mxu0 0.0
      %910 = vmatpush1.msra.mxu0 0.0
      %911 = vmatprep.subr.mxu0 0.0
      %912 = vmatpush1.msra.mxu0 0.0
      %913 = vmatprep.subr.mxu0 0.0
      %914 = vmatpush1.msra.mxu0 0.0
      %915 = vmatprep.subr.mxu0 0.0
      %916 = vmatpush1.msra.mxu0 0.0
      %917 = vmatprep.subr.mxu0 0.0
      %918 = vmatpush1.msra.mxu0 0.0
      %919 = vmatprep.subr.mxu0 0.0
      %920 = vmatpush1.msra.mxu0 0.0
      %921 = vmatprep.subr.mxu0 0.0
      %922 = vmatpush1.msra.mxu0 0.0
      %923 = vmatprep.subr.mxu0 0.0
      %924 = vmatpush1.msra.mxu0 0.0
      %925 = vmatprep.subr.mxu0 0.0
      %926 = vmatpush1.msra.mxu0 %v577
      %927 = vmatprep.subr.mxu0 0.0
      %928 = vmatpush1.msra.mxu0 %v576
      %929 = vmatprep.subr.mxu0 0.0
      %930 = vmatpush2.msra.mxu0 0.0
      %931 = vmatprep.subr.mxu0 0.0
      %932 = vmatpush2.msra.mxu0 0.0
      %933 = vmatprep.subr.mxu0 0.0
      %934 = vmatpush2.msra.mxu0 0.0
      %935 = vmatprep.subr.mxu0 0.0
      %936 = vmatpush2.msra.mxu0 0.0
      %937 = vmatprep.subr.mxu0 0.0
      %938 = vmatpush2.msra.mxu0 0.0
      %939 = vmatprep.subr.mxu0 0.0
      %940 = vmatpush2.msra.mxu0 0.0
      %941 = vmatprep.subr.mxu0 0.0
      %942 = vmatpush2.msra.mxu0 0.0
      %943 = vmatprep.subr.mxu0 0.0
      %944 = vmatpush2.msra.mxu0 0.0
      %945 = vmatprep.subr.mxu0 0.0
      %946 = vmatpush2.msra.mxu0 0.0
      %947 = vmatprep.subr.mxu0 0.0
      %948 = vmatpush2.msra.mxu0 0.0
      %949 = vmatprep.subr.mxu0 0.0
      %950 = vmatpush2.msra.mxu0 0.0
      %951 = vmatprep.subr.mxu0 0.0
      %952 = vmatpush2.msra.mxu0 0.0
      %953 = vmatprep.subr.mxu0 0.0
      %954 = vmatpush2.msra.mxu0 0.0
      %955 = vmatprep.subr.mxu0 0.0
      %956 = vmatpush2.msra.mxu0 0.0
      %957 = vmatprep.subr.mxu0 0.0
      %958 = vmatpush2.msra.mxu0 0.0
      %959 = vmatprep.subr.mxu0 0.0
      %960 = vmatpush2.msra.mxu0 0.0
      %961 = vmatprep.mubr.f32.mxu0 0.0
      %962 = vmatmul.mubr.f32.gmra.mxu0 %v895
      %v963 = vpop.f32.mrf.mxu0
      %v964 = vadd.f32 0.0, %v963
      %v965 = vpop.f32.mrf.mxu0
      %966 = vdwg.mxu0
      %s967 = scalar_lea.vmem %s2, 128
      %v968 = vld [vmem:[%s967] sm:$0xff]
      %v969 = vld [vmem:[%s967 + $0x8] sm:$0xff]
      %v970 = vld [vmem:[%s967 + $0x10] sm:$0xff]
      %v971 = vld [vmem:[%s967 + $0x18] sm:$0xff]
      %v972 = vld [vmem:[%s967 + $0x20] sm:$0xff]
      %v973 = vld [vmem:[%s967 + $0x28] sm:$0xff]
      %v974 = vld [vmem:[%s967 + $0x30] sm:$0xff]
      %v975 = vld [vmem:[%s967 + $0x38] sm:$0xff]
      %v977 = vsel %vm745, %v964, 0
      %979 = vmatprep.subr.mxu0 0.0
      %980 = vmatpush1.msra.mxu0 0.0
      %981 = vmatprep.subr.mxu0 0.0
      %982 = vmatpush1.msra.mxu0 0.0
      %983 = vmatprep.subr.mxu0 0.0
      %984 = vmatpush1.msra.mxu0 0.0
      %985 = vmatprep.subr.mxu0 0.0
      %986 = vmatpush1.msra.mxu0 0.0
      %987 = vmatprep.subr.mxu0 0.0
      %988 = vmatpush1.msra.mxu0 0.0
      %989 = vmatprep.subr.mxu0 0.0
      %990 = vmatpush1.msra.mxu0 0.0
      %991 = vmatprep.subr.mxu0 0.0
      %992 = vmatpush1.msra.mxu0 0.0
      %993 = vmatprep.subr.mxu0 0.0
      %994 = vmatpush1.msra.mxu0 0.0
      %995 = vmatprep.subr.mxu0 0.0
      %996 = vmatpush1.msra.mxu0 %v975
      %997 = vmatprep.subr.mxu0 0.0
      %998 = vmatpush1.msra.mxu0 %v974
      %999 = vmatprep.subr.mxu0 0.0
      %1000 = vmatpush1.msra.mxu0 %v973
      %1001 = vmatprep.subr.mxu0 0.0
      %1002 = vmatpush1.msra.mxu0 %v972
      %1003 = vmatprep.subr.mxu0 0.0
      %1004 = vmatpush1.msra.mxu0 %v971
      %1005 = vmatprep.subr.mxu0 0.0
      %1006 = vmatpush1.msra.mxu0 %v970
      %1007 = vmatprep.subr.mxu0 0.0
      %1008 = vmatpush1.msra.mxu0 %v969
      %1009 = vmatprep.subr.mxu0 0.0
      %1010 = vmatpush1.msra.mxu0 %v968
      %1011 = vmatprep.subr.mxu0 0.0
      %1012 = vmatpush2.msra.mxu0 0.0
      %1013 = vmatprep.subr.mxu0 0.0
      %1014 = vmatpush2.msra.mxu0 0.0
      %1015 = vmatprep.subr.mxu0 0.0
      %1016 = vmatpush2.msra.mxu0 0.0
      %1017 = vmatprep.subr.mxu0 0.0
      %1018 = vmatpush2.msra.mxu0 0.0
      %1019 = vmatprep.subr.mxu0 0.0
      %1020 = vmatpush2.msra.mxu0 0.0
      %1021 = vmatprep.subr.mxu0 0.0
      %1022 = vmatpush2.msra.mxu0 0.0
      %1023 = vmatprep.subr.mxu0 0.0
      %1024 = vmatpush2.msra.mxu0 0.0
      %1025 = vmatprep.subr.mxu0 0.0
      %1026 = vmatpush2.msra.mxu0 0.0
      %1027 = vmatprep.subr.mxu0 0.0
      %1028 = vmatpush2.msra.mxu0 0.0
      %1029 = vmatprep.subr.mxu0 0.0
      %1030 = vmatpush2.msra.mxu0 0.0
      %1031 = vmatprep.subr.mxu0 0.0
      %1032 = vmatpush2.msra.mxu0 0.0
      %1033 = vmatprep.subr.mxu0 0.0
      %1034 = vmatpush2.msra.mxu0 0.0
      %1035 = vmatprep.subr.mxu0 0.0
      %1036 = vmatpush2.msra.mxu0 0.0
      %1037 = vmatprep.subr.mxu0 0.0
      %1038 = vmatpush2.msra.mxu0 0.0
      %1039 = vmatprep.subr.mxu0 0.0
      %1040 = vmatpush2.msra.mxu0 0.0
      %1041 = vmatprep.subr.mxu0 0.0
      %1042 = vmatpush2.msra.mxu0 0.0
      %1043 = vmatprep.mubr.f32.mxu0 0.0
      %1044 = vmatmul.mubr.f32.gmra.mxu0 %v977
      %v1045 = vpop.f32.mrf.mxu0
      %v1046 = vadd.f32 0.0, %v1045
      %v1047 = vpop.f32.mrf.mxu0
      %1048 = vdwg.mxu0
      %v1049 = vadd.f32 %v889, %v1046
      %s1050 = scalar_lea.vmem %s1, 24
      %v1051 = vld [vmem:[%s1050] sm:$0xff]
      %v1053 = vsel %vm579, %v1051, 0
      %1055 = vmatprep.subr.mxu0 0.0
      %1056 = vmatpush1.msra.mxu0 0.0
      %1057 = vmatprep.subr.mxu0 0.0
      %1058 = vmatpush1.msra.mxu0 0.0
      %1059 = vmatprep.subr.mxu0 0.0
      %1060 = vmatpush1.msra.mxu0 0.0
      %1061 = vmatprep.subr.mxu0 0.0
      %1062 = vmatpush1.msra.mxu0 0.0
      %1063 = vmatprep.subr.mxu0 0.0
      %1064 = vmatpush1.msra.mxu0 0.0
      %1065 = vmatprep.subr.mxu0 0.0
      %1066 = vmatpush1.msra.mxu0 0.0
      %1067 = vmatprep.subr.mxu0 0.0
      %1068 = vmatpush1.msra.mxu0 0.0
      %1069 = vmatprep.subr.mxu0 0.0
      %1070 = vmatpush1.msra.mxu0 0.0
      %1071 = vmatprep.subr.mxu0 0.0
      %1072 = vmatpush1.msra.mxu0 0.0
      %1073 = vmatprep.subr.mxu0 0.0
      %1074 = vmatpush1.msra.mxu0 0.0
      %1075 = vmatprep.subr.mxu0 0.0
      %1076 = vmatpush1.msra.mxu0 0.0
      %1077 = vmatprep.subr.mxu0 0.0
      %1078 = vmatpush1.msra.mxu0 0.0
      %1079 = vmatprep.subr.mxu0 0.0
      %1080 = vmatpush1.msra.mxu0 0.0
      %1081 = vmatprep.subr.mxu0 0.0
      %1082 = vmatpush1.msra.mxu0 0.0
      %1083 = vmatprep.subr.mxu0 0.0
      %1084 = vmatpush1.msra.mxu0 %v577
      %1085 = vmatprep.subr.mxu0 0.0
      %1086 = vmatpush1.msra.mxu0 %v576
      %1087 = vmatprep.subr.mxu0 0.0
      %1088 = vmatpush2.msra.mxu0 0.0
      %1089 = vmatprep.subr.mxu0 0.0
      %1090 = vmatpush2.msra.mxu0 0.0
      %1091 = vmatprep.subr.mxu0 0.0
      %1092 = vmatpush2.msra.mxu0 0.0
      %1093 = vmatprep.subr.mxu0 0.0
      %1094 = vmatpush2.msra.mxu0 0.0
      %1095 = vmatprep.subr.mxu0 0.0
      %1096 = vmatpush2.msra.mxu0 0.0
      %1097 = vmatprep.subr.mxu0 0.0
      %1098 = vmatpush2.msra.mxu0 0.0
      %1099 = vmatprep.subr.mxu0 0.0
      %1100 = vmatpush2.msra.mxu0 0.0
      %1101 = vmatprep.subr.mxu0 0.0
      %1102 = vmatpush2.msra.mxu0 0.0
      %1103 = vmatprep.subr.mxu0 0.0
      %1104 = vmatpush2.msra.mxu0 0.0
      %1105 = vmatprep.subr.mxu0 0.0
      %1106 = vmatpush2.msra.mxu0 0.0
      %1107 = vmatprep.subr.mxu0 0.0
      %1108 = vmatpush2.msra.mxu0 0.0
      %1109 = vmatprep.subr.mxu0 0.0
      %1110 = vmatpush2.msra.mxu0 0.0
      %1111 = vmatprep.subr.mxu0 0.0
      %1112 = vmatpush2.msra.mxu0 0.0
      %1113 = vmatprep.subr.mxu0 0.0
      %1114 = vmatpush2.msra.mxu0 0.0
      %1115 = vmatprep.subr.mxu0 0.0
      %1116 = vmatpush2.msra.mxu0 0.0
      %1117 = vmatprep.subr.mxu0 0.0
      %1118 = vmatpush2.msra.mxu0 0.0
      %1119 = vmatprep.mubr.f32.mxu0 0.0
      %1120 = vmatmul.mubr.f32.gmra.mxu0 %v1053
      %v1121 = vpop.f32.mrf.mxu0
      %v1122 = vadd.f32 0.0, %v1121
      %v1123 = vpop.f32.mrf.mxu0
      %1124 = vdwg.mxu0
      %s1125 = scalar_lea.vmem %s2, 192
      %v1126 = vld [vmem:[%s1125] sm:$0xff]
      %v1127 = vld [vmem:[%s1125 + $0x8] sm:$0xff]
      %v1128 = vld [vmem:[%s1125 + $0x10] sm:$0xff]
      %v1129 = vld [vmem:[%s1125 + $0x18] sm:$0xff]
      %v1130 = vld [vmem:[%s1125 + $0x20] sm:$0xff]
      %v1131 = vld [vmem:[%s1125 + $0x28] sm:$0xff]
      %v1132 = vld [vmem:[%s1125 + $0x30] sm:$0xff]
      %v1133 = vld [vmem:[%s1125 + $0x38] sm:$0xff]
      %v1135 = vsel %vm745, %v1122, 0
      %1137 = vmatprep.subr.mxu0 0.0
      %1138 = vmatpush1.msra.mxu0 0.0
      %1139 = vmatprep.subr.mxu0 0.0
      %1140 = vmatpush1.msra.mxu0 0.0
      %1141 = vmatprep.subr.mxu0 0.0
      %1142 = vmatpush1.msra.mxu0 0.0
      %1143 = vmatprep.subr.mxu0 0.0
      %1144 = vmatpush1.msra.mxu0 0.0
      %1145 = vmatprep.subr.mxu0 0.0
      %1146 = vmatpush1.msra.mxu0 0.0
      %1147 = vmatprep.subr.mxu0 0.0
      %1148 = vmatpush1.msra.mxu0 0.0
      %1149 = vmatprep.subr.mxu0 0.0
      %1150 = vmatpush1.msra.mxu0 0.0
      %1151 = vmatprep.subr.mxu0 0.0
      %1152 = vmatpush1.msra.mxu0 0.0
      %1153 = vmatprep.subr.mxu0 0.0
      %1154 = vmatpush1.msra.mxu0 %v1133
      %1155 = vmatprep.subr.mxu0 0.0
      %1156 = vmatpush1.msra.mxu0 %v1132
      %1157 = vmatprep.subr.mxu0 0.0
      %1158 = vmatpush1.msra.mxu0 %v1131
      %1159 = vmatprep.subr.mxu0 0.0
      %1160 = vmatpush1.msra.mxu0 %v1130
      %1161 = vmatprep.subr.mxu0 0.0
      %1162 = vmatpush1.msra.mxu0 %v1129
      %1163 = vmatprep.subr.mxu0 0.0
      %1164 = vmatpush1.msra.mxu0 %v1128
      %1165 = vmatprep.subr.mxu0 0.0
      %1166 = vmatpush1.msra.mxu0 %v1127
      %1167 = vmatprep.subr.mxu0 0.0
      %1168 = vmatpush1.msra.mxu0 %v1126
      %1169 = vmatprep.subr.mxu0 0.0
      %1170 = vmatpush2.msra.mxu0 0.0
      %1171 = vmatprep.subr.mxu0 0.0
      %1172 = vmatpush2.msra.mxu0 0.0
      %1173 = vmatprep.subr.mxu0 0.0
      %1174 = vmatpush2.msra.mxu0 0.0
      %1175 = vmatprep.subr.mxu0 0.0
      %1176 = vmatpush2.msra.mxu0 0.0
      %1177 = vmatprep.subr.mxu0 0.0
      %1178 = vmatpush2.msra.mxu0 0.0
      %1179 = vmatprep.subr.mxu0 0.0
      %1180 = vmatpush2.msra.mxu0 0.0
      %1181 = vmatprep.subr.mxu0 0.0
      %1182 = vmatpush2.msra.mxu0 0.0
      %1183 = vmatprep.subr.mxu0 0.0
      %1184 = vmatpush2.msra.mxu0 0.0
      %1185 = vmatprep.subr.mxu0 0.0
      %1186 = vmatpush2.msra.mxu0 0.0
      %1187 = vmatprep.subr.mxu0 0.0
      %1188 = vmatpush2.msra.mxu0 0.0
      %1189 = vmatprep.subr.mxu0 0.0
      %1190 = vmatpush2.msra.mxu0 0.0
      %1191 = vmatprep.subr.mxu0 0.0
      %1192 = vmatpush2.msra.mxu0 0.0
      %1193 = vmatprep.subr.mxu0 0.0
      %1194 = vmatpush2.msra.mxu0 0.0
      %1195 = vmatprep.subr.mxu0 0.0
      %1196 = vmatpush2.msra.mxu0 0.0
      %1197 = vmatprep.subr.mxu0 0.0
      %1198 = vmatpush2.msra.mxu0 0.0
      %1199 = vmatprep.subr.mxu0 0.0
      %1200 = vmatpush2.msra.mxu0 0.0
      %1201 = vmatprep.mubr.f32.mxu0 0.0
      %1202 = vmatmul.mubr.f32.gmra.mxu0 %v1135
      %v1203 = vpop.f32.mrf.mxu0
      %v1204 = vadd.f32 0.0, %v1203
      %v1205 = vpop.f32.mrf.mxu0
      %1206 = vdwg.mxu0
      %v1207 = vadd.f32 %v1049, %v1204
      %v1208 = vld [vmem:[%s3] sm:$0x1]
      %v1210 = vlaneseq
      %v1211 = vshrl.u32 %v1210, 7
      %v1212 = vsub.s32 0, %v1211
      %v1213 = vrot.slane %v1208, %v1212
      %v1215 = vadd.f32 %v1207, %v1213
      %vm1216 = vcmp.gt.f32.partialorder %v1215, 0.0
      %v1217 = vmul.f32 %v1215, 0.2
      %v1218 = vsel %vm1216, %v1215, %v1217
      %v1219 = vld [vmem:[%s4] sm:$0xf]
      %vm1220 = vcmask 64512
      %v1222 = vsel %vm1220, %v1219, 0
      %1224 = vmatprep.subr.mxu0 0.0
      %1225 = vmatpush1.msra.mxu0 0.0
      %1226 = vmatprep.subr.mxu0 0.0
      %1227 = vmatpush1.msra.mxu0 0.0
      %1228 = vmatprep.subr.mxu0 0.0
      %1229 = vmatpush1.msra.mxu0 0.0
      %1230 = vmatprep.subr.mxu0 0.0
      %1231 = vmatpush1.msra.mxu0 0.0
      %1232 = vmatprep.subr.mxu0 0.0
      %1233 = vmatpush1.msra.mxu0 0.0
      %1234 = vmatprep.subr.mxu0 0.0
      %1235 = vmatpush1.msra.mxu0 0.0
      %1236 = vmatprep.subr.mxu0 0.0
      %1237 = vmatpush1.msra.mxu0 0.0
      %1238 = vmatprep.subr.mxu0 0.0
      %1239 = vmatpush1.msra.mxu0 0.0
      %1240 = vmatprep.subr.mxu0 0.0
      %1241 = vmatpush1.msra.mxu0 0.0
      %1242 = vmatprep.subr.mxu0 0.0
      %1243 = vmatpush1.msra.mxu0 0.0
      %1244 = vmatprep.subr.mxu0 0.0
      %1245 = vmatpush1.msra.mxu0 0.0
      %1246 = vmatprep.subr.mxu0 0.0
      %1247 = vmatpush1.msra.mxu0 0.0
      %1248 = vmatprep.subr.mxu0 0.0
      %1249 = vmatpush1.msra.mxu0 0.0
      %1250 = vmatprep.subr.mxu0 0.0
      %1251 = vmatpush1.msra.mxu0 0.0
      %1252 = vmatprep.subr.mxu0 0.0
      %1253 = vmatpush1.msra.mxu0 0.0
      %1254 = vmatprep.subr.mxu0 0.0
      %1255 = vmatpush1.msra.mxu0 %v1218
      %1256 = vmatprep.subr.mxu0 0.0
      %1257 = vmatpush2.msra.mxu0 0.0
      %1258 = vmatprep.subr.mxu0 0.0
      %1259 = vmatpush2.msra.mxu0 0.0
      %1260 = vmatprep.subr.mxu0 0.0
      %1261 = vmatpush2.msra.mxu0 0.0
      %1262 = vmatprep.subr.mxu0 0.0
      %1263 = vmatpush2.msra.mxu0 0.0
      %1264 = vmatprep.subr.mxu0 0.0
      %1265 = vmatpush2.msra.mxu0 0.0
      %1266 = vmatprep.subr.mxu0 0.0
      %1267 = vmatpush2.msra.mxu0 0.0
      %1268 = vmatprep.subr.mxu0 0.0
      %1269 = vmatpush2.msra.mxu0 0.0
      %1270 = vmatprep.subr.mxu0 0.0
      %1271 = vmatpush2.msra.mxu0 0.0
      %1272 = vmatprep.subr.mxu0 0.0
      %1273 = vmatpush2.msra.mxu0 0.0
      %1274 = vmatprep.subr.mxu0 0.0
      %1275 = vmatpush2.msra.mxu0 0.0
      %1276 = vmatprep.subr.mxu0 0.0
      %1277 = vmatpush2.msra.mxu0 0.0
      %1278 = vmatprep.subr.mxu0 0.0
      %1279 = vmatpush2.msra.mxu0 0.0
      %1280 = vmatprep.subr.mxu0 0.0
      %1281 = vmatpush2.msra.mxu0 0.0
      %1282 = vmatprep.subr.mxu0 0.0
      %1283 = vmatpush2.msra.mxu0 0.0
      %1284 = vmatprep.subr.mxu0 0.0
      %1285 = vmatpush2.msra.mxu0 0.0
      %1286 = vmatprep.subr.mxu0 0.0
      %1287 = vmatpush2.msra.mxu0 0.0
      %1288 = vmatprep.mubr.f32.mxu0 0.0
      %1289 = vmatmul.mubr.f32.gmra.mxu0 %v1222
      %v1290 = vpop.f32.mrf.mxu0
      %v1291 = vadd.f32 0.0, %v1290
      %v1292 = vpop.f32.mrf.mxu0
      %1293 = vdwg.mxu0
      %v1294 = vld [vmem:[%s5] sm:$0xff]
      %v1295 = vld [vmem:[%s5 + $0x8] sm:$0xff]
      %v1296 = vld [vmem:[%s5 + $0x10] sm:$0xff]
      %v1297 = vld [vmem:[%s5 + $0x18] sm:$0xff]
      %v1298 = vld [vmem:[%s5 + $0x20] sm:$0xff]
      %v1299 = vld [vmem:[%s5 + $0x28] sm:$0xff]
      %v1300 = vld [vmem:[%s5 + $0x30] sm:$0xff]
      %v1301 = vld [vmem:[%s5 + $0x38] sm:$0xff]
      %s1302 = scalar_lea.vmem %s4, 4
      %v1303 = vld [vmem:[%s1302] sm:$0xf]
      %v1305 = vsel %vm1220, %v1303, 0
      %1307 = vmatprep.subr.mxu0 0.0
      %1308 = vmatpush1.msra.mxu0 0.0
      %1309 = vmatprep.subr.mxu0 0.0
      %1310 = vmatpush1.msra.mxu0 0.0
      %1311 = vmatprep.subr.mxu0 0.0
      %1312 = vmatpush1.msra.mxu0 0.0
      %1313 = vmatprep.subr.mxu0 0.0
      %1314 = vmatpush1.msra.mxu0 0.0
      %1315 = vmatprep.subr.mxu0 0.0
      %1316 = vmatpush1.msra.mxu0 0.0
      %1317 = vmatprep.subr.mxu0 0.0
      %1318 = vmatpush1.msra.mxu0 0.0
      %1319 = vmatprep.subr.mxu0 0.0
      %1320 = vmatpush1.msra.mxu0 0.0
      %1321 = vmatprep.subr.mxu0 0.0
      %1322 = vmatpush1.msra.mxu0 0.0
      %1323 = vmatprep.subr.mxu0 0.0
      %1324 = vmatpush1.msra.mxu0 0.0
      %1325 = vmatprep.subr.mxu0 0.0
      %1326 = vmatpush1.msra.mxu0 0.0
      %1327 = vmatprep.subr.mxu0 0.0
      %1328 = vmatpush1.msra.mxu0 0.0
      %1329 = vmatprep.subr.mxu0 0.0
      %1330 = vmatpush1.msra.mxu0 0.0
      %1331 = vmatprep.subr.mxu0 0.0
      %1332 = vmatpush1.msra.mxu0 0.0
      %1333 = vmatprep.subr.mxu0 0.0
      %1334 = vmatpush1.msra.mxu0 0.0
      %1335 = vmatprep.subr.mxu0 0.0
      %1336 = vmatpush1.msra.mxu0 0.0
      %1337 = vmatprep.subr.mxu0 0.0
      %1338 = vmatpush1.msra.mxu0 %v1218
      %1339 = vmatprep.subr.mxu0 0.0
      %1340 = vmatpush2.msra.mxu0 0.0
      %1341 = vmatprep.subr.mxu0 0.0
      %1342 = vmatpush2.msra.mxu0 0.0
      %1343 = vmatprep.subr.mxu0 0.0
      %1344 = vmatpush2.msra.mxu0 0.0
      %1345 = vmatprep.subr.mxu0 0.0
      %1346 = vmatpush2.msra.mxu0 0.0
      %1347 = vmatprep.subr.mxu0 0.0
      %1348 = vmatpush2.msra.mxu0 0.0
      %1349 = vmatprep.subr.mxu0 0.0
      %1350 = vmatpush2.msra.mxu0 0.0
      %1351 = vmatprep.subr.mxu0 0.0
      %1352 = vmatpush2.msra.mxu0 0.0
      %1353 = vmatprep.subr.mxu0 0.0
      %1354 = vmatpush2.msra.mxu0 0.0
      %1355 = vmatprep.subr.mxu0 0.0
      %1356 = vmatpush2.msra.mxu0 0.0
      %1357 = vmatprep.subr.mxu0 0.0
      %1358 = vmatpush2.msra.mxu0 0.0
      %1359 = vmatprep.subr.mxu0 0.0
      %1360 = vmatpush2.msra.mxu0 0.0
      %1361 = vmatprep.subr.mxu0 0.0
      %1362 = vmatpush2.msra.mxu0 0.0
      %1363 = vmatprep.subr.mxu0 0.0
      %1364 = vmatpush2.msra.mxu0 0.0
      %1365 = vmatprep.subr.mxu0 0.0
      %1366 = vmatpush2.msra.mxu0 0.0
      %1367 = vmatprep.subr.mxu0 0.0
      %1368 = vmatpush2.msra.mxu0 0.0
      %1369 = vmatprep.subr.mxu0 0.0
      %1370 = vmatpush2.msra.mxu0 0.0
      %1371 = vmatprep.mubr.f32.mxu0 0.0
      %1372 = vmatmul.mubr.f32.gmra.mxu0 %v1305
      %v1373 = vpop.f32.mrf.mxu0
      %v1374 = vadd.f32 0.0, %v1373
      %v1375 = vpop.f32.mrf.mxu0
      %1376 = vdwg.mxu0
      %s1377 = scalar_lea.vmem %s5, 64
      %v1378 = vld [vmem:[%s1377] sm:$0xff]
      %v1379 = vld [vmem:[%s1377 + $0x8] sm:$0xff]
      %v1380 = vld [vmem:[%s1377 + $0x10] sm:$0xff]
      %v1381 = vld [vmem:[%s1377 + $0x18] sm:$0xff]
      %v1382 = vld [vmem:[%s1377 + $0x20] sm:$0xff]
      %v1383 = vld [vmem:[%s1377 + $0x28] sm:$0xff]
      %v1384 = vld [vmem:[%s1377 + $0x30] sm:$0xff]
      %v1385 = vld [vmem:[%s1377 + $0x38] sm:$0xff]
      %v1387 = vsel %vm745, %v1374, 0
      %1389 = vmatprep.subr.mxu0 0.0
      %1390 = vmatpush1.msra.mxu0 0.0
      %1391 = vmatprep.subr.mxu0 0.0
      %1392 = vmatpush1.msra.mxu0 0.0
      %1393 = vmatprep.subr.mxu0 0.0
      %1394 = vmatpush1.msra.mxu0 0.0
      %1395 = vmatprep.subr.mxu0 0.0
      %1396 = vmatpush1.msra.mxu0 0.0
      %1397 = vmatprep.subr.mxu0 0.0
      %1398 = vmatpush1.msra.mxu0 0.0
      %1399 = vmatprep.subr.mxu0 0.0
      %1400 = vmatpush1.msra.mxu0 0.0
      %1401 = vmatprep.subr.mxu0 0.0
      %1402 = vmatpush1.msra.mxu0 0.0
      %1403 = vmatprep.subr.mxu0 0.0
      %1404 = vmatpush1.msra.mxu0 0.0
      %1405 = vmatprep.subr.mxu0 0.0
      %1406 = vmatpush1.msra.mxu0 %v1385
      %1407 = vmatprep.subr.mxu0 0.0
      %1408 = vmatpush1.msra.mxu0 %v1384
      %1409 = vmatprep.subr.mxu0 0.0
      %1410 = vmatpush1.msra.mxu0 %v1383
      %1411 = vmatprep.subr.mxu0 0.0
      %1412 = vmatpush1.msra.mxu0 %v1382
      %1413 = vmatprep.subr.mxu0 0.0
      %1414 = vmatpush1.msra.mxu0 %v1381
      %1415 = vmatprep.subr.mxu0 0.0
      %1416 = vmatpush1.msra.mxu0 %v1380
      %1417 = vmatprep.subr.mxu0 0.0
      %1418 = vmatpush1.msra.mxu0 %v1379
      %1419 = vmatprep.subr.mxu0 0.0
      %1420 = vmatpush1.msra.mxu0 %v1378
      %1421 = vmatprep.subr.mxu0 0.0
      %1422 = vmatpush2.msra.mxu0 0.0
      %1423 = vmatprep.subr.mxu0 0.0
      %1424 = vmatpush2.msra.mxu0 0.0
      %1425 = vmatprep.subr.mxu0 0.0
      %1426 = vmatpush2.msra.mxu0 0.0
      %1427 = vmatprep.subr.mxu0 0.0
      %1428 = vmatpush2.msra.mxu0 0.0
      %1429 = vmatprep.subr.mxu0 0.0
      %1430 = vmatpush2.msra.mxu0 0.0
      %1431 = vmatprep.subr.mxu0 0.0
      %1432 = vmatpush2.msra.mxu0 0.0
      %1433 = vmatprep.subr.mxu0 0.0
      %1434 = vmatpush2.msra.mxu0 0.0
      %1435 = vmatprep.subr.mxu0 0.0
      %1436 = vmatpush2.msra.mxu0 0.0
      %1437 = vmatprep.subr.mxu0 0.0
      %1438 = vmatpush2.msra.mxu0 0.0
      %1439 = vmatprep.subr.mxu0 0.0
      %1440 = vmatpush2.msra.mxu0 0.0
      %1441 = vmatprep.subr.mxu0 0.0
      %1442 = vmatpush2.msra.mxu0 0.0
      %1443 = vmatprep.subr.mxu0 0.0
      %1444 = vmatpush2.msra.mxu0 0.0
      %1445 = vmatprep.subr.mxu0 0.0
      %1446 = vmatpush2.msra.mxu0 0.0
      %1447 = vmatprep.subr.mxu0 0.0
      %1448 = vmatpush2.msra.mxu0 0.0
      %1449 = vmatprep.subr.mxu0 0.0
      %1450 = vmatpush2.msra.mxu0 0.0
      %1451 = vmatprep.subr.mxu0 0.0
      %1452 = vmatpush2.msra.mxu0 0.0
      %1453 = vmatprep.mubr.f32.mxu0 0.0
      %1454 = vmatmul.mubr.f32.gmra.mxu0 %v1387
      %v1455 = vpop.f32.mrf.mxu0
      %v1456 = vadd.f32 0.0, %v1455
      %v1457 = vpop.f32.mrf.mxu0
      %1458 = vdwg.mxu0
      %v1460 = vsel %vm745, %v1291, 0
      %1462 = vmatprep.subr.mxu0 0.0
      %1463 = vmatpush1.msra.mxu0 0.0
      %1464 = vmatprep.subr.mxu0 0.0
      %1465 = vmatpush1.msra.mxu0 0.0
      %1466 = vmatprep.subr.mxu0 0.0
      %1467 = vmatpush1.msra.mxu0 0.0
      %1468 = vmatprep.subr.mxu0 0.0
      %1469 = vmatpush1.msra.mxu0 0.0
      %1470 = vmatprep.subr.mxu0 0.0
      %1471 = vmatpush1.msra.mxu0 0.0
      %1472 = vmatprep.subr.mxu0 0.0
      %1473 = vmatpush1.msra.mxu0 0.0
      %1474 = vmatprep.subr.mxu0 0.0
      %1475 = vmatpush1.msra.mxu0 0.0
      %1476 = vmatprep.subr.mxu0 0.0
      %1477 = vmatpush1.msra.mxu0 0.0
      %1478 = vmatprep.subr.mxu0 0.0
      %1479 = vmatpush1.msra.mxu0 %v1301
      %1480 = vmatprep.subr.mxu0 0.0
      %1481 = vmatpush1.msra.mxu0 %v1300
      %1482 = vmatprep.subr.mxu0 0.0
      %1483 = vmatpush1.msra.mxu0 %v1299
      %1484 = vmatprep.subr.mxu0 0.0
      %1485 = vmatpush1.msra.mxu0 %v1298
      %1486 = vmatprep.subr.mxu0 0.0
      %1487 = vmatpush1.msra.mxu0 %v1297
      %1488 = vmatprep.subr.mxu0 0.0
      %1489 = vmatpush1.msra.mxu0 %v1296
      %1490 = vmatprep.subr.mxu0 0.0
      %1491 = vmatpush1.msra.mxu0 %v1295
      %1492 = vmatprep.subr.mxu0 0.0
      %1493 = vmatpush1.msra.mxu0 %v1294
      %1494 = vmatprep.subr.mxu0 0.0
      %1495 = vmatpush2.msra.mxu0 0.0
      %1496 = vmatprep.subr.mxu0 0.0
      %1497 = vmatpush2.msra.mxu0 0.0
      %1498 = vmatprep.subr.mxu0 0.0
      %1499 = vmatpush2.msra.mxu0 0.0
      %1500 = vmatprep.subr.mxu0 0.0
      %1501 = vmatpush2.msra.mxu0 0.0
      %1502 = vmatprep.subr.mxu0 0.0
      %1503 = vmatpush2.msra.mxu0 0.0
      %1504 = vmatprep.subr.mxu0 0.0
      %1505 = vmatpush2.msra.mxu0 0.0
      %1506 = vmatprep.subr.mxu0 0.0
      %1507 = vmatpush2.msra.mxu0 0.0
      %1508 = vmatprep.subr.mxu0 0.0
      %1509 = vmatpush2.msra.mxu0 0.0
      %1510 = vmatprep.subr.mxu0 0.0
      %1511 = vmatpush2.msra.mxu0 0.0
      %1512 = vmatprep.subr.mxu0 0.0
      %1513 = vmatpush2.msra.mxu0 0.0
      %1514 = vmatprep.subr.mxu0 0.0
      %1515 = vmatpush2.msra.mxu0 0.0
      %1516 = vmatprep.subr.mxu0 0.0
      %1517 = vmatpush2.msra.mxu0 0.0
      %1518 = vmatprep.subr.mxu0 0.0
      %1519 = vmatpush2.msra.mxu0 0.0
      %1520 = vmatprep.subr.mxu0 0.0
      %1521 = vmatpush2.msra.mxu0 0.0
      %1522 = vmatprep.subr.mxu0 0.0
      %1523 = vmatpush2.msra.mxu0 0.0
      %1524 = vmatprep.subr.mxu0 0.0
      %1525 = vmatpush2.msra.mxu0 0.0
      %1526 = vmatprep.mubr.f32.mxu0 0.0
      %1527 = vmatmul.mubr.f32.gmra.mxu0 %v1460
      %v1528 = vpop.f32.mrf.mxu0
      %v1529 = vadd.f32 %v1456, %v1528
      %v1530 = vpop.f32.mrf.mxu0
      %1531 = vdwg.mxu0
      %s1532 = scalar_lea.vmem %s4, 8
      %v1533 = vld [vmem:[%s1532] sm:$0xf]
      %v1535 = vsel %vm1220, %v1533, 0
      %1537 = vmatprep.subr.mxu0 0.0
      %1538 = vmatpush1.msra.mxu0 0.0
      %1539 = vmatprep.subr.mxu0 0.0
      %1540 = vmatpush1.msra.mxu0 0.0
      %1541 = vmatprep.subr.mxu0 0.0
      %1542 = vmatpush1.msra.mxu0 0.0
      %1543 = vmatprep.subr.mxu0 0.0
      %1544 = vmatpush1.msra.mxu0 0.0
      %1545 = vmatprep.subr.mxu0 0.0
      %1546 = vmatpush1.msra.mxu0 0.0
      %1547 = vmatprep.subr.mxu0 0.0
      %1548 = vmatpush1.msra.mxu0 0.0
      %1549 = vmatprep.subr.mxu0 0.0
      %1550 = vmatpush1.msra.mxu0 0.0
      %1551 = vmatprep.subr.mxu0 0.0
      %1552 = vmatpush1.msra.mxu0 0.0
      %1553 = vmatprep.subr.mxu0 0.0
      %1554 = vmatpush1.msra.mxu0 0.0
      %1555 = vmatprep.subr.mxu0 0.0
      %1556 = vmatpush1.msra.mxu0 0.0
      %1557 = vmatprep.subr.mxu0 0.0
      %1558 = vmatpush1.msra.mxu0 0.0
      %1559 = vmatprep.subr.mxu0 0.0
      %1560 = vmatpush1.msra.mxu0 0.0
      %1561 = vmatprep.subr.mxu0 0.0
      %1562 = vmatpush1.msra.mxu0 0.0
      %1563 = vmatprep.subr.mxu0 0.0
      %1564 = vmatpush1.msra.mxu0 0.0
      %1565 = vmatprep.subr.mxu0 0.0
      %1566 = vmatpush1.msra.mxu0 0.0
      %1567 = vmatprep.subr.mxu0 0.0
      %1568 = vmatpush1.msra.mxu0 %v1218
      %1569 = vmatprep.subr.mxu0 0.0
      %1570 = vmatpush2.msra.mxu0 0.0
      %1571 = vmatprep.subr.mxu0 0.0
      %1572 = vmatpush2.msra.mxu0 0.0
      %1573 = vmatprep.subr.mxu0 0.0
      %1574 = vmatpush2.msra.mxu0 0.0
      %1575 = vmatprep.subr.mxu0 0.0
      %1576 = vmatpush2.msra.mxu0 0.0
      %1577 = vmatprep.subr.mxu0 0.0
      %1578 = vmatpush2.msra.mxu0 0.0
      %1579 = vmatprep.subr.mxu0 0.0
      %1580 = vmatpush2.msra.mxu0 0.0
      %1581 = vmatprep.subr.mxu0 0.0
      %1582 = vmatpush2.msra.mxu0 0.0
      %1583 = vmatprep.subr.mxu0 0.0
      %1584 = vmatpush2.msra.mxu0 0.0
      %1585 = vmatprep.subr.mxu0 0.0
      %1586 = vmatpush2.msra.mxu0 0.0
      %1587 = vmatprep.subr.mxu0 0.0
      %1588 = vmatpush2.msra.mxu0 0.0
      %1589 = vmatprep.subr.mxu0 0.0
      %1590 = vmatpush2.msra.mxu0 0.0
      %1591 = vmatprep.subr.mxu0 0.0
      %1592 = vmatpush2.msra.mxu0 0.0
      %1593 = vmatprep.subr.mxu0 0.0
      %1594 = vmatpush2.msra.mxu0 0.0
      %1595 = vmatprep.subr.mxu0 0.0
      %1596 = vmatpush2.msra.mxu0 0.0
      %1597 = vmatprep.subr.mxu0 0.0
      %1598 = vmatpush2.msra.mxu0 0.0
      %1599 = vmatprep.subr.mxu0 0.0
      %1600 = vmatpush2.msra.mxu0 0.0
      %1601 = vmatprep.mubr.f32.mxu0 0.0
      %1602 = vmatmul.mubr.f32.gmra.mxu0 %v1535
      %v1603 = vpop.f32.mrf.mxu0
      %v1604 = vadd.f32 0.0, %v1603
      %v1605 = vpop.f32.mrf.mxu0
      %1606 = vdwg.mxu0
      %s1607 = scalar_lea.vmem %s5, 128
      %v1608 = vld [vmem:[%s1607] sm:$0xff]
      %v1609 = vld [vmem:[%s1607 + $0x8] sm:$0xff]
      %v1610 = vld [vmem:[%s1607 + $0x10] sm:$0xff]
      %v1611 = vld [vmem:[%s1607 + $0x18] sm:$0xff]
      %v1612 = vld [vmem:[%s1607 + $0x20] sm:$0xff]
      %v1613 = vld [vmem:[%s1607 + $0x28] sm:$0xff]
      %v1614 = vld [vmem:[%s1607 + $0x30] sm:$0xff]
      %v1615 = vld [vmem:[%s1607 + $0x38] sm:$0xff]
      %v1617 = vsel %vm745, %v1604, 0
      %1619 = vmatprep.subr.mxu0 0.0
      %1620 = vmatpush1.msra.mxu0 0.0
      %1621 = vmatprep.subr.mxu0 0.0
      %1622 = vmatpush1.msra.mxu0 0.0
      %1623 = vmatprep.subr.mxu0 0.0
      %1624 = vmatpush1.msra.mxu0 0.0
      %1625 = vmatprep.subr.mxu0 0.0
      %1626 = vmatpush1.msra.mxu0 0.0
      %1627 = vmatprep.subr.mxu0 0.0
      %1628 = vmatpush1.msra.mxu0 0.0
      %1629 = vmatprep.subr.mxu0 0.0
      %1630 = vmatpush1.msra.mxu0 0.0
      %1631 = vmatprep.subr.mxu0 0.0
      %1632 = vmatpush1.msra.mxu0 0.0
      %1633 = vmatprep.subr.mxu0 0.0
      %1634 = vmatpush1.msra.mxu0 0.0
      %1635 = vmatprep.subr.mxu0 0.0
      %1636 = vmatpush1.msra.mxu0 %v1615
      %1637 = vmatprep.subr.mxu0 0.0
      %1638 = vmatpush1.msra.mxu0 %v1614
      %1639 = vmatprep.subr.mxu0 0.0
      %1640 = vmatpush1.msra.mxu0 %v1613
      %1641 = vmatprep.subr.mxu0 0.0
      %1642 = vmatpush1.msra.mxu0 %v1612
      %1643 = vmatprep.subr.mxu0 0.0
      %1644 = vmatpush1.msra.mxu0 %v1611
      %1645 = vmatprep.subr.mxu0 0.0
      %1646 = vmatpush1.msra.mxu0 %v1610
      %1647 = vmatprep.subr.mxu0 0.0
      %1648 = vmatpush1.msra.mxu0 %v1609
      %1649 = vmatprep.subr.mxu0 0.0
      %1650 = vmatpush1.msra.mxu0 %v1608
      %1651 = vmatprep.subr.mxu0 0.0
      %1652 = vmatpush2.msra.mxu0 0.0
      %1653 = vmatprep.subr.mxu0 0.0
      %1654 = vmatpush2.msra.mxu0 0.0
      %1655 = vmatprep.subr.mxu0 0.0
      %1656 = vmatpush2.msra.mxu0 0.0
      %1657 = vmatprep.subr.mxu0 0.0
      %1658 = vmatpush2.msra.mxu0 0.0
      %1659 = vmatprep.subr.mxu0 0.0
      %1660 = vmatpush2.msra.mxu0 0.0
      %1661 = vmatprep.subr.mxu0 0.0
      %1662 = vmatpush2.msra.mxu0 0.0
      %1663 = vmatprep.subr.mxu0 0.0
      %1664 = vmatpush2.msra.mxu0 0.0
      %1665 = vmatprep.subr.mxu0 0.0
      %1666 = vmatpush2.msra.mxu0 0.0
      %1667 = vmatprep.subr.mxu0 0.0
      %1668 = vmatpush2.msra.mxu0 0.0
      %1669 = vmatprep.subr.mxu0 0.0
      %1670 = vmatpush2.msra.mxu0 0.0
      %1671 = vmatprep.subr.mxu0 0.0
      %1672 = vmatpush2.msra.mxu0 0.0
      %1673 = vmatprep.subr.mxu0 0.0
      %1674 = vmatpush2.msra.mxu0 0.0
      %1675 = vmatprep.subr.mxu0 0.0
      %1676 = vmatpush2.msra.mxu0 0.0
      %1677 = vmatprep.subr.mxu0 0.0
      %1678 = vmatpush2.msra.mxu0 0.0
      %1679 = vmatprep.subr.mxu0 0.0
      %1680 = vmatpush2.msra.mxu0 0.0
      %1681 = vmatprep.subr.mxu0 0.0
      %1682 = vmatpush2.msra.mxu0 0.0
      %1683 = vmatprep.mubr.f32.mxu0 0.0
      %1684 = vmatmul.mubr.f32.gmra.mxu0 %v1617
      %v1685 = vpop.f32.mrf.mxu0
      %v1686 = vadd.f32 0.0, %v1685
      %v1687 = vpop.f32.mrf.mxu0
      %1688 = vdwg.mxu0
      %v1689 = vadd.f32 %v1529, %v1686
      %s1690 = scalar_lea.vmem %s4, 12
      %v1691 = vld [vmem:[%s1690] sm:$0xf]
      %v1693 = vsel %vm1220, %v1691, 0
      %1695 = vmatprep.subr.mxu0 0.0
      %1696 = vmatpush1.msra.mxu0 0.0
      %1697 = vmatprep.subr.mxu0 0.0
      %1698 = vmatpush1.msra.mxu0 0.0
      %1699 = vmatprep.subr.mxu0 0.0
      %1700 = vmatpush1.msra.mxu0 0.0
      %1701 = vmatprep.subr.mxu0 0.0
      %1702 = vmatpush1.msra.mxu0 0.0
      %1703 = vmatprep.subr.mxu0 0.0
      %1704 = vmatpush1.msra.mxu0 0.0
      %1705 = vmatprep.subr.mxu0 0.0
      %1706 = vmatpush1.msra.mxu0 0.0
      %1707 = vmatprep.subr.mxu0 0.0
      %1708 = vmatpush1.msra.mxu0 0.0
      %1709 = vmatprep.subr.mxu0 0.0
      %1710 = vmatpush1.msra.mxu0 0.0
      %1711 = vmatprep.subr.mxu0 0.0
      %1712 = vmatpush1.msra.mxu0 0.0
      %1713 = vmatprep.subr.mxu0 0.0
      %1714 = vmatpush1.msra.mxu0 0.0
      %1715 = vmatprep.subr.mxu0 0.0
      %1716 = vmatpush1.msra.mxu0 0.0
      %1717 = vmatprep.subr.mxu0 0.0
      %1718 = vmatpush1.msra.mxu0 0.0
      %1719 = vmatprep.subr.mxu0 0.0
      %1720 = vmatpush1.msra.mxu0 0.0
      %1721 = vmatprep.subr.mxu0 0.0
      %1722 = vmatpush1.msra.mxu0 0.0
      %1723 = vmatprep.subr.mxu0 0.0
      %1724 = vmatpush1.msra.mxu0 0.0
      %1725 = vmatprep.subr.mxu0 0.0
      %1726 = vmatpush1.msra.mxu0 %v1218
      %1727 = vmatprep.subr.mxu0 0.0
      %1728 = vmatpush2.msra.mxu0 0.0
      %1729 = vmatprep.subr.mxu0 0.0
      %1730 = vmatpush2.msra.mxu0 0.0
      %1731 = vmatprep.subr.mxu0 0.0
      %1732 = vmatpush2.msra.mxu0 0.0
      %1733 = vmatprep.subr.mxu0 0.0
      %1734 = vmatpush2.msra.mxu0 0.0
      %1735 = vmatprep.subr.mxu0 0.0
      %1736 = vmatpush2.msra.mxu0 0.0
      %1737 = vmatprep.subr.mxu0 0.0
      %1738 = vmatpush2.msra.mxu0 0.0
      %1739 = vmatprep.subr.mxu0 0.0
      %1740 = vmatpush2.msra.mxu0 0.0
      %1741 = vmatprep.subr.mxu0 0.0
      %1742 = vmatpush2.msra.mxu0 0.0
      %1743 = vmatprep.subr.mxu0 0.0
      %1744 = vmatpush2.msra.mxu0 0.0
      %1745 = vmatprep.subr.mxu0 0.0
      %1746 = vmatpush2.msra.mxu0 0.0
      %1747 = vmatprep.subr.mxu0 0.0
      %1748 = vmatpush2.msra.mxu0 0.0
      %1749 = vmatprep.subr.mxu0 0.0
      %1750 = vmatpush2.msra.mxu0 0.0
      %1751 = vmatprep.subr.mxu0 0.0
      %1752 = vmatpush2.msra.mxu0 0.0
      %1753 = vmatprep.subr.mxu0 0.0
      %1754 = vmatpush2.msra.mxu0 0.0
      %1755 = vmatprep.subr.mxu0 0.0
      %1756 = vmatpush2.msra.mxu0 0.0
      %1757 = vmatprep.subr.mxu0 0.0
      %1758 = vmatpush2.msra.mxu0 0.0
      %1759 = vmatprep.mubr.f32.mxu0 0.0
      %1760 = vmatmul.mubr.f32.gmra.mxu0 %v1693
      %v1761 = vpop.f32.mrf.mxu0
      %v1762 = vadd.f32 0.0, %v1761
      %v1763 = vpop.f32.mrf.mxu0
      %1764 = vdwg.mxu0
      %s1765 = scalar_lea.vmem %s5, 192
      %v1766 = vld [vmem:[%s1765] sm:$0xff]
      %v1767 = vld [vmem:[%s1765 + $0x8] sm:$0xff]
      %v1768 = vld [vmem:[%s1765 + $0x10] sm:$0xff]
      %v1769 = vld [vmem:[%s1765 + $0x18] sm:$0xff]
      %v1770 = vld [vmem:[%s1765 + $0x20] sm:$0xff]
      %v1771 = vld [vmem:[%s1765 + $0x28] sm:$0xff]
      %v1772 = vld [vmem:[%s1765 + $0x30] sm:$0xff]
      %v1773 = vld [vmem:[%s1765 + $0x38] sm:$0xff]
      %v1775 = vsel %vm745, %v1762, 0
      %1777 = vmatprep.subr.mxu0 0.0
      %1778 = vmatpush1.msra.mxu0 0.0
      %1779 = vmatprep.subr.mxu0 0.0
      %1780 = vmatpush1.msra.mxu0 0.0
      %1781 = vmatprep.subr.mxu0 0.0
      %1782 = vmatpush1.msra.mxu0 0.0
      %1783 = vmatprep.subr.mxu0 0.0
      %1784 = vmatpush1.msra.mxu0 0.0
      %1785 = vmatprep.subr.mxu0 0.0
      %1786 = vmatpush1.msra.mxu0 0.0
      %1787 = vmatprep.subr.mxu0 0.0
      %1788 = vmatpush1.msra.mxu0 0.0
      %1789 = vmatprep.subr.mxu0 0.0
      %1790 = vmatpush1.msra.mxu0 0.0
      %1791 = vmatprep.subr.mxu0 0.0
      %1792 = vmatpush1.msra.mxu0 0.0
      %1793 = vmatprep.subr.mxu0 0.0
      %1794 = vmatpush1.msra.mxu0 %v1773
      %1795 = vmatprep.subr.mxu0 0.0
      %1796 = vmatpush1.msra.mxu0 %v1772
      %1797 = vmatprep.subr.mxu0 0.0
      %1798 = vmatpush1.msra.mxu0 %v1771
      %1799 = vmatprep.subr.mxu0 0.0
      %1800 = vmatpush1.msra.mxu0 %v1770
      %1801 = vmatprep.subr.mxu0 0.0
      %1802 = vmatpush1.msra.mxu0 %v1769
      %1803 = vmatprep.subr.mxu0 0.0
      %1804 = vmatpush1.msra.mxu0 %v1768
      %1805 = vmatprep.subr.mxu0 0.0
      %1806 = vmatpush1.msra.mxu0 %v1767
      %1807 = vmatprep.subr.mxu0 0.0
      %1808 = vmatpush1.msra.mxu0 %v1766
      %1809 = vmatprep.subr.mxu0 0.0
      %1810 = vmatpush2.msra.mxu0 0.0
      %1811 = vmatprep.subr.mxu0 0.0
      %1812 = vmatpush2.msra.mxu0 0.0
      %1813 = vmatprep.subr.mxu0 0.0
      %1814 = vmatpush2.msra.mxu0 0.0
      %1815 = vmatprep.subr.mxu0 0.0
      %1816 = vmatpush2.msra.mxu0 0.0
      %1817 = vmatprep.subr.mxu0 0.0
      %1818 = vmatpush2.msra.mxu0 0.0
      %1819 = vmatprep.subr.mxu0 0.0
      %1820 = vmatpush2.msra.mxu0 0.0
      %1821 = vmatprep.subr.mxu0 0.0
      %1822 = vmatpush2.msra.mxu0 0.0
      %1823 = vmatprep.subr.mxu0 0.0
      %1824 = vmatpush2.msra.mxu0 0.0
      %1825 = vmatprep.subr.mxu0 0.0
      %1826 = vmatpush2.msra.mxu0 0.0
      %1827 = vmatprep.subr.mxu0 0.0
      %1828 = vmatpush2.msra.mxu0 0.0
      %1829 = vmatprep.subr.mxu0 0.0
      %1830 = vmatpush2.msra.mxu0 0.0
      %1831 = vmatprep.subr.mxu0 0.0
      %1832 = vmatpush2.msra.mxu0 0.0
      %1833 = vmatprep.subr.mxu0 0.0
      %1834 = vmatpush2.msra.mxu0 0.0
      %1835 = vmatprep.subr.mxu0 0.0
      %1836 = vmatpush2.msra.mxu0 0.0
      %1837 = vmatprep.subr.mxu0 0.0
      %1838 = vmatpush2.msra.mxu0 0.0
      %1839 = vmatprep.subr.mxu0 0.0
      %1840 = vmatpush2.msra.mxu0 0.0
      %1841 = vmatprep.mubr.f32.mxu0 0.0
      %1842 = vmatmul.mubr.f32.gmra.mxu0 %v1775
      %v1843 = vpop.f32.mrf.mxu0
      %v1844 = vadd.f32 0.0, %v1843
      %v1845 = vpop.f32.mrf.mxu0
      %1846 = vdwg.mxu0
      %v1847 = vadd.f32 %v1689, %v1844
      %v1848 = vld [vmem:[%s6] sm:$0x1]
      %v1850 = vlaneseq
      %v1851 = vshrl.u32 %v1850, 7
      %v1852 = vsub.s32 0, %v1851
      %v1853 = vrot.slane %v1848, %v1852
      %v1855 = vadd.f32 %v1847, %v1853
      %vm1856 = vcmp.gt.f32.partialorder %v1855, 0.0
      %v1857 = vmul.f32 %v1855, 0.2
      %v1858 = vsel %vm1856, %v1855, %v1857
      %v1859 = vld [vmem:[%s7] sm:$0xff]
      %vm1860 = vcmask 31744
      %v1862 = vsel %vm1860, %v1859, 0
      %vm1864 = vcmask 1043456
      %v1866 = vsel %vm1864, %v1858, 0
      %1868 = vmatprep.subr.mxu0 0.0
      %1869 = vmatpush1.msra.mxu0 0.0
      %1870 = vmatprep.subr.mxu0 0.0
      %1871 = vmatpush1.msra.mxu0 0.0
      %1872 = vmatprep.subr.mxu0 0.0
      %1873 = vmatpush1.msra.mxu0 0.0
      %1874 = vmatprep.subr.mxu0 0.0
      %1875 = vmatpush1.msra.mxu0 0.0
      %1876 = vmatprep.subr.mxu0 0.0
      %1877 = vmatpush1.msra.mxu0 0.0
      %1878 = vmatprep.subr.mxu0 0.0
      %1879 = vmatpush1.msra.mxu0 0.0
      %1880 = vmatprep.subr.mxu0 0.0
      %1881 = vmatpush1.msra.mxu0 0.0
      %1882 = vmatprep.subr.mxu0 0.0
      %1883 = vmatpush1.msra.mxu0 0.0
      %1884 = vmatprep.subr.mxu0 0.0
      %1885 = vmatpush1.msra.mxu0 0.0
      %1886 = vmatprep.subr.mxu0 0.0
      %1887 = vmatpush1.msra.mxu0 0.0
      %1888 = vmatprep.subr.mxu0 0.0
      %1889 = vmatpush1.msra.mxu0 0.0
      %1890 = vmatprep.subr.mxu0 0.0
      %1891 = vmatpush1.msra.mxu0 0.0
      %1892 = vmatprep.subr.mxu0 0.0
      %1893 = vmatpush1.msra.mxu0 0.0
      %1894 = vmatprep.subr.mxu0 0.0
      %1895 = vmatpush1.msra.mxu0 0.0
      %1896 = vmatprep.subr.mxu0 0.0
      %1897 = vmatpush1.msra.mxu0 0.0
      %1898 = vmatprep.subr.mxu0 0.0
      %1899 = vmatpush1.msra.mxu0 %v1866
      %1900 = vmatprep.subr.mxu0 0.0
      %1901 = vmatpush2.msra.mxu0 0.0
      %1902 = vmatprep.subr.mxu0 0.0
      %1903 = vmatpush2.msra.mxu0 0.0
      %1904 = vmatprep.subr.mxu0 0.0
      %1905 = vmatpush2.msra.mxu0 0.0
      %1906 = vmatprep.subr.mxu0 0.0
      %1907 = vmatpush2.msra.mxu0 0.0
      %1908 = vmatprep.subr.mxu0 0.0
      %1909 = vmatpush2.msra.mxu0 0.0
      %1910 = vmatprep.subr.mxu0 0.0
      %1911 = vmatpush2.msra.mxu0 0.0
      %1912 = vmatprep.subr.mxu0 0.0
      %1913 = vmatpush2.msra.mxu0 0.0
      %1914 = vmatprep.subr.mxu0 0.0
      %1915 = vmatpush2.msra.mxu0 0.0
      %1916 = vmatprep.subr.mxu0 0.0
      %1917 = vmatpush2.msra.mxu0 0.0
      %1918 = vmatprep.subr.mxu0 0.0
      %1919 = vmatpush2.msra.mxu0 0.0
      %1920 = vmatprep.subr.mxu0 0.0
      %1921 = vmatpush2.msra.mxu0 0.0
      %1922 = vmatprep.subr.mxu0 0.0
      %1923 = vmatpush2.msra.mxu0 0.0
      %1924 = vmatprep.subr.mxu0 0.0
      %1925 = vmatpush2.msra.mxu0 0.0
      %1926 = vmatprep.subr.mxu0 0.0
      %1927 = vmatpush2.msra.mxu0 0.0
      %1928 = vmatprep.subr.mxu0 0.0
      %1929 = vmatpush2.msra.mxu0 0.0
      %1930 = vmatprep.subr.mxu0 0.0
      %1931 = vmatpush2.msra.mxu0 0.0
      %1932 = vmatprep.mubr.f32.mxu0 0.0
      %1933 = vmatmul.mubr.f32.gmra.mxu0 %v1862
      %v1934 = vpop.f32.mrf.mxu0
      %v1935 = vadd.f32 0.0, %v1934
      %v1936 = vpop.f32.mrf.mxu0
      %1937 = vdwg.mxu0
      %v1938 = vld [vmem:[%s8] sm:$0xff]
      %v1939 = vld [vmem:[%s8 + $0x8] sm:$0xff]
      %v1940 = vld [vmem:[%s8 + $0x10] sm:$0xff]
      %v1941 = vld [vmem:[%s8 + $0x18] sm:$0xff]
      %v1942 = vld [vmem:[%s8 + $0x20] sm:$0xff]
      %v1943 = vld [vmem:[%s8 + $0x28] sm:$0xff]
      %v1944 = vld [vmem:[%s8 + $0x30] sm:$0xff]
      %v1945 = vld [vmem:[%s8 + $0x38] sm:$0xff]
      %v1946 = vld [vmem:[%s8 + $0x40] sm:$0xff]
      %v1947 = vld [vmem:[%s8 + $0x48] sm:$0xff]
      %v1948 = vld [vmem:[%s8 + $0x50] sm:$0xff]
      %v1949 = vld [vmem:[%s8 + $0x58] sm:$0xff]
      %v1950 = vld [vmem:[%s8 + $0x60] sm:$0xff]
      %v1951 = vld [vmem:[%s8 + $0x68] sm:$0xff]
      %v1952 = vld [vmem:[%s8 + $0x70] sm:$0xff]
      %v1953 = vld [vmem:[%s8 + $0x78] sm:$0xff]
      %v1954 = vld [vmem:[%s9] sm:$0xff]
      %v1955 = vld [vmem:[%s9 + $0x8] sm:$0xff]
      %v1956 = vld [vmem:[%s9 + $0x10] sm:$0xff]
      %v1957 = vld [vmem:[%s9 + $0x18] sm:$0xff]
      %v1958 = vld [vmem:[%s9 + $0x20] sm:$0xff]
      %v1959 = vld [vmem:[%s9 + $0x28] sm:$0xff]
      %v1960 = vld [vmem:[%s9 + $0x30] sm:$0xff]
      %v1961 = vld [vmem:[%s9 + $0x38] sm:$0xff]
      %v1962 = vld [vmem:[%s9 + $0x40] sm:$0xff]
      %v1963 = vld [vmem:[%s9 + $0x48] sm:$0xff]
      %v1964 = vld [vmem:[%s9 + $0x50] sm:$0xff]
      %v1965 = vld [vmem:[%s9 + $0x58] sm:$0xff]
      %v1966 = vld [vmem:[%s9 + $0x60] sm:$0xff]
      %v1967 = vld [vmem:[%s9 + $0x68] sm:$0xff]
      %v1968 = vld [vmem:[%s9 + $0x70] sm:$0xff]
      %v1969 = vld [vmem:[%s9 + $0x78] sm:$0xff]
      %v1971 = vsel %vm745, %v1218, 0
      %1973 = vmatprep.subr.mxu0 0.0
      %1974 = vmatpush1.msra.mxu0 0.0
      %1975 = vmatprep.subr.mxu0 0.0
      %1976 = vmatpush1.msra.mxu0 0.0
      %1977 = vmatprep.subr.mxu0 0.0
      %1978 = vmatpush1.msra.mxu0 0.0
      %1979 = vmatprep.subr.mxu0 0.0
      %1980 = vmatpush1.msra.mxu0 0.0
      %1981 = vmatprep.subr.mxu0 0.0
      %1982 = vmatpush1.msra.mxu0 0.0
      %1983 = vmatprep.subr.mxu0 0.0
      %1984 = vmatpush1.msra.mxu0 0.0
      %1985 = vmatprep.subr.mxu0 0.0
      %1986 = vmatpush1.msra.mxu0 0.0
      %1987 = vmatprep.subr.mxu0 0.0
      %1988 = vmatpush1.msra.mxu0 0.0
      %1989 = vmatprep.subr.mxu0 %v1969
      %1990 = vmatpush1.msra.mxu0 %v1968
      %1991 = vmatprep.subr.mxu0 %v1967
      %1992 = vmatpush1.msra.mxu0 %v1966
      %1993 = vmatprep.subr.mxu0 %v1965
      %1994 = vmatpush1.msra.mxu0 %v1964
      %1995 = vmatprep.subr.mxu0 %v1963
      %1996 = vmatpush1.msra.mxu0 %v1962
      %1997 = vmatprep.subr.mxu0 %v1961
      %1998 = vmatpush1.msra.mxu0 %v1960
      %1999 = vmatprep.subr.mxu0 %v1959
      %2000 = vmatpush1.msra.mxu0 %v1958
      %2001 = vmatprep.subr.mxu0 %v1957
      %2002 = vmatpush1.msra.mxu0 %v1956
      %2003 = vmatprep.subr.mxu0 %v1955
      %2004 = vmatpush1.msra.mxu0 %v1954
      %2005 = vmatprep.subr.mxu0 0.0
      %2006 = vmatpush2.msra.mxu0 0.0
      %2007 = vmatprep.subr.mxu0 0.0
      %2008 = vmatpush2.msra.mxu0 0.0
      %2009 = vmatprep.subr.mxu0 0.0
      %2010 = vmatpush2.msra.mxu0 0.0
      %2011 = vmatprep.subr.mxu0 0.0
      %2012 = vmatpush2.msra.mxu0 0.0
      %2013 = vmatprep.subr.mxu0 0.0
      %2014 = vmatpush2.msra.mxu0 0.0
      %2015 = vmatprep.subr.mxu0 0.0
      %2016 = vmatpush2.msra.mxu0 0.0
      %2017 = vmatprep.subr.mxu0 0.0
      %2018 = vmatpush2.msra.mxu0 0.0
      %2019 = vmatprep.subr.mxu0 0.0
      %2020 = vmatpush2.msra.mxu0 0.0
      %2021 = vmatprep.subr.mxu0 0.0
      %2022 = vmatpush2.msra.mxu0 0.0
      %2023 = vmatprep.subr.mxu0 0.0
      %2024 = vmatpush2.msra.mxu0 0.0
      %2025 = vmatprep.subr.mxu0 0.0
      %2026 = vmatpush2.msra.mxu0 0.0
      %2027 = vmatprep.subr.mxu0 0.0
      %2028 = vmatpush2.msra.mxu0 0.0
      %2029 = vmatprep.subr.mxu0 0.0
      %2030 = vmatpush2.msra.mxu0 0.0
      %2031 = vmatprep.subr.mxu0 0.0
      %2032 = vmatpush2.msra.mxu0 0.0
      %2033 = vmatprep.subr.mxu0 0.0
      %2034 = vmatpush2.msra.mxu0 0.0
      %2035 = vmatprep.subr.mxu0 0.0
      %2036 = vmatpush2.msra.mxu0 0.0
      %2037 = vmatprep.mubr.f32.mxu0 0.0
      %2038 = vmatmul.mubr.f32.gmra.mxu0 %v1971
      %v2039 = vpop.f32.mrf.mxu0
      %v2040 = vadd.f32 0.0, %v2039
      %v2041 = vpop.f32.mrf.mxu0
      %v2042 = vadd.f32 0.0, %v2041
      %2043 = vdwg.mxu0
      %v2045 = vsel %vm745, %v1935, 0
      %2047 = vmatprep.subr.mxu0 0.0
      %2048 = vmatpush1.msra.mxu0 0.0
      %2049 = vmatprep.subr.mxu0 0.0
      %2050 = vmatpush1.msra.mxu0 0.0
      %2051 = vmatprep.subr.mxu0 0.0
      %2052 = vmatpush1.msra.mxu0 0.0
      %2053 = vmatprep.subr.mxu0 0.0
      %2054 = vmatpush1.msra.mxu0 0.0
      %2055 = vmatprep.subr.mxu0 0.0
      %2056 = vmatpush1.msra.mxu0 0.0
      %2057 = vmatprep.subr.mxu0 0.0
      %2058 = vmatpush1.msra.mxu0 0.0
      %2059 = vmatprep.subr.mxu0 0.0
      %2060 = vmatpush1.msra.mxu0 0.0
      %2061 = vmatprep.subr.mxu0 0.0
      %2062 = vmatpush1.msra.mxu0 0.0
      %2063 = vmatprep.subr.mxu0 %v1953
      %2064 = vmatpush1.msra.mxu0 %v1952
      %2065 = vmatprep.subr.mxu0 %v1951
      %2066 = vmatpush1.msra.mxu0 %v1950
      %2067 = vmatprep.subr.mxu0 %v1949
      %2068 = vmatpush1.msra.mxu0 %v1948
      %2069 = vmatprep.subr.mxu0 %v1947
      %2070 = vmatpush1.msra.mxu0 %v1946
      %2071 = vmatprep.subr.mxu0 %v1945
      %2072 = vmatpush1.msra.mxu0 %v1944
      %2073 = vmatprep.subr.mxu0 %v1943
      %2074 = vmatpush1.msra.mxu0 %v1942
      %2075 = vmatprep.subr.mxu0 %v1941
      %2076 = vmatpush1.msra.mxu0 %v1940
      %2077 = vmatprep.subr.mxu0 %v1939
      %2078 = vmatpush1.msra.mxu0 %v1938
      %2079 = vmatprep.subr.mxu0 0.0
      %2080 = vmatpush2.msra.mxu0 0.0
      %2081 = vmatprep.subr.mxu0 0.0
      %2082 = vmatpush2.msra.mxu0 0.0
      %2083 = vmatprep.subr.mxu0 0.0
      %2084 = vmatpush2.msra.mxu0 0.0
      %2085 = vmatprep.subr.mxu0 0.0
      %2086 = vmatpush2.msra.mxu0 0.0
      %2087 = vmatprep.subr.mxu0 0.0
      %2088 = vmatpush2.msra.mxu0 0.0
      %2089 = vmatprep.subr.mxu0 0.0
      %2090 = vmatpush2.msra.mxu0 0.0
      %2091 = vmatprep.subr.mxu0 0.0
      %2092 = vmatpush2.msra.mxu0 0.0
      %2093 = vmatprep.subr.mxu0 0.0
      %2094 = vmatpush2.msra.mxu0 0.0
      %2095 = vmatprep.subr.mxu0 0.0
      %2096 = vmatpush2.msra.mxu0 0.0
      %2097 = vmatprep.subr.mxu0 0.0
      %2098 = vmatpush2.msra.mxu0 0.0
      %2099 = vmatprep.subr.mxu0 0.0
      %2100 = vmatpush2.msra.mxu0 0.0
      %2101 = vmatprep.subr.mxu0 0.0
      %2102 = vmatpush2.msra.mxu0 0.0
      %2103 = vmatprep.subr.mxu0 0.0
      %2104 = vmatpush2.msra.mxu0 0.0
      %2105 = vmatprep.subr.mxu0 0.0
      %2106 = vmatpush2.msra.mxu0 0.0
      %2107 = vmatprep.subr.mxu0 0.0
      %2108 = vmatpush2.msra.mxu0 0.0
      %2109 = vmatprep.subr.mxu0 0.0
      %2110 = vmatpush2.msra.mxu0 0.0
      %2111 = vmatprep.mubr.f32.mxu0 0.0
      %2112 = vmatmul.mubr.f32.gmra.mxu0 %v2045
      %v2113 = vpop.f32.mrf.mxu0
      %v2114 = vadd.f32 %v2040, %v2113
      %v2115 = vpop.f32.mrf.mxu0
      %v2116 = vadd.f32 %v2042, %v2115
      %2117 = vdwg.mxu0
      %v2118 = vld [vmem:[%s10] sm:$0xff]
      %v2120 = vsel %vm1220, %v2118, 0
      %2122 = vmatprep.subr.mxu0 0.0
      %2123 = vmatpush1.msra.mxu0 0.0
      %2124 = vmatprep.subr.mxu0 0.0
      %2125 = vmatpush1.msra.mxu0 0.0
      %2126 = vmatprep.subr.mxu0 0.0
      %2127 = vmatpush1.msra.mxu0 0.0
      %2128 = vmatprep.subr.mxu0 0.0
      %2129 = vmatpush1.msra.mxu0 0.0
      %2130 = vmatprep.subr.mxu0 0.0
      %2131 = vmatpush1.msra.mxu0 0.0
      %2132 = vmatprep.subr.mxu0 0.0
      %2133 = vmatpush1.msra.mxu0 0.0
      %2134 = vmatprep.subr.mxu0 0.0
      %2135 = vmatpush1.msra.mxu0 0.0
      %2136 = vmatprep.subr.mxu0 0.0
      %2137 = vmatpush1.msra.mxu0 0.0
      %2138 = vmatprep.subr.mxu0 0.0
      %2139 = vmatpush1.msra.mxu0 0.0
      %2140 = vmatprep.subr.mxu0 0.0
      %2141 = vmatpush1.msra.mxu0 0.0
      %2142 = vmatprep.subr.mxu0 0.0
      %2143 = vmatpush1.msra.mxu0 0.0
      %2144 = vmatprep.subr.mxu0 0.0
      %2145 = vmatpush1.msra.mxu0 0.0
      %2146 = vmatprep.subr.mxu0 0.0
      %2147 = vmatpush1.msra.mxu0 0.0
      %2148 = vmatprep.subr.mxu0 0.0
      %2149 = vmatpush1.msra.mxu0 0.0
      %2150 = vmatprep.subr.mxu0 0.0
      %2151 = vmatpush1.msra.mxu0 0.0
      %2152 = vmatprep.subr.mxu0 %v2116
      %2153 = vmatpush1.msra.mxu0 %v2114
      %2154 = vmatprep.subr.mxu0 0.0
      %2155 = vmatpush2.msra.mxu0 0.0
      %2156 = vmatprep.subr.mxu0 0.0
      %2157 = vmatpush2.msra.mxu0 0.0
      %2158 = vmatprep.subr.mxu0 0.0
      %2159 = vmatpush2.msra.mxu0 0.0
      %2160 = vmatprep.subr.mxu0 0.0
      %2161 = vmatpush2.msra.mxu0 0.0
      %2162 = vmatprep.subr.mxu0 0.0
      %2163 = vmatpush2.msra.mxu0 0.0
      %2164 = vmatprep.subr.mxu0 0.0
      %2165 = vmatpush2.msra.mxu0 0.0
      %2166 = vmatprep.subr.mxu0 0.0
      %2167 = vmatpush2.msra.mxu0 0.0
      %2168 = vmatprep.subr.mxu0 0.0
      %2169 = vmatpush2.msra.mxu0 0.0
      %2170 = vmatprep.subr.mxu0 0.0
      %2171 = vmatpush2.msra.mxu0 0.0
      %2172 = vmatprep.subr.mxu0 0.0
      %2173 = vmatpush2.msra.mxu0 0.0
      %2174 = vmatprep.subr.mxu0 0.0
      %2175 = vmatpush2.msra.mxu0 0.0
      %2176 = vmatprep.subr.mxu0 0.0
      %2177 = vmatpush2.msra.mxu0 0.0
      %2178 = vmatprep.subr.mxu0 0.0
      %2179 = vmatpush2.msra.mxu0 0.0
      %2180 = vmatprep.subr.mxu0 0.0
      %2181 = vmatpush2.msra.mxu0 0.0
      %2182 = vmatprep.subr.mxu0 0.0
      %2183 = vmatpush2.msra.mxu0 0.0
      %2184 = vmatprep.subr.mxu0 0.0
      %2185 = vmatpush2.msra.mxu0 0.0
      %2186 = vmatprep.mubr.f32.mxu0 0.0
      %2187 = vmatmul.mubr.f32.gmra.mxu0 %v2120
      %v2188 = vpop.f32.mrf.mxu0
      %v2189 = vadd.f32 0.0, %v2188
      %v2190 = vpop.f32.mrf.mxu0
      %v2191 = vadd.f32 0.0, %v2190
      %2192 = vdwg.mxu0
      %v2193 = vld [vmem:[%s11] sm:$0xff]
      %v2194 = vld [vmem:[%s11 + $0x8] sm:$0xff]
      %v2195 = vld [vmem:[%s11 + $0x10] sm:$0xff]
      %v2196 = vld [vmem:[%s11 + $0x18] sm:$0xff]
      %v2197 = vld [vmem:[%s11 + $0x20] sm:$0xff]
      %v2198 = vld [vmem:[%s11 + $0x28] sm:$0xff]
      %v2199 = vld [vmem:[%s11 + $0x30] sm:$0xff]
      %v2200 = vld [vmem:[%s11 + $0x38] sm:$0xff]
      %v2201 = vld [vmem:[%s11 + $0x40] sm:$0xff]
      %v2202 = vld [vmem:[%s11 + $0x48] sm:$0xff]
      %v2203 = vld [vmem:[%s11 + $0x50] sm:$0xff]
      %v2204 = vld [vmem:[%s11 + $0x58] sm:$0xff]
      %v2205 = vld [vmem:[%s11 + $0x60] sm:$0xff]
      %v2206 = vld [vmem:[%s11 + $0x68] sm:$0xff]
      %v2207 = vld [vmem:[%s11 + $0x70] sm:$0xff]
      %v2208 = vld [vmem:[%s11 + $0x78] sm:$0xff]
      %v2209 = vld [vmem:[%s11 + $0x80] sm:$0xff]
      %v2210 = vld [vmem:[%s11 + $0x88] sm:$0xff]
      %v2211 = vld [vmem:[%s11 + $0x90] sm:$0xff]
      %v2212 = vld [vmem:[%s11 + $0x98] sm:$0xff]
      %v2213 = vld [vmem:[%s11 + $0xa0] sm:$0xff]
      %v2214 = vld [vmem:[%s11 + $0xa8] sm:$0xff]
      %v2215 = vld [vmem:[%s11 + $0xb0] sm:$0xff]
      %v2216 = vld [vmem:[%s11 + $0xb8] sm:$0xff]
      %s2217 = scalar_lea.vmem %s10, 8
      %v2218 = vld [vmem:[%s2217] sm:$0xff]
      %v2220 = vsel %vm1220, %v2218, 0
      %2222 = vmatprep.subr.mxu0 0.0
      %2223 = vmatpush1.msra.mxu0 0.0
      %2224 = vmatprep.subr.mxu0 0.0
      %2225 = vmatpush1.msra.mxu0 0.0
      %2226 = vmatprep.subr.mxu0 0.0
      %2227 = vmatpush1.msra.mxu0 0.0
      %2228 = vmatprep.subr.mxu0 0.0
      %2229 = vmatpush1.msra.mxu0 0.0
      %2230 = vmatprep.subr.mxu0 0.0
      %2231 = vmatpush1.msra.mxu0 0.0
      %2232 = vmatprep.subr.mxu0 0.0
      %2233 = vmatpush1.msra.mxu0 0.0
      %2234 = vmatprep.subr.mxu0 0.0
      %2235 = vmatpush1.msra.mxu0 0.0
      %2236 = vmatprep.subr.mxu0 0.0
      %2237 = vmatpush1.msra.mxu0 0.0
      %2238 = vmatprep.subr.mxu0 0.0
      %2239 = vmatpush1.msra.mxu0 0.0
      %2240 = vmatprep.subr.mxu0 0.0
      %2241 = vmatpush1.msra.mxu0 0.0
      %2242 = vmatprep.subr.mxu0 0.0
      %2243 = vmatpush1.msra.mxu0 0.0
      %2244 = vmatprep.subr.mxu0 0.0
      %2245 = vmatpush1.msra.mxu0 0.0
      %2246 = vmatprep.subr.mxu0 0.0
      %2247 = vmatpush1.msra.mxu0 0.0
      %2248 = vmatprep.subr.mxu0 0.0
      %2249 = vmatpush1.msra.mxu0 0.0
      %2250 = vmatprep.subr.mxu0 0.0
      %2251 = vmatpush1.msra.mxu0 0.0
      %2252 = vmatprep.subr.mxu0 %v2116
      %2253 = vmatpush1.msra.mxu0 %v2114
      %2254 = vmatprep.subr.mxu0 0.0
      %2255 = vmatpush2.msra.mxu0 0.0
      %2256 = vmatprep.subr.mxu0 0.0
      %2257 = vmatpush2.msra.mxu0 0.0
      %2258 = vmatprep.subr.mxu0 0.0
      %2259 = vmatpush2.msra.mxu0 0.0
      %2260 = vmatprep.subr.mxu0 0.0
      %2261 = vmatpush2.msra.mxu0 0.0
      %2262 = vmatprep.subr.mxu0 0.0
      %2263 = vmatpush2.msra.mxu0 0.0
      %2264 = vmatprep.subr.mxu0 0.0
      %2265 = vmatpush2.msra.mxu0 0.0
      %2266 = vmatprep.subr.mxu0 0.0
      %2267 = vmatpush2.msra.mxu0 0.0
      %2268 = vmatprep.subr.mxu0 0.0
      %2269 = vmatpush2.msra.mxu0 0.0
      %2270 = vmatprep.subr.mxu0 0.0
      %2271 = vmatpush2.msra.mxu0 0.0
      %2272 = vmatprep.subr.mxu0 0.0
      %2273 = vmatpush2.msra.mxu0 0.0
      %2274 = vmatprep.subr.mxu0 0.0
      %2275 = vmatpush2.msra.mxu0 0.0
      %2276 = vmatprep.subr.mxu0 0.0
      %2277 = vmatpush2.msra.mxu0 0.0
      %2278 = vmatprep.subr.mxu0 0.0
      %2279 = vmatpush2.msra.mxu0 0.0
      %2280 = vmatprep.subr.mxu0 0.0
      %2281 = vmatpush2.msra.mxu0 0.0
      %2282 = vmatprep.subr.mxu0 0.0
      %2283 = vmatpush2.msra.mxu0 0.0
      %2284 = vmatprep.subr.mxu0 0.0
      %2285 = vmatpush2.msra.mxu0 0.0
      %2286 = vmatprep.mubr.f32.mxu0 0.0
      %2287 = vmatmul.mubr.f32.gmra.mxu0 %v2220
      %v2288 = vpop.f32.mrf.mxu0
      %v2289 = vadd.f32 0.0, %v2288
      %v2290 = vpop.f32.mrf.mxu0
      %v2291 = vadd.f32 0.0, %v2290
      %2292 = vdwg.mxu0
      %s2293 = scalar_lea.vmem %s11, 192
      %v2294 = vld [vmem:[%s2293] sm:$0xff]
      %v2295 = vld [vmem:[%s2293 + $0x8] sm:$0xff]
      %v2296 = vld [vmem:[%s2293 + $0x10] sm:$0xff]
      %v2297 = vld [vmem:[%s2293 + $0x18] sm:$0xff]
      %v2298 = vld [vmem:[%s2293 + $0x20] sm:$0xff]
      %v2299 = vld [vmem:[%s2293 + $0x28] sm:$0xff]
      %v2300 = vld [vmem:[%s2293 + $0x30] sm:$0xff]
      %v2301 = vld [vmem:[%s2293 + $0x38] sm:$0xff]
      %v2302 = vld [vmem:[%s2293 + $0x40] sm:$0xff]
      %v2303 = vld [vmem:[%s2293 + $0x48] sm:$0xff]
      %v2304 = vld [vmem:[%s2293 + $0x50] sm:$0xff]
      %v2305 = vld [vmem:[%s2293 + $0x58] sm:$0xff]
      %v2306 = vld [vmem:[%s2293 + $0x60] sm:$0xff]
      %v2307 = vld [vmem:[%s2293 + $0x68] sm:$0xff]
      %v2308 = vld [vmem:[%s2293 + $0x70] sm:$0xff]
      %v2309 = vld [vmem:[%s2293 + $0x78] sm:$0xff]
      %v2310 = vld [vmem:[%s2293 + $0x80] sm:$0xff]
      %v2311 = vld [vmem:[%s2293 + $0x88] sm:$0xff]
      %v2312 = vld [vmem:[%s2293 + $0x90] sm:$0xff]
      %v2313 = vld [vmem:[%s2293 + $0x98] sm:$0xff]
      %v2314 = vld [vmem:[%s2293 + $0xa0] sm:$0xff]
      %v2315 = vld [vmem:[%s2293 + $0xa8] sm:$0xff]
      %v2316 = vld [vmem:[%s2293 + $0xb0] sm:$0xff]
      %v2317 = vld [vmem:[%s2293 + $0xb8] sm:$0xff]
      %v2319 = vsel %vm745, %v2291, 0
      %2321 = vmatprep.subr.mxu0 0.0
      %2322 = vmatpush1.msra.mxu0 %v2309
      %2323 = vmatprep.subr.mxu0 0.0
      %2324 = vmatpush1.msra.mxu0 %v2308
      %2325 = vmatprep.subr.mxu0 0.0
      %2326 = vmatpush1.msra.mxu0 %v2307
      %2327 = vmatprep.subr.mxu0 0.0
      %2328 = vmatpush1.msra.mxu0 %v2306
      %2329 = vmatprep.subr.mxu0 0.0
      %2330 = vmatpush1.msra.mxu0 %v2305
      %2331 = vmatprep.subr.mxu0 0.0
      %2332 = vmatpush1.msra.mxu0 %v2304
      %2333 = vmatprep.subr.mxu0 0.0
      %2334 = vmatpush1.msra.mxu0 %v2303
      %2335 = vmatprep.subr.mxu0 0.0
      %2336 = vmatpush1.msra.mxu0 %v2302
      %2337 = vmatprep.subr.mxu0 0.0
      %2338 = vmatpush1.msra.mxu0 %v2301
      %2339 = vmatprep.subr.mxu0 0.0
      %2340 = vmatpush1.msra.mxu0 %v2300
      %2341 = vmatprep.subr.mxu0 0.0
      %2342 = vmatpush1.msra.mxu0 %v2299
      %2343 = vmatprep.subr.mxu0 0.0
      %2344 = vmatpush1.msra.mxu0 %v2298
      %2345 = vmatprep.subr.mxu0 0.0
      %2346 = vmatpush1.msra.mxu0 %v2297
      %2347 = vmatprep.subr.mxu0 0.0
      %2348 = vmatpush1.msra.mxu0 %v2296
      %2349 = vmatprep.subr.mxu0 0.0
      %2350 = vmatpush1.msra.mxu0 %v2295
      %2351 = vmatprep.subr.mxu0 0.0
      %2352 = vmatpush1.msra.mxu0 %v2294
      %2353 = vmatprep.subr.mxu0 0.0
      %2354 = vmatpush2.msra.mxu0 0.0
      %2355 = vmatprep.subr.mxu0 0.0
      %2356 = vmatpush2.msra.mxu0 0.0
      %2357 = vmatprep.subr.mxu0 0.0
      %2358 = vmatpush2.msra.mxu0 0.0
      %2359 = vmatprep.subr.mxu0 0.0
      %2360 = vmatpush2.msra.mxu0 0.0
      %2361 = vmatprep.subr.mxu0 0.0
      %2362 = vmatpush2.msra.mxu0 0.0
      %2363 = vmatprep.subr.mxu0 0.0
      %2364 = vmatpush2.msra.mxu0 0.0
      %2365 = vmatprep.subr.mxu0 0.0
      %2366 = vmatpush2.msra.mxu0 0.0
      %2367 = vmatprep.subr.mxu0 0.0
      %2368 = vmatpush2.msra.mxu0 0.0
      %2369 = vmatprep.subr.mxu0 0.0
      %2370 = vmatpush2.msra.mxu0 %v2317
      %2371 = vmatprep.subr.mxu0 0.0
      %2372 = vmatpush2.msra.mxu0 %v2316
      %2373 = vmatprep.subr.mxu0 0.0
      %2374 = vmatpush2.msra.mxu0 %v2315
      %2375 = vmatprep.subr.mxu0 0.0
      %2376 = vmatpush2.msra.mxu0 %v2314
      %2377 = vmatprep.subr.mxu0 0.0
      %2378 = vmatpush2.msra.mxu0 %v2313
      %2379 = vmatprep.subr.mxu0 0.0
      %2380 = vmatpush2.msra.mxu0 %v2312
      %2381 = vmatprep.subr.mxu0 0.0
      %2382 = vmatpush2.msra.mxu0 %v2311
      %2383 = vmatprep.subr.mxu0 0.0
      %2384 = vmatpush2.msra.mxu0 %v2310
      %2385 = vmatprep.mubr.f32.mxu0 %v2319
      %2386 = vmatmul.mubr.f32.gmra.mxu0 %v2289
      %v2387 = vpop.f32.mrf.mxu0
      %v2388 = vadd.f32 0.0, %v2387
      %v2389 = vpop.f32.mrf.mxu0
      %2390 = vdwg.mxu0
      %v2392 = vsel %vm745, %v2191, 0
      %2394 = vmatprep.subr.mxu0 0.0
      %2395 = vmatpush1.msra.mxu0 %v2208
      %2396 = vmatprep.subr.mxu0 0.0
      %2397 = vmatpush1.msra.mxu0 %v2207
      %2398 = vmatprep.subr.mxu0 0.0
      %2399 = vmatpush1.msra.mxu0 %v2206
      %2400 = vmatprep.subr.mxu0 0.0
      %2401 = vmatpush1.msra.mxu0 %v2205
      %2402 = vmatprep.subr.mxu0 0.0
      %2403 = vmatpush1.msra.mxu0 %v2204
      %2404 = vmatprep.subr.mxu0 0.0
      %2405 = vmatpush1.msra.mxu0 %v2203
      %2406 = vmatprep.subr.mxu0 0.0
      %2407 = vmatpush1.msra.mxu0 %v2202
      %2408 = vmatprep.subr.mxu0 0.0
      %2409 = vmatpush1.msra.mxu0 %v2201
      %2410 = vmatprep.subr.mxu0 0.0
      %2411 = vmatpush1.msra.mxu0 %v2200
      %2412 = vmatprep.subr.mxu0 0.0
      %2413 = vmatpush1.msra.mxu0 %v2199
      %2414 = vmatprep.subr.mxu0 0.0
      %2415 = vmatpush1.msra.mxu0 %v2198
      %2416 = vmatprep.subr.mxu0 0.0
      %2417 = vmatpush1.msra.mxu0 %v2197
      %2418 = vmatprep.subr.mxu0 0.0
      %2419 = vmatpush1.msra.mxu0 %v2196
      %2420 = vmatprep.subr.mxu0 0.0
      %2421 = vmatpush1.msra.mxu0 %v2195
      %2422 = vmatprep.subr.mxu0 0.0
      %2423 = vmatpush1.msra.mxu0 %v2194
      %2424 = vmatprep.subr.mxu0 0.0
      %2425 = vmatpush1.msra.mxu0 %v2193
      %2426 = vmatprep.subr.mxu0 0.0
      %2427 = vmatpush2.msra.mxu0 0.0
      %2428 = vmatprep.subr.mxu0 0.0
      %2429 = vmatpush2.msra.mxu0 0.0
      %2430 = vmatprep.subr.mxu0 0.0
      %2431 = vmatpush2.msra.mxu0 0.0
      %2432 = vmatprep.subr.mxu0 0.0
      %2433 = vmatpush2.msra.mxu0 0.0
      %2434 = vmatprep.subr.mxu0 0.0
      %2435 = vmatpush2.msra.mxu0 0.0
      %2436 = vmatprep.subr.mxu0 0.0
      %2437 = vmatpush2.msra.mxu0 0.0
      %2438 = vmatprep.subr.mxu0 0.0
      %2439 = vmatpush2.msra.mxu0 0.0
      %2440 = vmatprep.subr.mxu0 0.0
      %2441 = vmatpush2.msra.mxu0 0.0
      %2442 = vmatprep.subr.mxu0 0.0
      %2443 = vmatpush2.msra.mxu0 %v2216
      %2444 = vmatprep.subr.mxu0 0.0
      %2445 = vmatpush2.msra.mxu0 %v2215
      %2446 = vmatprep.subr.mxu0 0.0
      %2447 = vmatpush2.msra.mxu0 %v2214
      %2448 = vmatprep.subr.mxu0 0.0
      %2449 = vmatpush2.msra.mxu0 %v2213
      %2450 = vmatprep.subr.mxu0 0.0
      %2451 = vmatpush2.msra.mxu0 %v2212
      %2452 = vmatprep.subr.mxu0 0.0
      %2453 = vmatpush2.msra.mxu0 %v2211
      %2454 = vmatprep.subr.mxu0 0.0
      %2455 = vmatpush2.msra.mxu0 %v2210
      %2456 = vmatprep.subr.mxu0 0.0
      %2457 = vmatpush2.msra.mxu0 %v2209
      %2458 = vmatprep.mubr.f32.mxu0 %v2392
      %2459 = vmatmul.mubr.f32.gmra.mxu0 %v2189
      %v2460 = vpop.f32.mrf.mxu0
      %v2461 = vadd.f32 %v2388, %v2460
      %v2462 = vpop.f32.mrf.mxu0
      %2463 = vdwg.mxu0
      %s2464 = scalar_lea.vmem %s10, 16
      %v2465 = vld [vmem:[%s2464] sm:$0xff]
      %v2467 = vsel %vm1220, %v2465, 0
      %2469 = vmatprep.subr.mxu0 0.0
      %2470 = vmatpush1.msra.mxu0 0.0
      %2471 = vmatprep.subr.mxu0 0.0
      %2472 = vmatpush1.msra.mxu0 0.0
      %2473 = vmatprep.subr.mxu0 0.0
      %2474 = vmatpush1.msra.mxu0 0.0
      %2475 = vmatprep.subr.mxu0 0.0
      %2476 = vmatpush1.msra.mxu0 0.0
      %2477 = vmatprep.subr.mxu0 0.0
      %2478 = vmatpush1.msra.mxu0 0.0
      %2479 = vmatprep.subr.mxu0 0.0
      %2480 = vmatpush1.msra.mxu0 0.0
      %2481 = vmatprep.subr.mxu0 0.0
      %2482 = vmatpush1.msra.mxu0 0.0
      %2483 = vmatprep.subr.mxu0 0.0
      %2484 = vmatpush1.msra.mxu0 0.0
      %2485 = vmatprep.subr.mxu0 0.0
      %2486 = vmatpush1.msra.mxu0 0.0
      %2487 = vmatprep.subr.mxu0 0.0
      %2488 = vmatpush1.msra.mxu0 0.0
      %2489 = vmatprep.subr.mxu0 0.0
      %2490 = vmatpush1.msra.mxu0 0.0
      %2491 = vmatprep.subr.mxu0 0.0
      %2492 = vmatpush1.msra.mxu0 0.0
      %2493 = vmatprep.subr.mxu0 0.0
      %2494 = vmatpush1.msra.mxu0 0.0
      %2495 = vmatprep.subr.mxu0 0.0
      %2496 = vmatpush1.msra.mxu0 0.0
      %2497 = vmatprep.subr.mxu0 0.0
      %2498 = vmatpush1.msra.mxu0 0.0
      %2499 = vmatprep.subr.mxu0 %v2116
      %2500 = vmatpush1.msra.mxu0 %v2114
      %2501 = vmatprep.subr.mxu0 0.0
      %2502 = vmatpush2.msra.mxu0 0.0
      %2503 = vmatprep.subr.mxu0 0.0
      %2504 = vmatpush2.msra.mxu0 0.0
      %2505 = vmatprep.subr.mxu0 0.0
      %2506 = vmatpush2.msra.mxu0 0.0
      %2507 = vmatprep.subr.mxu0 0.0
      %2508 = vmatpush2.msra.mxu0 0.0
      %2509 = vmatprep.subr.mxu0 0.0
      %2510 = vmatpush2.msra.mxu0 0.0
      %2511 = vmatprep.subr.mxu0 0.0
      %2512 = vmatpush2.msra.mxu0 0.0
      %2513 = vmatprep.subr.mxu0 0.0
      %2514 = vmatpush2.msra.mxu0 0.0
      %2515 = vmatprep.subr.mxu0 0.0
      %2516 = vmatpush2.msra.mxu0 0.0
      %2517 = vmatprep.subr.mxu0 0.0
      %2518 = vmatpush2.msra.mxu0 0.0
      %2519 = vmatprep.subr.mxu0 0.0
      %2520 = vmatpush2.msra.mxu0 0.0
      %2521 = vmatprep.subr.mxu0 0.0
      %2522 = vmatpush2.msra.mxu0 0.0
      %2523 = vmatprep.subr.mxu0 0.0
      %2524 = vmatpush2.msra.mxu0 0.0
      %2525 = vmatprep.subr.mxu0 0.0
      %2526 = vmatpush2.msra.mxu0 0.0
      %2527 = vmatprep.subr.mxu0 0.0
      %2528 = vmatpush2.msra.mxu0 0.0
      %2529 = vmatprep.subr.mxu0 0.0
      %2530 = vmatpush2.msra.mxu0 0.0
      %2531 = vmatprep.subr.mxu0 0.0
      %2532 = vmatpush2.msra.mxu0 0.0
      %2533 = vmatprep.mubr.f32.mxu0 0.0
      %2534 = vmatmul.mubr.f32.gmra.mxu0 %v2467
      %v2535 = vpop.f32.mrf.mxu0
      %v2536 = vadd.f32 0.0, %v2535
      %v2537 = vpop.f32.mrf.mxu0
      %v2538 = vadd.f32 0.0, %v2537
      %2539 = vdwg.mxu0
      %s2540 = scalar_lea.vmem %s11, 384
      %v2541 = vld [vmem:[%s2540] sm:$0xff]
      %v2542 = vld [vmem:[%s2540 + $0x8] sm:$0xff]
      %v2543 = vld [vmem:[%s2540 + $0x10] sm:$0xff]
      %v2544 = vld [vmem:[%s2540 + $0x18] sm:$0xff]
      %v2545 = vld [vmem:[%s2540 + $0x20] sm:$0xff]
      %v2546 = vld [vmem:[%s2540 + $0x28] sm:$0xff]
      %v2547 = vld [vmem:[%s2540 + $0x30] sm:$0xff]
      %v2548 = vld [vmem:[%s2540 + $0x38] sm:$0xff]
      %v2549 = vld [vmem:[%s2540 + $0x40] sm:$0xff]
      %v2550 = vld [vmem:[%s2540 + $0x48] sm:$0xff]
      %v2551 = vld [vmem:[%s2540 + $0x50] sm:$0xff]
      %v2552 = vld [vmem:[%s2540 + $0x58] sm:$0xff]
      %v2553 = vld [vmem:[%s2540 + $0x60] sm:$0xff]
      %v2554 = vld [vmem:[%s2540 + $0x68] sm:$0xff]
      %v2555 = vld [vmem:[%s2540 + $0x70] sm:$0xff]
      %v2556 = vld [vmem:[%s2540 + $0x78] sm:$0xff]
      %v2557 = vld [vmem:[%s2540 + $0x80] sm:$0xff]
      %v2558 = vld [vmem:[%s2540 + $0x88] sm:$0xff]
      %v2559 = vld [vmem:[%s2540 + $0x90] sm:$0xff]
      %v2560 = vld [vmem:[%s2540 + $0x98] sm:$0xff]
      %v2561 = vld [vmem:[%s2540 + $0xa0] sm:$0xff]
      %v2562 = vld [vmem:[%s2540 + $0xa8] sm:$0xff]
      %v2563 = vld [vmem:[%s2540 + $0xb0] sm:$0xff]
      %v2564 = vld [vmem:[%s2540 + $0xb8] sm:$0xff]
      %v2566 = vsel %vm745, %v2538, 0
      %2568 = vmatprep.subr.mxu0 0.0
      %2569 = vmatpush1.msra.mxu0 %v2556
      %2570 = vmatprep.subr.mxu0 0.0
      %2571 = vmatpush1.msra.mxu0 %v2555
      %2572 = vmatprep.subr.mxu0 0.0
      %2573 = vmatpush1.msra.mxu0 %v2554
      %2574 = vmatprep.subr.mxu0 0.0
      %2575 = vmatpush1.msra.mxu0 %v2553
      %2576 = vmatprep.subr.mxu0 0.0
      %2577 = vmatpush1.msra.mxu0 %v2552
      %2578 = vmatprep.subr.mxu0 0.0
      %2579 = vmatpush1.msra.mxu0 %v2551
      %2580 = vmatprep.subr.mxu0 0.0
      %2581 = vmatpush1.msra.mxu0 %v2550
      %2582 = vmatprep.subr.mxu0 0.0
      %2583 = vmatpush1.msra.mxu0 %v2549
      %2584 = vmatprep.subr.mxu0 0.0
      %2585 = vmatpush1.msra.mxu0 %v2548
      %2586 = vmatprep.subr.mxu0 0.0
      %2587 = vmatpush1.msra.mxu0 %v2547
      %2588 = vmatprep.subr.mxu0 0.0
      %2589 = vmatpush1.msra.mxu0 %v2546
      %2590 = vmatprep.subr.mxu0 0.0
      %2591 = vmatpush1.msra.mxu0 %v2545
      %2592 = vmatprep.subr.mxu0 0.0
      %2593 = vmatpush1.msra.mxu0 %v2544
      %2594 = vmatprep.subr.mxu0 0.0
      %2595 = vmatpush1.msra.mxu0 %v2543
      %2596 = vmatprep.subr.mxu0 0.0
      %2597 = vmatpush1.msra.mxu0 %v2542
      %2598 = vmatprep.subr.mxu0 0.0
      %2599 = vmatpush1.msra.mxu0 %v2541
      %2600 = vmatprep.subr.mxu0 0.0
      %2601 = vmatpush2.msra.mxu0 0.0
      %2602 = vmatprep.subr.mxu0 0.0
      %2603 = vmatpush2.msra.mxu0 0.0
      %2604 = vmatprep.subr.mxu0 0.0
      %2605 = vmatpush2.msra.mxu0 0.0
      %2606 = vmatprep.subr.mxu0 0.0
      %2607 = vmatpush2.msra.mxu0 0.0
      %2608 = vmatprep.subr.mxu0 0.0
      %2609 = vmatpush2.msra.mxu0 0.0
      %2610 = vmatprep.subr.mxu0 0.0
      %2611 = vmatpush2.msra.mxu0 0.0
      %2612 = vmatprep.subr.mxu0 0.0
      %2613 = vmatpush2.msra.mxu0 0.0
      %2614 = vmatprep.subr.mxu0 0.0
      %2615 = vmatpush2.msra.mxu0 0.0
      %2616 = vmatprep.subr.mxu0 0.0
      %2617 = vmatpush2.msra.mxu0 %v2564
      %2618 = vmatprep.subr.mxu0 0.0
      %2619 = vmatpush2.msra.mxu0 %v2563
      %2620 = vmatprep.subr.mxu0 0.0
      %2621 = vmatpush2.msra.mxu0 %v2562
      %2622 = vmatprep.subr.mxu0 0.0
      %2623 = vmatpush2.msra.mxu0 %v2561
      %2624 = vmatprep.subr.mxu0 0.0
      %2625 = vmatpush2.msra.mxu0 %v2560
      %2626 = vmatprep.subr.mxu0 0.0
      %2627 = vmatpush2.msra.mxu0 %v2559
      %2628 = vmatprep.subr.mxu0 0.0
      %2629 = vmatpush2.msra.mxu0 %v2558
      %2630 = vmatprep.subr.mxu0 0.0
      %2631 = vmatpush2.msra.mxu0 %v2557
      %2632 = vmatprep.mubr.f32.mxu0 %v2566
      %2633 = vmatmul.mubr.f32.gmra.mxu0 %v2536
      %v2634 = vpop.f32.mrf.mxu0
      %v2635 = vadd.f32 0.0, %v2634
      %v2636 = vpop.f32.mrf.mxu0
      %2637 = vdwg.mxu0
      %v2638 = vadd.f32 %v2461, %v2635
      %v2639 = vld [vmem:[%s12] sm:$0x1]
      %v2641 = vlaneseq
      %v2642 = vshrl.u32 %v2641, 7
      %v2643 = vsub.s32 0, %v2642
      %v2644 = vrot.slane %v2639, %v2643
      %v2646 = vadd.f32 %v2638, %v2644
      %v2647 = vmax.f32 %v2646, 0.0
      %v2648 = vld [vmem:[%s13] sm:$0xff]
      %v2649 = vld [vmem:[%s13 + $0x8] sm:$0xff]
      %v2651 = vsel %vm1220, %v2648, 0
      %v2654 = vsel %vm1220, %v2649, 0
      %2656 = vmatprep.subr.mxu0 0.0
      %2657 = vmatpush1.msra.mxu0 0.0
      %2658 = vmatprep.subr.mxu0 0.0
      %2659 = vmatpush1.msra.mxu0 0.0
      %2660 = vmatprep.subr.mxu0 0.0
      %2661 = vmatpush1.msra.mxu0 0.0
      %2662 = vmatprep.subr.mxu0 0.0
      %2663 = vmatpush1.msra.mxu0 0.0
      %2664 = vmatprep.subr.mxu0 0.0
      %2665 = vmatpush1.msra.mxu0 0.0
      %2666 = vmatprep.subr.mxu0 0.0
      %2667 = vmatpush1.msra.mxu0 0.0
      %2668 = vmatprep.subr.mxu0 0.0
      %2669 = vmatpush1.msra.mxu0 0.0
      %2670 = vmatprep.subr.mxu0 0.0
      %2671 = vmatpush1.msra.mxu0 0.0
      %2672 = vmatprep.subr.mxu0 0.0
      %2673 = vmatpush1.msra.mxu0 0.0
      %2674 = vmatprep.subr.mxu0 0.0
      %2675 = vmatpush1.msra.mxu0 0.0
      %2676 = vmatprep.subr.mxu0 0.0
      %2677 = vmatpush1.msra.mxu0 0.0
      %2678 = vmatprep.subr.mxu0 0.0
      %2679 = vmatpush1.msra.mxu0 0.0
      %2680 = vmatprep.subr.mxu0 0.0
      %2681 = vmatpush1.msra.mxu0 0.0
      %2682 = vmatprep.subr.mxu0 0.0
      %2683 = vmatpush1.msra.mxu0 0.0
      %2684 = vmatprep.subr.mxu0 0.0
      %2685 = vmatpush1.msra.mxu0 0.0
      %2686 = vmatprep.subr.mxu0 0.0
      %2687 = vmatpush1.msra.mxu0 %v2647
      %2688 = vmatprep.subr.mxu0 0.0
      %2689 = vmatpush2.msra.mxu0 0.0
      %2690 = vmatprep.subr.mxu0 0.0
      %2691 = vmatpush2.msra.mxu0 0.0
      %2692 = vmatprep.subr.mxu0 0.0
      %2693 = vmatpush2.msra.mxu0 0.0
      %2694 = vmatprep.subr.mxu0 0.0
      %2695 = vmatpush2.msra.mxu0 0.0
      %2696 = vmatprep.subr.mxu0 0.0
      %2697 = vmatpush2.msra.mxu0 0.0
      %2698 = vmatprep.subr.mxu0 0.0
      %2699 = vmatpush2.msra.mxu0 0.0
      %2700 = vmatprep.subr.mxu0 0.0
      %2701 = vmatpush2.msra.mxu0 0.0
      %2702 = vmatprep.subr.mxu0 0.0
      %2703 = vmatpush2.msra.mxu0 0.0
      %2704 = vmatprep.subr.mxu0 0.0
      %2705 = vmatpush2.msra.mxu0 0.0
      %2706 = vmatprep.subr.mxu0 0.0
      %2707 = vmatpush2.msra.mxu0 0.0
      %2708 = vmatprep.subr.mxu0 0.0
      %2709 = vmatpush2.msra.mxu0 0.0
      %2710 = vmatprep.subr.mxu0 0.0
      %2711 = vmatpush2.msra.mxu0 0.0
      %2712 = vmatprep.subr.mxu0 0.0
      %2713 = vmatpush2.msra.mxu0 0.0
      %2714 = vmatprep.subr.mxu0 0.0
      %2715 = vmatpush2.msra.mxu0 0.0
      %2716 = vmatprep.subr.mxu0 0.0
      %2717 = vmatpush2.msra.mxu0 0.0
      %2718 = vmatprep.subr.mxu0 0.0
      %2719 = vmatpush2.msra.mxu0 0.0
      %2720 = vmatprep.mubr.f32.mxu0 0.0
      %2721 = vmatmul.mubr.f32.gmra.mxu0 %v2651
      %v2722 = vpop.f32.mrf.mxu0
      %v2723 = vadd.f32 0.0, %v2722
      %v2724 = vpop.f32.mrf.mxu0
      %2725 = vmatprep.mubr.f32.mxu0 0.0
      %2726 = vmatmul.mubr.f32.gmra.mxu0 %v2654
      %v2727 = vpop.f32.mrf.mxu0
      %v2728 = vadd.f32 0.0, %v2727
      %v2729 = vpop.f32.mrf.mxu0
      %2730 = vdwg.mxu0
      %v2731 = vld [vmem:[%s14] sm:$0xff]
      %v2732 = vld [vmem:[%s14 + $0x8] sm:$0xff]
      %v2733 = vld [vmem:[%s14 + $0x10] sm:$0xff]
      %v2734 = vld [vmem:[%s14 + $0x18] sm:$0xff]
      %v2735 = vld [vmem:[%s14 + $0x20] sm:$0xff]
      %v2736 = vld [vmem:[%s14 + $0x28] sm:$0xff]
      %v2737 = vld [vmem:[%s14 + $0x30] sm:$0xff]
      %v2738 = vld [vmem:[%s14 + $0x38] sm:$0xff]
      %v2740 = vsel %vm745, %v2723, 0
      %v2743 = vsel %vm745, %v2728, 0
      %2745 = vmatprep.subr.mxu0 0.0
      %2746 = vmatpush1.msra.mxu0 0.0
      %2747 = vmatprep.subr.mxu0 0.0
      %2748 = vmatpush1.msra.mxu0 0.0
      %2749 = vmatprep.subr.mxu0 0.0
      %2750 = vmatpush1.msra.mxu0 0.0
      %2751 = vmatprep.subr.mxu0 0.0
      %2752 = vmatpush1.msra.mxu0 0.0
      %2753 = vmatprep.subr.mxu0 0.0
      %2754 = vmatpush1.msra.mxu0 0.0
      %2755 = vmatprep.subr.mxu0 0.0
      %2756 = vmatpush1.msra.mxu0 0.0
      %2757 = vmatprep.subr.mxu0 0.0
      %2758 = vmatpush1.msra.mxu0 0.0
      %2759 = vmatprep.subr.mxu0 0.0
      %2760 = vmatpush1.msra.mxu0 0.0
      %2761 = vmatprep.subr.mxu0 0.0
      %2762 = vmatpush1.msra.mxu0 %v2738
      %2763 = vmatprep.subr.mxu0 0.0
      %2764 = vmatpush1.msra.mxu0 %v2737
      %2765 = vmatprep.subr.mxu0 0.0
      %2766 = vmatpush1.msra.mxu0 %v2736
      %2767 = vmatprep.subr.mxu0 0.0
      %2768 = vmatpush1.msra.mxu0 %v2735
      %2769 = vmatprep.subr.mxu0 0.0
      %2770 = vmatpush1.msra.mxu0 %v2734
      %2771 = vmatprep.subr.mxu0 0.0
      %2772 = vmatpush1.msra.mxu0 %v2733
      %2773 = vmatprep.subr.mxu0 0.0
      %2774 = vmatpush1.msra.mxu0 %v2732
      %2775 = vmatprep.subr.mxu0 0.0
      %2776 = vmatpush1.msra.mxu0 %v2731
      %2777 = vmatprep.subr.mxu0 0.0
      %2778 = vmatpush2.msra.mxu0 0.0
      %2779 = vmatprep.subr.mxu0 0.0
      %2780 = vmatpush2.msra.mxu0 0.0
      %2781 = vmatprep.subr.mxu0 0.0
      %2782 = vmatpush2.msra.mxu0 0.0
      %2783 = vmatprep.subr.mxu0 0.0
      %2784 = vmatpush2.msra.mxu0 0.0
      %2785 = vmatprep.subr.mxu0 0.0
      %2786 = vmatpush2.msra.mxu0 0.0
      %2787 = vmatprep.subr.mxu0 0.0
      %2788 = vmatpush2.msra.mxu0 0.0
      %2789 = vmatprep.subr.mxu0 0.0
      %2790 = vmatpush2.msra.mxu0 0.0
      %2791 = vmatprep.subr.mxu0 0.0
      %2792 = vmatpush2.msra.mxu0 0.0
      %2793 = vmatprep.subr.mxu0 0.0
      %2794 = vmatpush2.msra.mxu0 0.0
      %2795 = vmatprep.subr.mxu0 0.0
      %2796 = vmatpush2.msra.mxu0 0.0
      %2797 = vmatprep.subr.mxu0 0.0
      %2798 = vmatpush2.msra.mxu0 0.0
      %2799 = vmatprep.subr.mxu0 0.0
      %2800 = vmatpush2.msra.mxu0 0.0
      %2801 = vmatprep.subr.mxu0 0.0
      %2802 = vmatpush2.msra.mxu0 0.0
      %2803 = vmatprep.subr.mxu0 0.0
      %2804 = vmatpush2.msra.mxu0 0.0
      %2805 = vmatprep.subr.mxu0 0.0
      %2806 = vmatpush2.msra.mxu0 0.0
      %2807 = vmatprep.subr.mxu0 0.0
      %2808 = vmatpush2.msra.mxu0 0.0
      %2809 = vmatprep.mubr.f32.mxu0 0.0
      %2810 = vmatmul.mubr.f32.gmra.mxu0 %v2740
      %v2811 = vpop.f32.mrf.mxu0
      %v2812 = vadd.f32 0.0, %v2811
      %v2813 = vpop.f32.mrf.mxu0
      %2814 = vmatprep.mubr.f32.mxu0 0.0
      %2815 = vmatmul.mubr.f32.gmra.mxu0 %v2743
      %v2816 = vpop.f32.mrf.mxu0
      %v2817 = vadd.f32 0.0, %v2816
      %v2818 = vpop.f32.mrf.mxu0
      %2819 = vdwg.mxu0
      %v2820 = vld [vmem:[%s15] sm:$0xff]
      %v2821 = vld [vmem:[%s15 + $0x8] sm:$0xff]
      %v2823 = vsel %vm579, %v2820, 0
      %v2826 = vsel %vm579, %v2821, 0
      %2828 = vmatprep.subr.mxu0 0.0
      %2829 = vmatpush1.msra.mxu0 0.0
      %2830 = vmatprep.subr.mxu0 0.0
      %2831 = vmatpush1.msra.mxu0 0.0
      %2832 = vmatprep.subr.mxu0 0.0
      %2833 = vmatpush1.msra.mxu0 0.0
      %2834 = vmatprep.subr.mxu0 0.0
      %2835 = vmatpush1.msra.mxu0 0.0
      %2836 = vmatprep.subr.mxu0 0.0
      %2837 = vmatpush1.msra.mxu0 0.0
      %2838 = vmatprep.subr.mxu0 0.0
      %2839 = vmatpush1.msra.mxu0 0.0
      %2840 = vmatprep.subr.mxu0 0.0
      %2841 = vmatpush1.msra.mxu0 0.0
      %2842 = vmatprep.subr.mxu0 0.0
      %2843 = vmatpush1.msra.mxu0 0.0
      %2844 = vmatprep.subr.mxu0 0.0
      %2845 = vmatpush1.msra.mxu0 0.0
      %2846 = vmatprep.subr.mxu0 0.0
      %2847 = vmatpush1.msra.mxu0 0.0
      %2848 = vmatprep.subr.mxu0 0.0
      %2849 = vmatpush1.msra.mxu0 0.0
      %2850 = vmatprep.subr.mxu0 0.0
      %2851 = vmatpush1.msra.mxu0 0.0
      %2852 = vmatprep.subr.mxu0 0.0
      %2853 = vmatpush1.msra.mxu0 0.0
      %2854 = vmatprep.subr.mxu0 0.0
      %2855 = vmatpush1.msra.mxu0 0.0
      %2856 = vmatprep.subr.mxu0 0.0
      %2857 = vmatpush1.msra.mxu0 %v2817
      %2858 = vmatprep.subr.mxu0 0.0
      %2859 = vmatpush1.msra.mxu0 %v2812
      %2860 = vmatprep.subr.mxu0 0.0
      %2861 = vmatpush2.msra.mxu0 0.0
      %2862 = vmatprep.subr.mxu0 0.0
      %2863 = vmatpush2.msra.mxu0 0.0
      %2864 = vmatprep.subr.mxu0 0.0
      %2865 = vmatpush2.msra.mxu0 0.0
      %2866 = vmatprep.subr.mxu0 0.0
      %2867 = vmatpush2.msra.mxu0 0.0
      %2868 = vmatprep.subr.mxu0 0.0
      %2869 = vmatpush2.msra.mxu0 0.0
      %2870 = vmatprep.subr.mxu0 0.0
      %2871 = vmatpush2.msra.mxu0 0.0
      %2872 = vmatprep.subr.mxu0 0.0
      %2873 = vmatpush2.msra.mxu0 0.0
      %2874 = vmatprep.subr.mxu0 0.0
      %2875 = vmatpush2.msra.mxu0 0.0
      %2876 = vmatprep.subr.mxu0 0.0
      %2877 = vmatpush2.msra.mxu0 0.0
      %2878 = vmatprep.subr.mxu0 0.0
      %2879 = vmatpush2.msra.mxu0 0.0
      %2880 = vmatprep.subr.mxu0 0.0
      %2881 = vmatpush2.msra.mxu0 0.0
      %2882 = vmatprep.subr.mxu0 0.0
      %2883 = vmatpush2.msra.mxu0 0.0
      %2884 = vmatprep.subr.mxu0 0.0
      %2885 = vmatpush2.msra.mxu0 0.0
      %2886 = vmatprep.subr.mxu0 0.0
      %2887 = vmatpush2.msra.mxu0 0.0
      %2888 = vmatprep.subr.mxu0 0.0
      %2889 = vmatpush2.msra.mxu0 0.0
      %2890 = vmatprep.subr.mxu0 0.0
      %2891 = vmatpush2.msra.mxu0 0.0
      %2892 = vmatprep.mubr.f32.mxu0 0.0
      %2893 = vmatmul.mubr.f32.gmra.mxu0 %v2823
      %v2894 = vpop.f32.mrf.mxu0
      %v2895 = vadd.f32 0.0, %v2894
      %v2896 = vpop.f32.mrf.mxu0
      %2897 = vmatprep.mubr.f32.mxu0 0.0
      %2898 = vmatmul.mubr.f32.gmra.mxu0 %v2826
      %v2899 = vpop.f32.mrf.mxu0
      %v2900 = vadd.f32 0.0, %v2899
      %v2901 = vpop.f32.mrf.mxu0
      %2902 = vdwg.mxu0
      %v2903 = vld [vmem:[%s16] sm:$0xff]
      %v2904 = vld [vmem:[%s16 + $0x8] sm:$0xff]
      %v2905 = vld [vmem:[%s16 + $0x10] sm:$0xff]
      %v2906 = vld [vmem:[%s16 + $0x18] sm:$0xff]
      %v2907 = vld [vmem:[%s16 + $0x20] sm:$0xff]
      %v2908 = vld [vmem:[%s16 + $0x28] sm:$0xff]
      %v2909 = vld [vmem:[%s16 + $0x30] sm:$0xff]
      %v2910 = vld [vmem:[%s16 + $0x38] sm:$0xff]
      %v2911 = vld [vmem:[%s16 + $0x40] sm:$0xff]
      %v2912 = vld [vmem:[%s16 + $0x48] sm:$0xff]
      %v2913 = vld [vmem:[%s16 + $0x50] sm:$0xff]
      %v2914 = vld [vmem:[%s16 + $0x58] sm:$0xff]
      %v2915 = vld [vmem:[%s16 + $0x60] sm:$0xff]
      %v2916 = vld [vmem:[%s16 + $0x68] sm:$0xff]
      %v2917 = vld [vmem:[%s16 + $0x70] sm:$0xff]
      %v2918 = vld [vmem:[%s16 + $0x78] sm:$0xff]
      %s2919 = scalar_lea.vmem %s15, 16
      %v2920 = vld [vmem:[%s2919] sm:$0xff]
      %v2921 = vld [vmem:[%s2919 + $0x8] sm:$0xff]
      %v2923 = vsel %vm579, %v2920, 0
      %v2926 = vsel %vm579, %v2921, 0
      %2928 = vmatprep.subr.mxu0 0.0
      %2929 = vmatpush1.msra.mxu0 0.0
      %2930 = vmatprep.subr.mxu0 0.0
      %2931 = vmatpush1.msra.mxu0 0.0
      %2932 = vmatprep.subr.mxu0 0.0
      %2933 = vmatpush1.msra.mxu0 0.0
      %2934 = vmatprep.subr.mxu0 0.0
      %2935 = vmatpush1.msra.mxu0 0.0
      %2936 = vmatprep.subr.mxu0 0.0
      %2937 = vmatpush1.msra.mxu0 0.0
      %2938 = vmatprep.subr.mxu0 0.0
      %2939 = vmatpush1.msra.mxu0 0.0
      %2940 = vmatprep.subr.mxu0 0.0
      %2941 = vmatpush1.msra.mxu0 0.0
      %2942 = vmatprep.subr.mxu0 0.0
      %2943 = vmatpush1.msra.mxu0 0.0
      %2944 = vmatprep.subr.mxu0 0.0
      %2945 = vmatpush1.msra.mxu0 0.0
      %2946 = vmatprep.subr.mxu0 0.0
      %2947 = vmatpush1.msra.mxu0 0.0
      %2948 = vmatprep.subr.mxu0 0.0
      %2949 = vmatpush1.msra.mxu0 0.0
      %2950 = vmatprep.subr.mxu0 0.0
      %2951 = vmatpush1.msra.mxu0 0.0
      %2952 = vmatprep.subr.mxu0 0.0
      %2953 = vmatpush1.msra.mxu0 0.0
      %2954 = vmatprep.subr.mxu0 0.0
      %2955 = vmatpush1.msra.mxu0 0.0
      %2956 = vmatprep.subr.mxu0 0.0
      %2957 = vmatpush1.msra.mxu0 %v2817
      %2958 = vmatprep.subr.mxu0 0.0
      %2959 = vmatpush1.msra.mxu0 %v2812
      %2960 = vmatprep.subr.mxu0 0.0
      %2961 = vmatpush2.msra.mxu0 0.0
      %2962 = vmatprep.subr.mxu0 0.0
      %2963 = vmatpush2.msra.mxu0 0.0
      %2964 = vmatprep.subr.mxu0 0.0
      %2965 = vmatpush2.msra.mxu0 0.0
      %2966 = vmatprep.subr.mxu0 0.0
      %2967 = vmatpush2.msra.mxu0 0.0
      %2968 = vmatprep.subr.mxu0 0.0
      %2969 = vmatpush2.msra.mxu0 0.0
      %2970 = vmatprep.subr.mxu0 0.0
      %2971 = vmatpush2.msra.mxu0 0.0
      %2972 = vmatprep.subr.mxu0 0.0
      %2973 = vmatpush2.msra.mxu0 0.0
      %2974 = vmatprep.subr.mxu0 0.0
      %2975 = vmatpush2.msra.mxu0 0.0
      %2976 = vmatprep.subr.mxu0 0.0
      %2977 = vmatpush2.msra.mxu0 0.0
      %2978 = vmatprep.subr.mxu0 0.0
      %2979 = vmatpush2.msra.mxu0 0.0
      %2980 = vmatprep.subr.mxu0 0.0
      %2981 = vmatpush2.msra.mxu0 0.0
      %2982 = vmatprep.subr.mxu0 0.0
      %2983 = vmatpush2.msra.mxu0 0.0
      %2984 = vmatprep.subr.mxu0 0.0
      %2985 = vmatpush2.msra.mxu0 0.0
      %2986 = vmatprep.subr.mxu0 0.0
      %2987 = vmatpush2.msra.mxu0 0.0
      %2988 = vmatprep.subr.mxu0 0.0
      %2989 = vmatpush2.msra.mxu0 0.0
      %2990 = vmatprep.subr.mxu0 0.0
      %2991 = vmatpush2.msra.mxu0 0.0
      %2992 = vmatprep.mubr.f32.mxu0 0.0
      %2993 = vmatmul.mubr.f32.gmra.mxu0 %v2923
      %v2994 = vpop.f32.mrf.mxu0
      %v2995 = vadd.f32 0.0, %v2994
      %v2996 = vpop.f32.mrf.mxu0
      %2997 = vmatprep.mubr.f32.mxu0 0.0
      %2998 = vmatmul.mubr.f32.gmra.mxu0 %v2926
      %v2999 = vpop.f32.mrf.mxu0
      %v3000 = vadd.f32 0.0, %v2999
      %v3001 = vpop.f32.mrf.mxu0
      %3002 = vdwg.mxu0
      %s3003 = scalar_lea.vmem %s16, 128
      %v3004 = vld [vmem:[%s3003] sm:$0xff]
      %v3005 = vld [vmem:[%s3003 + $0x8] sm:$0xff]
      %v3006 = vld [vmem:[%s3003 + $0x10] sm:$0xff]
      %v3007 = vld [vmem:[%s3003 + $0x18] sm:$0xff]
      %v3008 = vld [vmem:[%s3003 + $0x20] sm:$0xff]
      %v3009 = vld [vmem:[%s3003 + $0x28] sm:$0xff]
      %v3010 = vld [vmem:[%s3003 + $0x30] sm:$0xff]
      %v3011 = vld [vmem:[%s3003 + $0x38] sm:$0xff]
      %v3012 = vld [vmem:[%s3003 + $0x40] sm:$0xff]
      %v3013 = vld [vmem:[%s3003 + $0x48] sm:$0xff]
      %v3014 = vld [vmem:[%s3003 + $0x50] sm:$0xff]
      %v3015 = vld [vmem:[%s3003 + $0x58] sm:$0xff]
      %v3016 = vld [vmem:[%s3003 + $0x60] sm:$0xff]
      %v3017 = vld [vmem:[%s3003 + $0x68] sm:$0xff]
      %v3018 = vld [vmem:[%s3003 + $0x70] sm:$0xff]
      %v3019 = vld [vmem:[%s3003 + $0x78] sm:$0xff]
      %3020 = vmatprep.subr.mxu0 0.0
      %3021 = vmatpush1.msra.mxu0 %v3019
      %3022 = vmatprep.subr.mxu0 0.0
      %3023 = vmatpush1.msra.mxu0 %v3018
      %3024 = vmatprep.subr.mxu0 0.0
      %3025 = vmatpush1.msra.mxu0 %v3017
      %3026 = vmatprep.subr.mxu0 0.0
      %3027 = vmatpush1.msra.mxu0 %v3016
      %3028 = vmatprep.subr.mxu0 0.0
      %3029 = vmatpush1.msra.mxu0 %v3015
      %3030 = vmatprep.subr.mxu0 0.0
      %3031 = vmatpush1.msra.mxu0 %v3014
      %3032 = vmatprep.subr.mxu0 0.0
      %3033 = vmatpush1.msra.mxu0 %v3013
      %3034 = vmatprep.subr.mxu0 0.0
      %3035 = vmatpush1.msra.mxu0 %v3012
      %3036 = vmatprep.subr.mxu0 0.0
      %3037 = vmatpush1.msra.mxu0 %v3011
      %3038 = vmatprep.subr.mxu0 0.0
      %3039 = vmatpush1.msra.mxu0 %v3010
      %3040 = vmatprep.subr.mxu0 0.0
      %3041 = vmatpush1.msra.mxu0 %v3009
      %3042 = vmatprep.subr.mxu0 0.0
      %3043 = vmatpush1.msra.mxu0 %v3008
      %3044 = vmatprep.subr.mxu0 0.0
      %3045 = vmatpush1.msra.mxu0 %v3007
      %3046 = vmatprep.subr.mxu0 0.0
      %3047 = vmatpush1.msra.mxu0 %v3006
      %3048 = vmatprep.subr.mxu0 0.0
      %3049 = vmatpush1.msra.mxu0 %v3005
      %3050 = vmatprep.subr.mxu0 0.0
      %3051 = vmatpush1.msra.mxu0 %v3004
      %3052 = vmatprep.subr.mxu0 0.0
      %3053 = vmatpush2.msra.mxu0 0.0
      %3054 = vmatprep.subr.mxu0 0.0
      %3055 = vmatpush2.msra.mxu0 0.0
      %3056 = vmatprep.subr.mxu0 0.0
      %3057 = vmatpush2.msra.mxu0 0.0
      %3058 = vmatprep.subr.mxu0 0.0
      %3059 = vmatpush2.msra.mxu0 0.0
      %3060 = vmatprep.subr.mxu0 0.0
      %3061 = vmatpush2.msra.mxu0 0.0
      %3062 = vmatprep.subr.mxu0 0.0
      %3063 = vmatpush2.msra.mxu0 0.0
      %3064 = vmatprep.subr.mxu0 0.0
      %3065 = vmatpush2.msra.mxu0 0.0
      %3066 = vmatprep.subr.mxu0 0.0
      %3067 = vmatpush2.msra.mxu0 0.0
      %3068 = vmatprep.subr.mxu0 0.0
      %3069 = vmatpush2.msra.mxu0 0.0
      %3070 = vmatprep.subr.mxu0 0.0
      %3071 = vmatpush2.msra.mxu0 0.0
      %3072 = vmatprep.subr.mxu0 0.0
      %3073 = vmatpush2.msra.mxu0 0.0
      %3074 = vmatprep.subr.mxu0 0.0
      %3075 = vmatpush2.msra.mxu0 0.0
      %3076 = vmatprep.subr.mxu0 0.0
      %3077 = vmatpush2.msra.mxu0 0.0
      %3078 = vmatprep.subr.mxu0 0.0
      %3079 = vmatpush2.msra.mxu0 0.0
      %3080 = vmatprep.subr.mxu0 0.0
      %3081 = vmatpush2.msra.mxu0 0.0
      %3082 = vmatprep.subr.mxu0 0.0
      %3083 = vmatpush2.msra.mxu0 0.0
      %3084 = vmatprep.mubr.f32.mxu0 0.0
      %3085 = vmatmul.mubr.f32.gmra.mxu0 %v2995
      %v3086 = vpop.f32.mrf.mxu0
      %v3087 = vadd.f32 0.0, %v3086
      %v3088 = vpop.f32.mrf.mxu0
      %3089 = vmatprep.mubr.f32.mxu0 0.0
      %3090 = vmatmul.mubr.f32.gmra.mxu0 %v3000
      %v3091 = vpop.f32.mrf.mxu0
      %v3092 = vadd.f32 0.0, %v3091
      %v3093 = vpop.f32.mrf.mxu0
      %3094 = vdwg.mxu0
      %3095 = vmatprep.subr.mxu0 0.0
      %3096 = vmatpush1.msra.mxu0 %v2918
      %3097 = vmatprep.subr.mxu0 0.0
      %3098 = vmatpush1.msra.mxu0 %v2917
      %3099 = vmatprep.subr.mxu0 0.0
      %3100 = vmatpush1.msra.mxu0 %v2916
      %3101 = vmatprep.subr.mxu0 0.0
      %3102 = vmatpush1.msra.mxu0 %v2915
      %3103 = vmatprep.subr.mxu0 0.0
      %3104 = vmatpush1.msra.mxu0 %v2914
      %3105 = vmatprep.subr.mxu0 0.0
      %3106 = vmatpush1.msra.mxu0 %v2913
      %3107 = vmatprep.subr.mxu0 0.0
      %3108 = vmatpush1.msra.mxu0 %v2912
      %3109 = vmatprep.subr.mxu0 0.0
      %3110 = vmatpush1.msra.mxu0 %v2911
      %3111 = vmatprep.subr.mxu0 0.0
      %3112 = vmatpush1.msra.mxu0 %v2910
      %3113 = vmatprep.subr.mxu0 0.0
      %3114 = vmatpush1.msra.mxu0 %v2909
      %3115 = vmatprep.subr.mxu0 0.0
      %3116 = vmatpush1.msra.mxu0 %v2908
      %3117 = vmatprep.subr.mxu0 0.0
      %3118 = vmatpush1.msra.mxu0 %v2907
      %3119 = vmatprep.subr.mxu0 0.0
      %3120 = vmatpush1.msra.mxu0 %v2906
      %3121 = vmatprep.subr.mxu0 0.0
      %3122 = vmatpush1.msra.mxu0 %v2905
      %3123 = vmatprep.subr.mxu0 0.0
      %3124 = vmatpush1.msra.mxu0 %v2904
      %3125 = vmatprep.subr.mxu0 0.0
      %3126 = vmatpush1.msra.mxu0 %v2903
      %3127 = vmatprep.subr.mxu0 0.0
      %3128 = vmatpush2.msra.mxu0 0.0
      %3129 = vmatprep.subr.mxu0 0.0
      %3130 = vmatpush2.msra.mxu0 0.0
      %3131 = vmatprep.subr.mxu0 0.0
      %3132 = vmatpush2.msra.mxu0 0.0
      %3133 = vmatprep.subr.mxu0 0.0
      %3134 = vmatpush2.msra.mxu0 0.0
      %3135 = vmatprep.subr.mxu0 0.0
      %3136 = vmatpush2.msra.mxu0 0.0
      %3137 = vmatprep.subr.mxu0 0.0
      %3138 = vmatpush2.msra.mxu0 0.0
      %3139 = vmatprep.subr.mxu0 0.0
      %3140 = vmatpush2.msra.mxu0 0.0
      %3141 = vmatprep.subr.mxu0 0.0
      %3142 = vmatpush2.msra.mxu0 0.0
      %3143 = vmatprep.subr.mxu0 0.0
      %3144 = vmatpush2.msra.mxu0 0.0
      %3145 = vmatprep.subr.mxu0 0.0
      %3146 = vmatpush2.msra.mxu0 0.0
      %3147 = vmatprep.subr.mxu0 0.0
      %3148 = vmatpush2.msra.mxu0 0.0
      %3149 = vmatprep.subr.mxu0 0.0
      %3150 = vmatpush2.msra.mxu0 0.0
      %3151 = vmatprep.subr.mxu0 0.0
      %3152 = vmatpush2.msra.mxu0 0.0
      %3153 = vmatprep.subr.mxu0 0.0
      %3154 = vmatpush2.msra.mxu0 0.0
      %3155 = vmatprep.subr.mxu0 0.0
      %3156 = vmatpush2.msra.mxu0 0.0
      %3157 = vmatprep.subr.mxu0 0.0
      %3158 = vmatpush2.msra.mxu0 0.0
      %3159 = vmatprep.mubr.f32.mxu0 0.0
      %3160 = vmatmul.mubr.f32.gmra.mxu0 %v2895
      %v3161 = vpop.f32.mrf.mxu0
      %v3162 = vadd.f32 %v3087, %v3161
      %v3163 = vpop.f32.mrf.mxu0
      %3164 = vmatprep.mubr.f32.mxu0 0.0
      %3165 = vmatmul.mubr.f32.gmra.mxu0 %v2900
      %v3166 = vpop.f32.mrf.mxu0
      %v3167 = vadd.f32 %v3092, %v3166
      %v3168 = vpop.f32.mrf.mxu0
      %3169 = vdwg.mxu0
      %s3170 = scalar_lea.vmem %s15, 32
      %v3171 = vld [vmem:[%s3170] sm:$0xff]
      %v3172 = vld [vmem:[%s3170 + $0x8] sm:$0xff]
      %v3174 = vsel %vm579, %v3171, 0
      %v3177 = vsel %vm579, %v3172, 0
      %3179 = vmatprep.subr.mxu0 0.0
      %3180 = vmatpush1.msra.mxu0 0.0
      %3181 = vmatprep.subr.mxu0 0.0
      %3182 = vmatpush1.msra.mxu0 0.0
      %3183 = vmatprep.subr.mxu0 0.0
      %3184 = vmatpush1.msra.mxu0 0.0
      %3185 = vmatprep.subr.mxu0 0.0
      %3186 = vmatpush1.msra.mxu0 0.0
      %3187 = vmatprep.subr.mxu0 0.0
      %3188 = vmatpush1.msra.mxu0 0.0
      %3189 = vmatprep.subr.mxu0 0.0
      %3190 = vmatpush1.msra.mxu0 0.0
      %3191 = vmatprep.subr.mxu0 0.0
      %3192 = vmatpush1.msra.mxu0 0.0
      %3193 = vmatprep.subr.mxu0 0.0
      %3194 = vmatpush1.msra.mxu0 0.0
      %3195 = vmatprep.subr.mxu0 0.0
      %3196 = vmatpush1.msra.mxu0 0.0
      %3197 = vmatprep.subr.mxu0 0.0
      %3198 = vmatpush1.msra.mxu0 0.0
      %3199 = vmatprep.subr.mxu0 0.0
      %3200 = vmatpush1.msra.mxu0 0.0
      %3201 = vmatprep.subr.mxu0 0.0
      %3202 = vmatpush1.msra.mxu0 0.0
      %3203 = vmatprep.subr.mxu0 0.0
      %3204 = vmatpush1.msra.mxu0 0.0
      %3205 = vmatprep.subr.mxu0 0.0
      %3206 = vmatpush1.msra.mxu0 0.0
      %3207 = vmatprep.subr.mxu0 0.0
      %3208 = vmatpush1.msra.mxu0 %v2817
      %3209 = vmatprep.subr.mxu0 0.0
      %3210 = vmatpush1.msra.mxu0 %v2812
      %3211 = vmatprep.subr.mxu0 0.0
      %3212 = vmatpush2.msra.mxu0 0.0
      %3213 = vmatprep.subr.mxu0 0.0
      %3214 = vmatpush2.msra.mxu0 0.0
      %3215 = vmatprep.subr.mxu0 0.0
      %3216 = vmatpush2.msra.mxu0 0.0
      %3217 = vmatprep.subr.mxu0 0.0
      %3218 = vmatpush2.msra.mxu0 0.0
      %3219 = vmatprep.subr.mxu0 0.0
      %3220 = vmatpush2.msra.mxu0 0.0
      %3221 = vmatprep.subr.mxu0 0.0
      %3222 = vmatpush2.msra.mxu0 0.0
      %3223 = vmatprep.subr.mxu0 0.0
      %3224 = vmatpush2.msra.mxu0 0.0
      %3225 = vmatprep.subr.mxu0 0.0
      %3226 = vmatpush2.msra.mxu0 0.0
      %3227 = vmatprep.subr.mxu0 0.0
      %3228 = vmatpush2.msra.mxu0 0.0
      %3229 = vmatprep.subr.mxu0 0.0
      %3230 = vmatpush2.msra.mxu0 0.0
      %3231 = vmatprep.subr.mxu0 0.0
      %3232 = vmatpush2.msra.mxu0 0.0
      %3233 = vmatprep.subr.mxu0 0.0
      %3234 = vmatpush2.msra.mxu0 0.0
      %3235 = vmatprep.subr.mxu0 0.0
      %3236 = vmatpush2.msra.mxu0 0.0
      %3237 = vmatprep.subr.mxu0 0.0
      %3238 = vmatpush2.msra.mxu0 0.0
      %3239 = vmatprep.subr.mxu0 0.0
      %3240 = vmatpush2.msra.mxu0 0.0
      %3241 = vmatprep.subr.mxu0 0.0
      %3242 = vmatpush2.msra.mxu0 0.0
      %3243 = vmatprep.mubr.f32.mxu0 0.0
      %3244 = vmatmul.mubr.f32.gmra.mxu0 %v3174
      %v3245 = vpop.f32.mrf.mxu0
      %v3246 = vadd.f32 0.0, %v3245
      %v3247 = vpop.f32.mrf.mxu0
      %3248 = vmatprep.mubr.f32.mxu0 0.0
      %3249 = vmatmul.mubr.f32.gmra.mxu0 %v3177
      %v3250 = vpop.f32.mrf.mxu0
      %v3251 = vadd.f32 0.0, %v3250
      %v3252 = vpop.f32.mrf.mxu0
      %3253 = vdwg.mxu0
      %s3254 = scalar_lea.vmem %s16, 256
      %v3255 = vld [vmem:[%s3254] sm:$0xff]
      %v3256 = vld [vmem:[%s3254 + $0x8] sm:$0xff]
      %v3257 = vld [vmem:[%s3254 + $0x10] sm:$0xff]
      %v3258 = vld [vmem:[%s3254 + $0x18] sm:$0xff]
      %v3259 = vld [vmem:[%s3254 + $0x20] sm:$0xff]
      %v3260 = vld [vmem:[%s3254 + $0x28] sm:$0xff]
      %v3261 = vld [vmem:[%s3254 + $0x30] sm:$0xff]
      %v3262 = vld [vmem:[%s3254 + $0x38] sm:$0xff]
      %v3263 = vld [vmem:[%s3254 + $0x40] sm:$0xff]
      %v3264 = vld [vmem:[%s3254 + $0x48] sm:$0xff]
      %v3265 = vld [vmem:[%s3254 + $0x50] sm:$0xff]
      %v3266 = vld [vmem:[%s3254 + $0x58] sm:$0xff]
      %v3267 = vld [vmem:[%s3254 + $0x60] sm:$0xff]
      %v3268 = vld [vmem:[%s3254 + $0x68] sm:$0xff]
      %v3269 = vld [vmem:[%s3254 + $0x70] sm:$0xff]
      %v3270 = vld [vmem:[%s3254 + $0x78] sm:$0xff]
      %3271 = vmatprep.subr.mxu0 0.0
      %3272 = vmatpush1.msra.mxu0 %v3270
      %3273 = vmatprep.subr.mxu0 0.0
      %3274 = vmatpush1.msra.mxu0 %v3269
      %3275 = vmatprep.subr.mxu0 0.0
      %3276 = vmatpush1.msra.mxu0 %v3268
      %3277 = vmatprep.subr.mxu0 0.0
      %3278 = vmatpush1.msra.mxu0 %v3267
      %3279 = vmatprep.subr.mxu0 0.0
      %3280 = vmatpush1.msra.mxu0 %v3266
      %3281 = vmatprep.subr.mxu0 0.0
      %3282 = vmatpush1.msra.mxu0 %v3265
      %3283 = vmatprep.subr.mxu0 0.0
      %3284 = vmatpush1.msra.mxu0 %v3264
      %3285 = vmatprep.subr.mxu0 0.0
      %3286 = vmatpush1.msra.mxu0 %v3263
      %3287 = vmatprep.subr.mxu0 0.0
      %3288 = vmatpush1.msra.mxu0 %v3262
      %3289 = vmatprep.subr.mxu0 0.0
      %3290 = vmatpush1.msra.mxu0 %v3261
      %3291 = vmatprep.subr.mxu0 0.0
      %3292 = vmatpush1.msra.mxu0 %v3260
      %3293 = vmatprep.subr.mxu0 0.0
      %3294 = vmatpush1.msra.mxu0 %v3259
      %3295 = vmatprep.subr.mxu0 0.0
      %3296 = vmatpush1.msra.mxu0 %v3258
      %3297 = vmatprep.subr.mxu0 0.0
      %3298 = vmatpush1.msra.mxu0 %v3257
      %3299 = vmatprep.subr.mxu0 0.0
      %3300 = vmatpush1.msra.mxu0 %v3256
      %3301 = vmatprep.subr.mxu0 0.0
      %3302 = vmatpush1.msra.mxu0 %v3255
      %3303 = vmatprep.subr.mxu0 0.0
      %3304 = vmatpush2.msra.mxu0 0.0
      %3305 = vmatprep.subr.mxu0 0.0
      %3306 = vmatpush2.msra.mxu0 0.0
      %3307 = vmatprep.subr.mxu0 0.0
      %3308 = vmatpush2.msra.mxu0 0.0
      %3309 = vmatprep.subr.mxu0 0.0
      %3310 = vmatpush2.msra.mxu0 0.0
      %3311 = vmatprep.subr.mxu0 0.0
      %3312 = vmatpush2.msra.mxu0 0.0
      %3313 = vmatprep.subr.mxu0 0.0
      %3314 = vmatpush2.msra.mxu0 0.0
      %3315 = vmatprep.subr.mxu0 0.0
      %3316 = vmatpush2.msra.mxu0 0.0
      %3317 = vmatprep.subr.mxu0 0.0
      %3318 = vmatpush2.msra.mxu0 0.0
      %3319 = vmatprep.subr.mxu0 0.0
      %3320 = vmatpush2.msra.mxu0 0.0
      %3321 = vmatprep.subr.mxu0 0.0
      %3322 = vmatpush2.msra.mxu0 0.0
      %3323 = vmatprep.subr.mxu0 0.0
      %3324 = vmatpush2.msra.mxu0 0.0
      %3325 = vmatprep.subr.mxu0 0.0
      %3326 = vmatpush2.msra.mxu0 0.0
      %3327 = vmatprep.subr.mxu0 0.0
      %3328 = vmatpush2.msra.mxu0 0.0
      %3329 = vmatprep.subr.mxu0 0.0
      %3330 = vmatpush2.msra.mxu0 0.0
      %3331 = vmatprep.subr.mxu0 0.0
      %3332 = vmatpush2.msra.mxu0 0.0
      %3333 = vmatprep.subr.mxu0 0.0
      %3334 = vmatpush2.msra.mxu0 0.0
      %3335 = vmatprep.mubr.f32.mxu0 0.0
      %3336 = vmatmul.mubr.f32.gmra.mxu0 %v3246
      %v3337 = vpop.f32.mrf.mxu0
      %v3338 = vadd.f32 0.0, %v3337
      %v3339 = vpop.f32.mrf.mxu0
      %3340 = vmatprep.mubr.f32.mxu0 0.0
      %3341 = vmatmul.mubr.f32.gmra.mxu0 %v3251
      %v3342 = vpop.f32.mrf.mxu0
      %v3343 = vadd.f32 0.0, %v3342
      %v3344 = vpop.f32.mrf.mxu0
      %3345 = vdwg.mxu0
      %v3346 = vadd.f32 %v3162, %v3338
      %v3347 = vadd.f32 %v3167, %v3343
      %v3348 = vld [vmem:[%s17] sm:$0x1]
      %v3350 = vlaneseq
      %v3351 = vshrl.u32 %v3350, 7
      %v3352 = vsub.s32 0, %v3351
      %v3353 = vrot.slane %v3348, %v3352
      %v3355 = vadd.f32 %v3346, %v3353
      %v3356 = vadd.f32 %v3347, %v3353
      %v3357 = vtanh.pop %v3355
      %v3358 = vtanh.pop %v3356
      %3359 = vst.msk [vmem:[%s575] sm:$0xff] %vm745, %v3357
      %3360 = vst.msk [vmem:[%s575 + $0x8] sm:$0xff] %vm745, %v3358
      %p3361 = scmp.lt.s32.totalorder %s29, 1
      %s3362 = scalar_select %p3361, %s29, 1
      %s3363 = smul.addr %s3362, 2
      %s3364 = smul.addr %s3363, 8
      %s3365 = scalar_lea.vmem %s18, %s3364
      // Predicated region
      $region93: #{pix2pix_forward.1} parent=91 // pred_check
        %p3366 = pneg %p430
      $region94: #{pix2pix_forward.1} parent=91 // pred_check_branch
        %3368 = sbr.rel (%p3366) target = $region96
      $region95: #{pix2pix_forward.1} parent=91 // pred_region
        _
      $region96: #{pix2pix_forward.1} parent=91 // pred_fallthru
        _
    $region92: #{pix2pix_forward.1} parent=5 // pred_fallthru
      _
    %p3369 = scmp.le.s32.totalorder 2, %s24
    // Predicated region
    $region97: #{pix2pix_forward.1} parent=5 // pred_check
      %p3370 = pneg %p3369
    $region98: #{pix2pix_forward.1} parent=5 // pred_check_branch
      %3372 = sbr.rel (%p3370) target = $region100
    $region99: #{pix2pix_forward.1} parent=5 // pred_region
      %s3373 = ssub.s32 %s24, 2
      // Predicated region
      $region101: #{pix2pix_forward.1} parent=99 // pred_check
        %p3374 = pneg %p436
      $region102: #{pix2pix_forward.1} parent=99 // pred_check_branch
        %3376 = sbr.rel (%p3374) target = $region104
      $region103: #{pix2pix_forward.1} parent=99 // pred_region
        %p3377 = scmp.lt.s32.totalorder %s30, 1
        %s3378 = scalar_select %p3377, %s30, 1
        %s3379 = smul.addr %s3378, 2
        %s3380 = smul.addr %s3379, 8
        %s3381 = scalar_lea.vmem %s18, %s3380
      $region104: #{pix2pix_forward.1} parent=99 // pred_fallthru
        _
    $region100: #{pix2pix_forward.1} parent=5 // pred_fallthru
      _
  $region6: #{pix2pix_forward.1} parent=0 // loop_footer
    %s28 = sadd.s32 1, %s24
  $region7: #{pix2pix_forward.1} parent=0 // loop_footer_branch
    %23 = sbr.rel target = $region3
  $region8: #{pix2pix_forward.1} parent=0 // loop_exit
    _

</llo_original>
